<compile_context>
chip_gen: v7x
topology: tpu7x:2x2x1
jax: 0.10.0
libtpu: 0.0.40
codegen_flags: <defaults>
</compile_context>

<pallas_src>
import functools

import jax
import jax.numpy as jnp
from jax import lax
from jax.experimental import pallas as pl
from jax.experimental.pallas import tpu as pltpu

_LANE = 128


def _round_up(x, m):
    return (x + m - 1) // m * m


# --------------------------------------------------------------------------
# Kernel
# --------------------------------------------------------------------------
def _double_conv_kernel(x_main_ref, x_halo_ref, w1_ref, s1_ref, b1_ref,
                        w2_ref, s2_ref, b2_ref, o_ref, strip_ref, mid_ref):
    """Fused (conv3x3 -> BN -> ReLU) x 2 for one (batch, row-strip) grid step.

    x_main_ref: (1, TH,   W+2, Cin_p)  bf16  main rows of the padded input strip
    x_halo_ref: (1, 4,    W+2, Cin_p)  bf16  4 halo rows just below the strip
    w1_ref:     (3, 3*Cin_p,  Cmid_p)  bf16  conv1 weights, dx folded into K
    s1_ref/b1_ref: (1, Cmid_p)         f32   folded BN1 scale / bias
    w2_ref:     (3, 3*Cmid_p, Cout_p)  bf16  conv2 weights, dx folded into K
    s2_ref/b2_ref: (1, Cout_p)         f32   folded BN2 scale / bias
    o_ref:      (1, TH, W, Cout_p)     f32   output strip (lane-dense)
    strip_ref:  VMEM (TH+4, W+2, Cin_p)  bf16  stitched input strip
    mid_ref:    VMEM (TH+2, W+2, Cmid_p) bf16  intermediate activation (+zero ring)
    """
    TH = o_ref.shape[1]            # output rows in this strip
    W = o_ref.shape[2]
    WP = W + 2                     # width incl. conv1 zero pad
    HM = TH + 2                    # intermediate rows conv2 needs (1-row halo)
    Cin_p = x_main_ref.shape[3]
    Cmid_p = s1_ref.shape[1]
    Cout_p = o_ref.shape[3]

    s = pl.program_id(1)
    last = pl.num_programs(1) - 1

    # Stitch the TH-row main block and the 4-row halo block into one slab.
    strip_ref[0:TH] = x_main_ref[0]
    strip_ref[TH:TH + 4] = x_halo_ref[0]

    # ---- Conv1: 3 MXU matmuls (dx taps folded into K), register accumulation.
    acc1 = None
    for dy in range(3):
        slab = strip_ref[dy:dy + HM]                       # (HM, W+2, Cin_p)
        patch = jnp.concatenate(
            [slab[:, 0:W, :], slab[:, 1:W + 1, :], slab[:, 2:W + 2, :]],
            axis=-1).reshape(HM * W, 3 * Cin_p)
        part = jnp.dot(patch, w1_ref[dy], preferred_element_type=jnp.float32)
        acc1 = part if dy == 0 else acc1 + part

    # Folded BatchNorm1 + ReLU in f32; store bf16 intermediate.  The zero ring
    # (border columns + image-boundary rows) implements conv2's padding=1.
    y1 = jnp.maximum(acc1 * s1_ref[0] + b1_ref[0], 0.0)
    mid_ref[:, 1:W + 1, :] = y1.reshape(HM, W, Cmid_p).astype(mid_ref.dtype)

    zcol = jnp.zeros((HM, 1, Cmid_p), dtype=mid_ref.dtype)
    mid_ref[:, 0:1, :] = zcol
    mid_ref[:, W + 1:W + 2, :] = zcol

    zrow = jnp.zeros((1, WP, Cmid_p), dtype=mid_ref.dtype)

    @pl.when(s == 0)
    def _():                       # top image border: conv2 must see zeros
        mid_ref[0:1] = zrow

    @pl.when(s == last)
    def _():                       # bottom image border
        mid_ref[HM - 1:HM] = zrow

    # ---- Conv2 over the VMEM intermediate (same folded-tap structure).
    acc2 = None
    for dy in range(3):
        slab = mid_ref[dy:dy + TH]                         # (TH, W+2, Cmid_p)
        patch = jnp.concatenate(
            [slab[:, 0:W, :], slab[:, 1:W + 1, :], slab[:, 2:W + 2, :]],
            axis=-1).reshape(TH * W, 3 * Cmid_p)
        part = jnp.dot(patch, w2_ref[dy], preferred_element_type=jnp.float32)
        acc2 = part if dy == 0 else acc2 + part

    y2 = jnp.maximum(acc2 * s2_ref[0] + b2_ref[0], 0.0)
    o_ref[...] = y2.reshape(1, TH, W, Cout_p).astype(o_ref.dtype)


# --------------------------------------------------------------------------
# Parameter folding helpers (plain JAX glue, runs once under jit)
# --------------------------------------------------------------------------
def _fold_bn(gamma, beta, mean, var, c_pad, eps=1e-5):
    scale = gamma / jnp.sqrt(var + eps)
    bias = beta - mean * scale
    pad = (0, c_pad - scale.shape[0])
    return (jnp.pad(scale, pad).reshape(1, c_pad).astype(jnp.float32),
            jnp.pad(bias, pad).reshape(1, c_pad).astype(jnp.float32))


def _fold_conv_weight(w_oihw, cin_pad, cout_pad, dtype):
    cout, cin, kh, kw = w_oihw.shape
    assert (kh, kw) == (3, 3), "only 3x3 kernels supported"
    w = jnp.transpose(w_oihw, (2, 3, 1, 0))                 # (dy, dx, ci, co)
    w = jnp.pad(w, ((0, 0), (0, 0), (0, cin_pad - cin), (0, cout_pad - cout)))
    # dx-major, channel-minor: matches the in-kernel patch concatenation.
    return w.reshape(3, 3 * cin_pad, cout_pad).astype(dtype)


def _strip_vmem_bytes(tile_h, W, cin_p, cmid_p, cout_p, itemsize=2):
    wp = W + 2
    blocks = (tile_h * wp * cin_p * itemsize          # main input block
              + 4 * wp * cin_p * itemsize             # halo block
              + 9 * cin_p * cmid_p * itemsize         # folded w1
              + 9 * cmid_p * cout_p * itemsize        # folded w2
              + 2 * (cmid_p + cout_p) * 4             # BN scale / bias
              + tile_h * W * cout_p * 4)              # f32 output block
    scratch = ((tile_h + 4) * wp * cin_p
               + (tile_h + 2) * wp * cmid_p) * itemsize
    return 2 * blocks + scratch                       # x2: double-buffered pipeline


def _pick_tile_h(H, W, cin_p, cmid_p, cout_p, budget=24 << 20):
    valid = [t for t in range(4, H + 1, 4) if H % t == 0]
    if not valid:
        raise ValueError("H must be a positive multiple of 4")
    fitting = [t for t in valid
               if _strip_vmem_bytes(t, W, cin_p, cmid_p, cout_p) <= budget]
    return max(fitting) if fitting else min(valid)


# --------------------------------------------------------------------------
# Wrappers
# --------------------------------------------------------------------------
def double_conv_nhwc(x_nhwc, params, tile_h=None, compute_dtype=jnp.bfloat16):
    """Fused DoubleConv on NHWC activations.  Returns (B, H, W, Cout) f32."""
    B, H, W, Cin = x_nhwc.shape
    Cmid, Cout = params["w1"].shape[0], params["w2"].shape[0]

    cin_p = _round_up(Cin, _LANE)
    cmid_p = _round_up(Cmid, _LANE)
    cout_p = _round_up(Cout, _LANE)

    if tile_h is None:
        tile_h = _pick_tile_h(H, W, cin_p, cmid_p, cout_p)
    if H % tile_h != 0 or tile_h % 4 != 0:
        raise ValueError("tile_h must divide H and be a multiple of 4")
    n_strips = H // tile_h

    w1 = _fold_conv_weight(params["w1"], cin_p, cmid_p, compute_dtype)
    w2 = _fold_conv_weight(params["w2"], cmid_p, cout_p, compute_dtype)
    s1, b1 = _fold_bn(params["g1"], params["b1"], params["m1"], params["v1"], cmid_p)
    s2, b2 = _fold_bn(params["g2"], params["b2"], params["m2"], params["v2"], cout_p)

    # Single zero-pad of the input (pad once, reused by both fused convs):
    # rows +2 on top (conv1 pad + strip halo), bottom padded up to a multiple
    # of tile_h; cols +1 each side (conv1 pad); channels up to a lane multiple.
    h_rows = _round_up(H + 4, tile_h)
    x_p = jnp.pad(
        x_nhwc, ((0, 0), (2, h_rows - H - 2), (1, 1), (0, cin_p - Cin))
    ).astype(compute_dtype)

    halo_stride = tile_h // 4    # halo block (height 4) index per strip
    itemsize = jnp.dtype(compute_dtype).itemsize
    vmem_limit = min(
        _strip_vmem_bytes(tile_h, W, cin_p, cmid_p, cout_p, itemsize) + (8 << 20),
        64 << 20)  # explicit budget, capped for v7x's 64 MiB VMEM

    out = pl.pallas_call(
        _double_conv_kernel,
        out_shape=jax.ShapeDtypeStruct((B, H, W, cout_p), jnp.float32),
        grid_spec=pltpu.PrefetchScalarGridSpec(
            num_scalar_prefetch=0,
            grid=(B, n_strips),
            in_specs=[
                # main tile_h-row strip of the padded input
                pl.BlockSpec((1, tile_h, W + 2, cin_p),
                             lambda b, s: (b, s, 0, 0)),
                # 4 halo rows just below the strip (same array, second view)
                pl.BlockSpec((1, 4, W + 2, cin_p),
                             lambda b, s: (b, (s + 1) * halo_stride, 0, 0)),
                # weights / folded-BN params: constant index -> fetched once
                pl.BlockSpec((3, 3 * cin_p, cmid_p), lambda b, s: (0, 0, 0)),
                pl.BlockSpec((1, cmid_p), lambda b, s: (0, 0)),
                pl.BlockSpec((1, cmid_p), lambda b, s: (0, 0)),
                pl.BlockSpec((3, 3 * cmid_p, cout_p), lambda b, s: (0, 0, 0)),
                pl.BlockSpec((1, cout_p), lambda b, s: (0, 0)),
                pl.BlockSpec((1, cout_p), lambda b, s: (0, 0)),
            ],
            out_specs=pl.BlockSpec((1, tile_h, W, cout_p),
                                   lambda b, s: (b, s, 0, 0)),
            scratch_shapes=[
                pltpu.VMEM((tile_h + 4, W + 2, cin_p), compute_dtype),
                pltpu.VMEM((tile_h + 2, W + 2, cmid_p), compute_dtype),
            ],
        ),
        compiler_params=pltpu.CompilerParams(
            dimension_semantics=("parallel", "parallel"),
            vmem_limit_bytes=int(vmem_limit),
        ),
    )(x_p, x_p, w1, s1, b1, w2, s2, b2)

    return out[..., :Cout]


@functools.partial(jax.jit, static_argnames=("tile_h",))
def double_conv(x_nchw, params, tile_h=None):
    """DoubleConv forward.  x_nchw: (B, Cin, H, W) f32 -> (B, Cout, H, W) f32."""
    # NCHW <-> NHWC glue kept at the boundary so a full UNet can stay NHWC
    # end-to-end and drop these transposes (per perf feedback).
    x = jnp.transpose(x_nchw, (0, 2, 3, 1))
    y = double_conv_nhwc(x, params, tile_h=tile_h)
    return jnp.transpose(y, (0, 3, 1, 2))


# --------------------------------------------------------------------------
# Pure-JAX reference (for the correctness check)
# --------------------------------------------------------------------------
def _ref_double_conv(x_nchw, p, dtype=jnp.float32, eps=1e-5):
    """dtype=bfloat16 mimics the kernel's mixed precision (bf16 operands,
    f32 accumulation, bf16 intermediate)."""
    def conv_bn_relu(x, w, g, b, m, v):
        w_hwio = jnp.transpose(w, (2, 3, 1, 0)).astype(dtype)
        y = lax.conv_general_dilated(
            x.astype(dtype), w_hwio, (1, 1), "SAME",
            dimension_numbers=("NHWC", "HWIO", "NHWC"),
            preferred_element_type=jnp.float32)
        scale = g / jnp.sqrt(v + eps)
        bias = b - m * scale
        return jnp.maximum(y * scale + bias, 0.0)

    x = jnp.transpose(x_nchw, (0, 2, 3, 1))
    y = conv_bn_relu(x, p["w1"], p["g1"], p["b1"], p["m1"], p["v1"])
    y = conv_bn_relu(y, p["w2"], p["g2"], p["b2"], p["m2"], p["v2"])
    return jnp.transpose(y, (0, 3, 1, 2)).astype(jnp.float32)


if __name__ == "__main__":
    B, Cin, Cout, H, W = 2, 4, 8, 16, 16

    key = jax.random.PRNGKey(0)
    keys = jax.random.split(key, 9)

    params = {
        # Conv weights: (Cout, Cin, 3, 3) / (Cout, Cout, 3, 3), no bias.
        "w1": 0.1 * jax.random.normal(keys[0], (Cout, Cin, 3, 3), jnp.float32),
        "w2": 0.1 * jax.random.normal(keys[1], (Cout, Cout, 3, 3), jnp.float32),
        # BatchNorm params (deterministic, non-trivial).
        "g1": 1.0 + 0.1 * jax.random.normal(keys[2], (Cout,), jnp.float32),
        "b1": 0.1 * jax.random.normal(keys[3], (Cout,), jnp.float32),
        "m1": 0.05 * jax.random.normal(keys[4], (Cout,), jnp.float32),
        "v1": 1.0 + 0.1 * jnp.abs(jax.random.normal(keys[5], (Cout,), jnp.float32)),
        "g2": 1.0 + 0.1 * jax.random.normal(keys[6], (Cout,), jnp.float32),
        "b2": 0.1 * jax.random.normal(keys[7], (Cout,), jnp.float32),
        "m2": jnp.zeros((Cout,), jnp.float32),
        "v2": jnp.ones((Cout,), jnp.float32),
    }

    x = jax.random.normal(keys[8], (B, Cin, H, W), jnp.float32)

    # tile_h=8 -> 2 row strips per image: exercises the halo / border logic
    # and gives megacore (v7x) 4 parallel grid units.
    out = jax.block_until_ready(double_conv(x, params, tile_h=8))
    assert out.shape == (B, Cout, H, W)

    # Matched-precision reference (bf16 operands, f32 accumulation).
    ref_mixed = _ref_double_conv(x, params, dtype=jnp.bfloat16)
    err_mixed = float(jnp.max(jnp.abs(out - ref_mixed)))
    assert jnp.allclose(out, ref_mixed, atol=2e-2, rtol=2e-2), err_mixed

    # Sanity check vs. the pure-f32 reference (loose tol for bf16 operands).
    ref_f32 = _ref_double_conv(x, params, dtype=jnp.float32)
    err_f32 = float(jnp.max(jnp.abs(out - ref_f32)))
    assert jnp.allclose(out, ref_f32, atol=1.5e-1, rtol=1.5e-1), err_f32

    print("KERNEL_OK")
</pallas_src>

<mosaic_0001>
module attributes {stable_mosaic.version = 11 : i64} {
  func.func @_double_conv_kernel(%arg0: i32, %arg1: i32, %arg2: memref<1x8x18x128xbf16, #tpu.memory_space<vmem>>, %arg3: memref<1x4x18x128xbf16, #tpu.memory_space<vmem>>, %arg4: memref<3x384x128xbf16, #tpu.memory_space<vmem>>, %arg5: memref<1x128xf32, #tpu.memory_space<vmem>>, %arg6: memref<1x128xf32, #tpu.memory_space<vmem>>, %arg7: memref<3x384x128xbf16, #tpu.memory_space<vmem>>, %arg8: memref<1x128xf32, #tpu.memory_space<vmem>>, %arg9: memref<1x128xf32, #tpu.memory_space<vmem>>, %arg10: memref<1x8x16x128xf32, #tpu.memory_space<vmem>>, %arg11: memref<12x18x128xbf16, #tpu.memory_space<vmem>>, %arg12: memref<10x18x128xbf16, #tpu.memory_space<vmem>>) attributes {dimension_semantics = [#tpu.dimension_semantics<parallel>, #tpu.dimension_semantics<parallel>], iteration_bounds = array<i64: 2, 2>, scalar_prefetch = 0 : i64, scratch_operands = 2 : i64, tpu.core_type = #tpu.core_type<tc>, window_params = [{transform_indices = @transform_0, window_bounds = array<i64: 1, 8, 18, 128>}, {transform_indices = @transform_1, window_bounds = array<i64: 1, 4, 18, 128>}, {pipeline_mode = #tpu.pipeline_mode<synchronous>, transform_indices = @transform_2, window_bounds = array<i64: 3, 384, 128>}, {pipeline_mode = #tpu.pipeline_mode<synchronous>, transform_indices = @transform_3, window_bounds = array<i64: 1, 128>}, {pipeline_mode = #tpu.pipeline_mode<synchronous>, transform_indices = @transform_4, window_bounds = array<i64: 1, 128>}, {pipeline_mode = #tpu.pipeline_mode<synchronous>, transform_indices = @transform_5, window_bounds = array<i64: 3, 384, 128>}, {pipeline_mode = #tpu.pipeline_mode<synchronous>, transform_indices = @transform_6, window_bounds = array<i64: 1, 128>}, {pipeline_mode = #tpu.pipeline_mode<synchronous>, transform_indices = @transform_7, window_bounds = array<i64: 1, 128>}, {transform_indices = @transform_8, window_bounds = array<i64: 1, 8, 16, 128>}]} {
    %c0 = arith.constant 0 : index
    %c0_0 = arith.constant 0 : index
    %c0_1 = arith.constant 0 : index
    %c0_2 = arith.constant 0 : index
    %0 = vector.load %arg2[%c0, %c0_0, %c0_1, %c0_2] : memref<1x8x18x128xbf16, #tpu.memory_space<vmem>>, vector<1x8x18x128xbf16>
    %1 = vector.shape_cast %0 : vector<1x8x18x128xbf16> to vector<8x18x128xbf16>
    %c0_3 = arith.constant 0 : index
    %c0_4 = arith.constant 0 : index
    %c0_5 = arith.constant 0 : index
    %2 = vector.load %arg11[%c0_3, %c0_4, %c0_5] : memref<12x18x128xbf16, #tpu.memory_space<vmem>>, vector<8x18x128xbf16>
    tpu.vector_store %arg11[%c0_3, %c0_4, %c0_5], %1 {strides = array<i32>} : memref<12x18x128xbf16, #tpu.memory_space<vmem>>, vector<8x18x128xbf16>,
    %c0_6 = arith.constant 0 : index
    %c0_7 = arith.constant 0 : index
    %c0_8 = arith.constant 0 : index
    %c0_9 = arith.constant 0 : index
    %3 = vector.load %arg3[%c0_6, %c0_7, %c0_8, %c0_9] : memref<1x4x18x128xbf16, #tpu.memory_space<vmem>>, vector<1x4x18x128xbf16>
    %4 = vector.shape_cast %3 : vector<1x4x18x128xbf16> to vector<4x18x128xbf16>
    %c8 = arith.constant 8 : index
    %c0_10 = arith.constant 0 : index
    %c0_11 = arith.constant 0 : index
    %5 = vector.load %arg11[%c8, %c0_10, %c0_11] : memref<12x18x128xbf16, #tpu.memory_space<vmem>>, vector<4x18x128xbf16>
    tpu.vector_store %arg11[%c8, %c0_10, %c0_11], %4 {strides = array<i32>} : memref<12x18x128xbf16, #tpu.memory_space<vmem>>, vector<4x18x128xbf16>,
    %c0_12 = arith.constant 0 : index
    %c0_13 = arith.constant 0 : index
    %c0_14 = arith.constant 0 : index
    %6 = vector.load %arg11[%c0_12, %c0_13, %c0_14] : memref<12x18x128xbf16, #tpu.memory_space<vmem>>, vector<10x18x128xbf16>
    %7 = vector.extract_strided_slice %6 {offsets = [0, 0, 0], sizes = [10, 16, 128], strides = [1, 1, 1]} : vector<10x18x128xbf16> to vector<10x16x128xbf16>
    %8 = vector.extract_strided_slice %6 {offsets = [0, 1, 0], sizes = [10, 16, 128], strides = [1, 1, 1]} : vector<10x18x128xbf16> to vector<10x16x128xbf16>
    %9 = vector.extract_strided_slice %6 {offsets = [0, 2, 0], sizes = [10, 16, 128], strides = [1, 1, 1]} : vector<10x18x128xbf16> to vector<10x16x128xbf16>
    %10 = tpu.concatenate %7, %8, %9 in 2 : vector<10x16x128xbf16>, vector<10x16x128xbf16>, vector<10x16x128xbf16> -> vector<10x16x384xbf16>
    %11 = vector.shape_cast %10 : vector<10x16x384xbf16> to vector<160x384xbf16>
    %c0_15 = arith.constant 0 : index
    %c0_16 = arith.constant 0 : index
    %c0_17 = arith.constant 0 : index
    %12 = vector.load %arg4[%c0_15, %c0_16, %c0_17] : memref<3x384x128xbf16, #tpu.memory_space<vmem>>, vector<1x384x128xbf16>
    %13 = vector.shape_cast %12 : vector<1x384x128xbf16> to vector<384x128xbf16>
    %cst = arith.constant dense<0.000000e+00> : vector<160x128xf32>
    %14 = tpu.matmul %11, %13, %cst {dimension_numbers = #tpu.dot_dimension_numbers<[1], [0], [0], [1], [0, 0, 1, 1], [], []>} : vector<160x384xbf16>, vector<384x128xbf16>, vector<160x128xf32> -> vector<160x128xf32>
    %c1 = arith.constant 1 : index
    %c0_18 = arith.constant 0 : index
    %c0_19 = arith.constant 0 : index
    %15 = vector.load %arg11[%c1, %c0_18, %c0_19] : memref<12x18x128xbf16, #tpu.memory_space<vmem>>, vector<10x18x128xbf16>
    %16 = vector.extract_strided_slice %15 {offsets = [0, 0, 0], sizes = [10, 16, 128], strides = [1, 1, 1]} : vector<10x18x128xbf16> to vector<10x16x128xbf16>
    %17 = vector.extract_strided_slice %15 {offsets = [0, 1, 0], sizes = [10, 16, 128], strides = [1, 1, 1]} : vector<10x18x128xbf16> to vector<10x16x128xbf16>
    %18 = vector.extract_strided_slice %15 {offsets = [0, 2, 0], sizes = [10, 16, 128], strides = [1, 1, 1]} : vector<10x18x128xbf16> to vector<10x16x128xbf16>
    %19 = tpu.concatenate %16, %17, %18 in 2 : vector<10x16x128xbf16>, vector<10x16x128xbf16>, vector<10x16x128xbf16> -> vector<10x16x384xbf16>
    %20 = vector.shape_cast %19 : vector<10x16x384xbf16> to vector<160x384xbf16>
    %c1_20 = arith.constant 1 : index
    %c0_21 = arith.constant 0 : index
    %c0_22 = arith.constant 0 : index
    %21 = vector.load %arg4[%c1_20, %c0_21, %c0_22] : memref<3x384x128xbf16, #tpu.memory_space<vmem>>, vector<1x384x128xbf16>
    %22 = vector.shape_cast %21 : vector<1x384x128xbf16> to vector<384x128xbf16>
    %cst_23 = arith.constant dense<0.000000e+00> : vector<160x128xf32>
    %23 = tpu.matmul %20, %22, %cst_23 {dimension_numbers = #tpu.dot_dimension_numbers<[1], [0], [0], [1], [0, 0, 1, 1], [], []>} : vector<160x384xbf16>, vector<384x128xbf16>, vector<160x128xf32> -> vector<160x128xf32>
    %24 = arith.addf %14, %23 : vector<160x128xf32>
    %c2 = arith.constant 2 : index
    %c0_24 = arith.constant 0 : index
    %c0_25 = arith.constant 0 : index
    %25 = vector.load %arg11[%c2, %c0_24, %c0_25] : memref<12x18x128xbf16, #tpu.memory_space<vmem>>, vector<10x18x128xbf16>
    %26 = vector.extract_strided_slice %25 {offsets = [0, 0, 0], sizes = [10, 16, 128], strides = [1, 1, 1]} : vector<10x18x128xbf16> to vector<10x16x128xbf16>
    %27 = vector.extract_strided_slice %25 {offsets = [0, 1, 0], sizes = [10, 16, 128], strides = [1, 1, 1]} : vector<10x18x128xbf16> to vector<10x16x128xbf16>
    %28 = vector.extract_strided_slice %25 {offsets = [0, 2, 0], sizes = [10, 16, 128], strides = [1, 1, 1]} : vector<10x18x128xbf16> to vector<10x16x128xbf16>
    %29 = tpu.concatenate %26, %27, %28 in 2 : vector<10x16x128xbf16>, vector<10x16x128xbf16>, vector<10x16x128xbf16> -> vector<10x16x384xbf16>
    %30 = vector.shape_cast %29 : vector<10x16x384xbf16> to vector<160x384xbf16>
    %c2_26 = arith.constant 2 : index
    %c0_27 = arith.constant 0 : index
    %c0_28 = arith.constant 0 : index
    %31 = vector.load %arg4[%c2_26, %c0_27, %c0_28] : memref<3x384x128xbf16, #tpu.memory_space<vmem>>, vector<1x384x128xbf16>
    %32 = vector.shape_cast %31 : vector<1x384x128xbf16> to vector<384x128xbf16>
    %cst_29 = arith.constant dense<0.000000e+00> : vector<160x128xf32>
    %33 = tpu.matmul %30, %32, %cst_29 {dimension_numbers = #tpu.dot_dimension_numbers<[1], [0], [0], [1], [0, 0, 1, 1], [], []>} : vector<160x384xbf16>, vector<384x128xbf16>, vector<160x128xf32> -> vector<160x128xf32>
    %34 = arith.addf %24, %33 : vector<160x128xf32>
    %c0_30 = arith.constant 0 : index
    %c0_31 = arith.constant 0 : index
    %35 = vector.load %arg5[%c0_30, %c0_31] : memref<1x128xf32, #tpu.memory_space<vmem>>, vector<1x128xf32>
    %36 = vector.shape_cast %35 : vector<1x128xf32> to vector<128xf32>
    %37 = vector.shape_cast %36 : vector<128xf32> to vector<1x128xf32>
    %38 = vector.broadcast %37 : vector<1x128xf32> to vector<160x128xf32>
    %39 = arith.mulf %34, %38 : vector<160x128xf32>
    %c0_32 = arith.constant 0 : index
    %c0_33 = arith.constant 0 : index
    %40 = vector.load %arg6[%c0_32, %c0_33] : memref<1x128xf32, #tpu.memory_space<vmem>>, vector<1x128xf32>
    %41 = vector.shape_cast %40 : vector<1x128xf32> to vector<128xf32>
    %42 = vector.shape_cast %41 : vector<128xf32> to vector<1x128xf32>
    %43 = vector.broadcast %42 : vector<1x128xf32> to vector<160x128xf32>
    %44 = arith.addf %39, %43 : vector<160x128xf32>
    %cst_34 = arith.constant 0.000000e+00 : f32
    %45 = vector.broadcast %cst_34 : f32 to vector<160x128xf32>
    %46 = arith.maximumf %44, %45 : vector<160x128xf32>
    %47 = vector.shape_cast %46 : vector<160x128xf32> to vector<10x16x128xf32>
    %48 = arith.truncf %47 : vector<10x16x128xf32> to vector<10x16x128xbf16>
    %c0_35 = arith.constant 0 : index
    %c1_36 = arith.constant 1 : index
    %c0_37 = arith.constant 0 : index
    %49 = vector.load %arg12[%c0_35, %c1_36, %c0_37] : memref<10x18x128xbf16, #tpu.memory_space<vmem>>, vector<10x16x128xbf16>
    tpu.vector_store %arg12[%c0_35, %c1_36, %c0_37], %48 {strides = array<i32>} : memref<10x18x128xbf16, #tpu.memory_space<vmem>>, vector<10x16x128xbf16>,
    %cst_38 = arith.constant 0.000000e+00 : bf16
    %50 = vector.broadcast %cst_38 : bf16 to vector<10x1x128xbf16>
    %c0_39 = arith.constant 0 : index
    %c0_40 = arith.constant 0 : index
    %c0_41 = arith.constant 0 : index
    %51 = vector.load %arg12[%c0_39, %c0_40, %c0_41] : memref<10x18x128xbf16, #tpu.memory_space<vmem>>, vector<10x1x128xbf16>
    tpu.vector_store %arg12[%c0_39, %c0_40, %c0_41], %50 {strides = array<i32>} : memref<10x18x128xbf16, #tpu.memory_space<vmem>>, vector<10x1x128xbf16>,
    %c0_42 = arith.constant 0 : index
    %c17 = arith.constant 17 : index
    %c0_43 = arith.constant 0 : index
    %52 = vector.load %arg12[%c0_42, %c17, %c0_43] : memref<10x18x128xbf16, #tpu.memory_space<vmem>>, vector<10x1x128xbf16>
    tpu.vector_store %arg12[%c0_42, %c17, %c0_43], %50 {strides = array<i32>} : memref<10x18x128xbf16, #tpu.memory_space<vmem>>, vector<10x1x128xbf16>,
    %cst_44 = arith.constant 0.000000e+00 : bf16
    %53 = vector.broadcast %cst_44 : bf16 to vector<1x18x128xbf16>
    %c0_i32 = arith.constant 0 : i32
    %54 = arith.cmpi eq, %arg1, %c0_i32 : i32
    %55 = arith.extui %54 : i1 to i32
    %c0_i32_45 = arith.constant 0 : i32
    %56 = arith.cmpi ne, %55, %c0_i32_45 : i32
    scf.if %56 {
      %c0_77 = arith.constant 0 : index
      %c0_78 = arith.constant 0 : index
      %c0_79 = arith.constant 0 : index
      %103 = vector.load %arg12[%c0_77, %c0_78, %c0_79] : memref<10x18x128xbf16, #tpu.memory_space<vmem>>, vector<1x18x128xbf16>
      tpu.vector_store %arg12[%c0_77, %c0_78, %c0_79], %53 {strides = array<i32>} : memref<10x18x128xbf16, #tpu.memory_space<vmem>>, vector<1x18x128xbf16>,
    } else {
    }
    %c1_i32 = arith.constant 1 : i32
    %57 = arith.cmpi eq, %arg1, %c1_i32 : i32
    %58 = arith.extui %57 : i1 to i32
    %c0_i32_46 = arith.constant 0 : i32
    %59 = arith.cmpi ne, %58, %c0_i32_46 : i32
    scf.if %59 {
      %c9 = arith.constant 9 : index
      %c0_77 = arith.constant 0 : index
      %c0_78 = arith.constant 0 : index
      %103 = vector.load %arg12[%c9, %c0_77, %c0_78] : memref<10x18x128xbf16, #tpu.memory_space<vmem>>, vector<1x18x128xbf16>
      tpu.vector_store %arg12[%c9, %c0_77, %c0_78], %53 {strides = array<i32>} : memref<10x18x128xbf16, #tpu.memory_space<vmem>>, vector<1x18x128xbf16>,
    } else {
    }
    %c0_47 = arith.constant 0 : index
    %c0_48 = arith.constant 0 : index
    %c0_49 = arith.constant 0 : index
    %60 = vector.load %arg12[%c0_47, %c0_48, %c0_49] : memref<10x18x128xbf16, #tpu.memory_space<vmem>>, vector<8x18x128xbf16>
    %61 = vector.extract_strided_slice %60 {offsets = [0, 0, 0], sizes = [8, 16, 128], strides = [1, 1, 1]} : vector<8x18x128xbf16> to vector<8x16x128xbf16>
    %62 = vector.extract_strided_slice %60 {offsets = [0, 1, 0], sizes = [8, 16, 128], strides = [1, 1, 1]} : vector<8x18x128xbf16> to vector<8x16x128xbf16>
    %63 = vector.extract_strided_slice %60 {offsets = [0, 2, 0], sizes = [8, 16, 128], strides = [1, 1, 1]} : vector<8x18x128xbf16> to vector<8x16x128xbf16>
    %64 = tpu.concatenate %61, %62, %63 in 2 : vector<8x16x128xbf16>, vector<8x16x128xbf16>, vector<8x16x128xbf16> -> vector<8x16x384xbf16>
    %65 = vector.shape_cast %64 : vector<8x16x384xbf16> to vector<128x384xbf16>
    %c0_50 = arith.constant 0 : index
    %c0_51 = arith.constant 0 : index
    %c0_52 = arith.constant 0 : index
    %66 = vector.load %arg7[%c0_50, %c0_51, %c0_52] : memref<3x384x128xbf16, #tpu.memory_space<vmem>>, vector<1x384x128xbf16>
    %67 = vector.shape_cast %66 : vector<1x384x128xbf16> to vector<384x128xbf16>
    %cst_53 = arith.constant dense<0.000000e+00> : vector<128x128xf32>
    %68 = tpu.matmul %65, %67, %cst_53 {dimension_numbers = #tpu.dot_dimension_numbers<[1], [0], [0], [1], [0, 0, 1, 1], [], []>} : vector<128x384xbf16>, vector<384x128xbf16>, vector<128x128xf32> -> vector<128x128xf32>
    %c1_54 = arith.constant 1 : index
    %c0_55 = arith.constant 0 : index
    %c0_56 = arith.constant 0 : index
    %69 = vector.load %arg12[%c1_54, %c0_55, %c0_56] : memref<10x18x128xbf16, #tpu.memory_space<vmem>>, vector<8x18x128xbf16>
    %70 = vector.extract_strided_slice %69 {offsets = [0, 0, 0], sizes = [8, 16, 128], strides = [1, 1, 1]} : vector<8x18x128xbf16> to vector<8x16x128xbf16>
    %71 = vector.extract_strided_slice %69 {offsets = [0, 1, 0], sizes = [8, 16, 128], strides = [1, 1, 1]} : vector<8x18x128xbf16> to vector<8x16x128xbf16>
    %72 = vector.extract_strided_slice %69 {offsets = [0, 2, 0], sizes = [8, 16, 128], strides = [1, 1, 1]} : vector<8x18x128xbf16> to vector<8x16x128xbf16>
    %73 = tpu.concatenate %70, %71, %72 in 2 : vector<8x16x128xbf16>, vector<8x16x128xbf16>, vector<8x16x128xbf16> -> vector<8x16x384xbf16>
    %74 = vector.shape_cast %73 : vector<8x16x384xbf16> to vector<128x384xbf16>
    %c1_57 = arith.constant 1 : index
    %c0_58 = arith.constant 0 : index
    %c0_59 = arith.constant 0 : index
    %75 = vector.load %arg7[%c1_57, %c0_58, %c0_59] : memref<3x384x128xbf16, #tpu.memory_space<vmem>>, vector<1x384x128xbf16>
    %76 = vector.shape_cast %75 : vector<1x384x128xbf16> to vector<384x128xbf16>
    %cst_60 = arith.constant dense<0.000000e+00> : vector<128x128xf32>
    %77 = tpu.matmul %74, %76, %cst_60 {dimension_numbers = #tpu.dot_dimension_numbers<[1], [0], [0], [1], [0, 0, 1, 1], [], []>} : vector<128x384xbf16>, vector<384x128xbf16>, vector<128x128xf32> -> vector<128x128xf32>
    %78 = arith.addf %68, %77 : vector<128x128xf32>
    %c2_61 = arith.constant 2 : index
    %c0_62 = arith.constant 0 : index
    %c0_63 = arith.constant 0 : index
    %79 = vector.load %arg12[%c2_61, %c0_62, %c0_63] : memref<10x18x128xbf16, #tpu.memory_space<vmem>>, vector<8x18x128xbf16>
    %80 = vector.extract_strided_slice %79 {offsets = [0, 0, 0], sizes = [8, 16, 128], strides = [1, 1, 1]} : vector<8x18x128xbf16> to vector<8x16x128xbf16>
    %81 = vector.extract_strided_slice %79 {offsets = [0, 1, 0], sizes = [8, 16, 128], strides = [1, 1, 1]} : vector<8x18x128xbf16> to vector<8x16x128xbf16>
    %82 = vector.extract_strided_slice %79 {offsets = [0, 2, 0], sizes = [8, 16, 128], strides = [1, 1, 1]} : vector<8x18x128xbf16> to vector<8x16x128xbf16>
    %83 = tpu.concatenate %80, %81, %82 in 2 : vector<8x16x128xbf16>, vector<8x16x128xbf16>, vector<8x16x128xbf16> -> vector<8x16x384xbf16>
    %84 = vector.shape_cast %83 : vector<8x16x384xbf16> to vector<128x384xbf16>
    %c2_64 = arith.constant 2 : index
    %c0_65 = arith.constant 0 : index
    %c0_66 = arith.constant 0 : index
    %85 = vector.load %arg7[%c2_64, %c0_65, %c0_66] : memref<3x384x128xbf16, #tpu.memory_space<vmem>>, vector<1x384x128xbf16>
    %86 = vector.shape_cast %85 : vector<1x384x128xbf16> to vector<384x128xbf16>
    %cst_67 = arith.constant dense<0.000000e+00> : vector<128x128xf32>
    %87 = tpu.matmul %84, %86, %cst_67 {dimension_numbers = #tpu.dot_dimension_numbers<[1], [0], [0], [1], [0, 0, 1, 1], [], []>} : vector<128x384xbf16>, vector<384x128xbf16>, vector<128x128xf32> -> vector<128x128xf32>
    %88 = arith.addf %78, %87 : vector<128x128xf32>
    %c0_68 = arith.constant 0 : index
    %c0_69 = arith.constant 0 : index
    %89 = vector.load %arg8[%c0_68, %c0_69] : memref<1x128xf32, #tpu.memory_space<vmem>>, vector<1x128xf32>
    %90 = vector.shape_cast %89 : vector<1x128xf32> to vector<128xf32>
    %91 = vector.shape_cast %90 : vector<128xf32> to vector<1x128xf32>
    %92 = vector.broadcast %91 : vector<1x128xf32> to vector<128x128xf32>
    %93 = arith.mulf %88, %92 : vector<128x128xf32>
    %c0_70 = arith.constant 0 : index
    %c0_71 = arith.constant 0 : index
    %94 = vector.load %arg9[%c0_70, %c0_71] : memref<1x128xf32, #tpu.memory_space<vmem>>, vector<1x128xf32>
    %95 = vector.shape_cast %94 : vector<1x128xf32> to vector<128xf32>
    %96 = vector.shape_cast %95 : vector<128xf32> to vector<1x128xf32>
    %97 = vector.broadcast %96 : vector<1x128xf32> to vector<128x128xf32>
    %98 = arith.addf %93, %97 : vector<128x128xf32>
    %cst_72 = arith.constant 0.000000e+00 : f32
    %99 = vector.broadcast %cst_72 : f32 to vector<128x128xf32>
    %100 = arith.maximumf %98, %99 : vector<128x128xf32>
    %101 = vector.shape_cast %100 : vector<128x128xf32> to vector<1x8x16x128xf32>
    %c0_73 = arith.constant 0 : index
    %c0_74 = arith.constant 0 : index
    %c0_75 = arith.constant 0 : index
    %c0_76 = arith.constant 0 : index
    %102 = vector.load %arg10[%c0_73, %c0_74, %c0_75, %c0_76] : memref<1x8x16x128xf32, #tpu.memory_space<vmem>>, vector<1x8x16x128xf32>
    tpu.vector_store %arg10[%c0_73, %c0_74, %c0_75, %c0_76], %101 {strides = array<i32>} : memref<1x8x16x128xf32, #tpu.memory_space<vmem>>, vector<1x8x16x128xf32>,
    return
  }
  func.func @transform_0(%arg0: i32, %arg1: i32) -> (i32, i32, i32, i32) {
    %c0_i32 = arith.constant 0 : i32
    %c0_i32_0 = arith.constant 0 : i32
    %c0_i32_1 = arith.constant 0 : i32
    return %arg0, %arg1, %c0_i32, %c0_i32_0 : i32, i32, i32, i32
  }
  func.func @transform_1(%arg0: i32, %arg1: i32) -> (i32, i32, i32, i32) {
    %c1_i32 = arith.constant 1 : i32
    %0 = arith.addi %arg1, %c1_i32 : i32
    %c2_i32 = arith.constant 2 : i32
    %1 = arith.muli %0, %c2_i32 : i32
    %c0_i32 = arith.constant 0 : i32
    %c0_i32_0 = arith.constant 0 : i32
    %c0_i32_1 = arith.constant 0 : i32
    return %arg0, %1, %c0_i32, %c0_i32_0 : i32, i32, i32, i32
  }
  func.func @transform_2(%arg0: i32, %arg1: i32) -> (i32, i32, i32) {
    %c0_i32 = arith.constant 0 : i32
    %c0_i32_0 = arith.constant 0 : i32
    %c0_i32_1 = arith.constant 0 : i32
    %c0_i32_2 = arith.constant 0 : i32
    return %c0_i32, %c0_i32_0, %c0_i32_1 : i32, i32, i32
  }
  func.func @transform_3(%arg0: i32, %arg1: i32) -> (i32, i32) {
    %c0_i32 = arith.constant 0 : i32
    %c0_i32_0 = arith.constant 0 : i32
    %c0_i32_1 = arith.constant 0 : i32
    return %c0_i32, %c0_i32_0 : i32, i32
  }
  func.func @transform_4(%arg0: i32, %arg1: i32) -> (i32, i32) {
    %c0_i32 = arith.constant 0 : i32
    %c0_i32_0 = arith.constant 0 : i32
    %c0_i32_1 = arith.constant 0 : i32
    return %c0_i32, %c0_i32_0 : i32, i32
  }
  func.func @transform_5(%arg0: i32, %arg1: i32) -> (i32, i32, i32) {
    %c0_i32 = arith.constant 0 : i32
    %c0_i32_0 = arith.constant 0 : i32
    %c0_i32_1 = arith.constant 0 : i32
    %c0_i32_2 = arith.constant 0 : i32
    return %c0_i32, %c0_i32_0, %c0_i32_1 : i32, i32, i32
  }
  func.func @transform_6(%arg0: i32, %arg1: i32) -> (i32, i32) {
    %c0_i32 = arith.constant 0 : i32
    %c0_i32_0 = arith.constant 0 : i32
    %c0_i32_1 = arith.constant 0 : i32
    return %c0_i32, %c0_i32_0 : i32, i32
  }
  func.func @transform_7(%arg0: i32, %arg1: i32) -> (i32, i32) {
    %c0_i32 = arith.constant 0 : i32
    %c0_i32_0 = arith.constant 0 : i32
    %c0_i32_1 = arith.constant 0 : i32
    return %c0_i32, %c0_i32_0 : i32, i32
  }
  func.func @transform_8(%arg0: i32, %arg1: i32) -> (i32, i32, i32, i32) {
    %c0_i32 = arith.constant 0 : i32
    %c0_i32_0 = arith.constant 0 : i32
    %c0_i32_1 = arith.constant 0 : i32
    return %arg0, %arg1, %c0_i32, %c0_i32_0 : i32, i32, i32, i32
  }
}

</mosaic_0001>

<llo_original>
// kernel: double_conv.1
$region0: #{double_conv.1}
  #allocation0 [shape = 'u32[]', space=smem, size = 0x4, offset = 0x4, fixed_abs, tag = 'smem constant byte address 0x4 - core index']
  #allocation1 [shape = 'u32[144,128]{1,0:T(1,128)}', space=vmem, size = 0x12000, scoped, tag = 'internal scratch']
  #allocation2 [shape = 'bf16[12,18,128]{2,1,0:T(8,128)(2,1)}', space=vmem, size = 0x12000, scoped, tag = 'scratch operand']
  #allocation3 [shape = 'bf16[10,18,128]{2,1,0:T(8,128)(2,1)}', space=vmem, size = 0xf000, scoped, tag = 'scratch operand']
  %s0 = inlined_call_operand.vmem [shape: bf16[2,24,18,128], index: 0, kind: input, shape index: {}, may-alias: {0,1}]
  %s1 = inlined_call_operand.vmem [shape: bf16[2,24,18,128], index: 1, kind: input, shape index: {}, may-alias: {0,1}]
  %s2 = inlined_call_operand.vmem [shape: bf16[3,384,128], index: 2, kind: input, shape index: {}]
  %s3 = inlined_call_operand.vmem [shape: f32[1,128], index: 3, kind: input, shape index: {}]
  %s4 = inlined_call_operand.vmem [shape: f32[1,128], index: 4, kind: input, shape index: {}]
  %s5 = inlined_call_operand.vmem [shape: bf16[3,384,128], index: 5, kind: input, shape index: {}]
  %s6 = inlined_call_operand.vmem [shape: f32[1,128], index: 6, kind: input, shape index: {}]
  %s7 = inlined_call_operand.vmem [shape: f32[1,128], index: 7, kind: input, shape index: {}]
  %s8 = inlined_call_operand.vmem [shape: f32[2,16,16,128], index: 8, kind: output, shape index: {}]
  %s9 = sld [smem:[#allocation0]]
  $region73: #{double_conv.1} parent=0
    _
  %s11 = ssub.s32 1, %s9
  %s12 = scalar_select 0, %s11, %s9
  loop: start=0, step=1, limit=6
  $region2: #{double_conv.1} parent=0 // loop_pre_header
    _
  $region3: #{double_conv.1} parent=0 // loop_header
    %s14 = sphi 0, %s18
    %p15 = scmp.ge.s32.totalorder %s14, 6
    %s21 = sphi 0, %s33
    %s22 = sphi 0, %s29
    %s23 = sphi 0, %s21
    %s24 = sphi 0, %s22
    %s25 = sphi 0, %s23
    %s26 = sphi 0, %s24
    %s38 = sphi 0, %s40
    %s41 = sphi 0, %s38
    %s42 = sphi 0, %s41
    %s58 = sphi 0, %s42
    %s70 = sphi 0, %s72
    %s73 = sphi 0, %s70
    %s74 = sphi 0, %s73
    %s90 = sphi 0, %s74
    %s94 = sphi 0, %s94
    %s96 = sphi 0, %s94
    %s97 = sphi 0, %s96
    %s111 = sphi 0, %s97
    %s115 = sphi 0, %s115
    %s117 = sphi 0, %s115
    %s118 = sphi 0, %s117
    %s132 = sphi 0, %s118
    %s136 = sphi 0, %s136
    %s138 = sphi 0, %s136
    %s139 = sphi 0, %s138
    %s153 = sphi 0, %s139
    %s157 = sphi 0, %s157
    %s159 = sphi 0, %s157
    %s160 = sphi 0, %s159
    %s174 = sphi 0, %s160
    %s178 = sphi 0, %s178
    %s180 = sphi 0, %s178
    %s181 = sphi 0, %s180
    %s195 = sphi 0, %s181
    %s199 = sphi 0, %s199
    %s201 = sphi 0, %s199
    %s202 = sphi 0, %s201
    %s216 = sphi 0, %s202
    %s224 = sphi 0, %s226
    %s227 = sphi 0, %s224
    %s228 = sphi 0, %s227
    %s244 = sphi 0, %s228
  $region4: #{double_conv.1} parent=0 // loop_header_branch
    %17 = sbr.rel (%p15) target = $region8
  $region5: #{double_conv.1} parent=0 // loop_body
    %s19 = ssub.s32 %s14, 1
    %s20 = ssub.s32 %s14, 2
    %s27 = sadd.s32 1, %s22
    %p28 = scmp.ge.s32.totalorder %s27, 2
    %s29 = scalar_select %p28, 0, %s27
    %s30 = sadd.s32 1, %s21
    %s31 = scalar_select %p28, %s30, %s21
    %p32 = scmp.ge.s32.totalorder %s31, 2
    %s33 = scalar_select %p32, 0, %s31
    %s34 = ssub.s32 %s21, %s33
    %s35 = ssub.s32 %s22, %s29
    %s36 = sor.u32 %s34, %s35
    %p37 = scmp.eq.s32.totalorder %s36, 0
    %s39 = sadd.s32 %s38, 1
    %s40 = scalar_select %p37, %s38, %s39
    %p43 = pneg %p37
    %p44 = scmp.eq.s32.totalorder %s14, 3
    %p45 = por %p43, %p44
    %p46 = scmp.ne.s32.totalorder %s38, %s41
    %p47 = scmp.eq.s32.totalorder %s14, 0
    %p48 = por %p46, %p47
    %p49 = scmp.ne.s32.totalorder %s38, %s41
    %p50 = scmp.eq.s32.totalorder %s19, 3
    %p51 = por %p49, %p50
    %p52 = scmp.ne.s32.totalorder %s41, %s42
    %p53 = scmp.eq.s32.totalorder %s19, 0
    %p54 = por %p52, %p53
    %p55 = scmp.ne.s32.totalorder %s41, %s42
    %p56 = scmp.eq.s32.totalorder %s20, 3
    %p57 = por %p55, %p56
    %p59 = scmp.ne.s32.totalorder %s42, %s58
    %p60 = scmp.eq.s32.totalorder %s20, 0
    %p61 = por %p59, %p60
    %s62 = sadd.s32 %s22, 1
    %s63 = smul.u32 %s62, 2
    %s64 = sadd.s32 %s29, 1
    %s65 = smul.u32 %s64, 2
    %s66 = ssub.s32 %s21, %s33
    %s67 = ssub.s32 %s63, %s65
    %s68 = sor.u32 %s66, %s67
    %p69 = scmp.eq.s32.totalorder %s68, 0
    %s71 = sadd.s32 %s70, 1
    %s72 = scalar_select %p69, %s70, %s71
    %p75 = pneg %p69
    %p76 = scmp.eq.s32.totalorder %s14, 3
    %p77 = por %p75, %p76
    %p78 = scmp.ne.s32.totalorder %s70, %s73
    %p79 = scmp.eq.s32.totalorder %s14, 0
    %p80 = por %p78, %p79
    %p81 = scmp.ne.s32.totalorder %s70, %s73
    %p82 = scmp.eq.s32.totalorder %s19, 3
    %p83 = por %p81, %p82
    %p84 = scmp.ne.s32.totalorder %s73, %s74
    %p85 = scmp.eq.s32.totalorder %s19, 0
    %p86 = por %p84, %p85
    %p87 = scmp.ne.s32.totalorder %s73, %s74
    %p88 = scmp.eq.s32.totalorder %s20, 3
    %p89 = por %p87, %p88
    %p91 = scmp.ne.s32.totalorder %s74, %s90
    %p92 = scmp.eq.s32.totalorder %s20, 0
    %p93 = por %p91, %p92
    %s95 = sadd.s32 %s94, 1
    %p98 = scmp.eq.s32.totalorder %s14, 3
    %p99 = scmp.ne.s32.totalorder %s94, %s96
    %p100 = scmp.eq.s32.totalorder %s14, 0
    %p101 = por %p99, %p100
    %p102 = scmp.ne.s32.totalorder %s94, %s96
    %p103 = scmp.eq.s32.totalorder %s19, 3
    %p104 = por %p102, %p103
    %p105 = scmp.ne.s32.totalorder %s96, %s97
    %p106 = scmp.eq.s32.totalorder %s19, 0
    %p107 = por %p105, %p106
    %p108 = scmp.ne.s32.totalorder %s96, %s97
    %p109 = scmp.eq.s32.totalorder %s20, 3
    %p110 = por %p108, %p109
    %p112 = scmp.ne.s32.totalorder %s97, %s111
    %p113 = scmp.eq.s32.totalorder %s20, 0
    %p114 = por %p112, %p113
    %s116 = sadd.s32 %s115, 1
    %p119 = scmp.eq.s32.totalorder %s14, 3
    %p120 = scmp.ne.s32.totalorder %s115, %s117
    %p121 = scmp.eq.s32.totalorder %s14, 0
    %p122 = por %p120, %p121
    %p123 = scmp.ne.s32.totalorder %s115, %s117
    %p124 = scmp.eq.s32.totalorder %s19, 3
    %p125 = por %p123, %p124
    %p126 = scmp.ne.s32.totalorder %s117, %s118
    %p127 = scmp.eq.s32.totalorder %s19, 0
    %p128 = por %p126, %p127
    %p129 = scmp.ne.s32.totalorder %s117, %s118
    %p130 = scmp.eq.s32.totalorder %s20, 3
    %p131 = por %p129, %p130
    %p133 = scmp.ne.s32.totalorder %s118, %s132
    %p134 = scmp.eq.s32.totalorder %s20, 0
    %p135 = por %p133, %p134
    %s137 = sadd.s32 %s136, 1
    %p140 = scmp.eq.s32.totalorder %s14, 3
    %p141 = scmp.ne.s32.totalorder %s136, %s138
    %p142 = scmp.eq.s32.totalorder %s14, 0
    %p143 = por %p141, %p142
    %p144 = scmp.ne.s32.totalorder %s136, %s138
    %p145 = scmp.eq.s32.totalorder %s19, 3
    %p146 = por %p144, %p145
    %p147 = scmp.ne.s32.totalorder %s138, %s139
    %p148 = scmp.eq.s32.totalorder %s19, 0
    %p149 = por %p147, %p148
    %p150 = scmp.ne.s32.totalorder %s138, %s139
    %p151 = scmp.eq.s32.totalorder %s20, 3
    %p152 = por %p150, %p151
    %p154 = scmp.ne.s32.totalorder %s139, %s153
    %p155 = scmp.eq.s32.totalorder %s20, 0
    %p156 = por %p154, %p155
    %s158 = sadd.s32 %s157, 1
    %p161 = scmp.eq.s32.totalorder %s14, 3
    %p162 = scmp.ne.s32.totalorder %s157, %s159
    %p163 = scmp.eq.s32.totalorder %s14, 0
    %p164 = por %p162, %p163
    %p165 = scmp.ne.s32.totalorder %s157, %s159
    %p166 = scmp.eq.s32.totalorder %s19, 3
    %p167 = por %p165, %p166
    %p168 = scmp.ne.s32.totalorder %s159, %s160
    %p169 = scmp.eq.s32.totalorder %s19, 0
    %p170 = por %p168, %p169
    %p171 = scmp.ne.s32.totalorder %s159, %s160
    %p172 = scmp.eq.s32.totalorder %s20, 3
    %p173 = por %p171, %p172
    %p175 = scmp.ne.s32.totalorder %s160, %s174
    %p176 = scmp.eq.s32.totalorder %s20, 0
    %p177 = por %p175, %p176
    %s179 = sadd.s32 %s178, 1
    %p182 = scmp.eq.s32.totalorder %s14, 3
    %p183 = scmp.ne.s32.totalorder %s178, %s180
    %p184 = scmp.eq.s32.totalorder %s14, 0
    %p185 = por %p183, %p184
    %p186 = scmp.ne.s32.totalorder %s178, %s180
    %p187 = scmp.eq.s32.totalorder %s19, 3
    %p188 = por %p186, %p187
    %p189 = scmp.ne.s32.totalorder %s180, %s181
    %p190 = scmp.eq.s32.totalorder %s19, 0
    %p191 = por %p189, %p190
    %p192 = scmp.ne.s32.totalorder %s180, %s181
    %p193 = scmp.eq.s32.totalorder %s20, 3
    %p194 = por %p192, %p193
    %p196 = scmp.ne.s32.totalorder %s181, %s195
    %p197 = scmp.eq.s32.totalorder %s20, 0
    %p198 = por %p196, %p197
    %s200 = sadd.s32 %s199, 1
    %p203 = scmp.eq.s32.totalorder %s14, 3
    %p204 = scmp.ne.s32.totalorder %s199, %s201
    %p205 = scmp.eq.s32.totalorder %s14, 0
    %p206 = por %p204, %p205
    %p207 = scmp.ne.s32.totalorder %s199, %s201
    %p208 = scmp.eq.s32.totalorder %s19, 3
    %p209 = por %p207, %p208
    %p210 = scmp.ne.s32.totalorder %s201, %s202
    %p211 = scmp.eq.s32.totalorder %s19, 0
    %p212 = por %p210, %p211
    %p213 = scmp.ne.s32.totalorder %s201, %s202
    %p214 = scmp.eq.s32.totalorder %s20, 3
    %p215 = por %p213, %p214
    %p217 = scmp.ne.s32.totalorder %s202, %s216
    %p218 = scmp.eq.s32.totalorder %s20, 0
    %p219 = por %p217, %p218
    %s220 = ssub.s32 %s21, %s33
    %s221 = ssub.s32 %s22, %s29
    %s222 = sor.u32 %s220, %s221
    %p223 = scmp.eq.s32.totalorder %s222, 0
    %s225 = sadd.s32 %s224, 1
    %s226 = scalar_select %p223, %s224, %s225
    %p229 = pneg %p223
    %p230 = scmp.eq.s32.totalorder %s14, 3
    %p231 = por %p229, %p230
    %p232 = scmp.ne.s32.totalorder %s224, %s227
    %p233 = scmp.eq.s32.totalorder %s14, 0
    %p234 = por %p232, %p233
    %p235 = scmp.ne.s32.totalorder %s224, %s227
    %p236 = scmp.eq.s32.totalorder %s19, 3
    %p237 = por %p235, %p236
    %p238 = scmp.ne.s32.totalorder %s227, %s228
    %p239 = scmp.eq.s32.totalorder %s19, 0
    %p240 = por %p238, %p239
    %p241 = scmp.ne.s32.totalorder %s227, %s228
    %p242 = scmp.eq.s32.totalorder %s20, 3
    %p243 = por %p241, %p242
    %p245 = scmp.ne.s32.totalorder %s228, %s244
    %p246 = scmp.eq.s32.totalorder %s20, 0
    %p247 = por %p245, %p246
    %p248 = scmp.le.s32.totalorder 1, %s14
    %p249 = scmp.lt.s32.totalorder %s14, 5
    %p250 = pnand %p248, %p249
    %p251 = pneg %p250
    // Predicated region
    $region9: #{double_conv.1} parent=5 // pred_check
      _
    $region10: #{double_conv.1} parent=5 // pred_check_branch
      %253 = sbr.rel (%p250) target = $region12
    $region11: #{double_conv.1} parent=5 // pred_region
      %s254 = ssub.s32 %s14, 1
      // Predicated region
      $region13: #{double_conv.1} parent=11 // pred_check
        %p255 = pneg %p107
      $region14: #{double_conv.1} parent=11 // pred_check_branch
        %257 = sbr.rel (%p255) target = $region16
      $region15: #{double_conv.1} parent=11 // pred_region
        _
      $region16: #{double_conv.1} parent=11 // pred_fallthru
        _
      // Predicated region
      $region17: #{double_conv.1} parent=11 // pred_check
        %p258 = pneg %p128
      $region18: #{double_conv.1} parent=11 // pred_check_branch
        %260 = sbr.rel (%p258) target = $region20
      $region19: #{double_conv.1} parent=11 // pred_region
        _
      $region20: #{double_conv.1} parent=11 // pred_fallthru
        _
      // Predicated region
      $region21: #{double_conv.1} parent=11 // pred_check
        %p261 = pneg %p149
      $region22: #{double_conv.1} parent=11 // pred_check_branch
        %263 = sbr.rel (%p261) target = $region24
      $region23: #{double_conv.1} parent=11 // pred_region
        _
      $region24: #{double_conv.1} parent=11 // pred_fallthru
        _
      // Predicated region
      $region25: #{double_conv.1} parent=11 // pred_check
        %p264 = pneg %p170
      $region26: #{double_conv.1} parent=11 // pred_check_branch
        %266 = sbr.rel (%p264) target = $region28
      $region27: #{double_conv.1} parent=11 // pred_region
        _
      $region28: #{double_conv.1} parent=11 // pred_fallthru
        _
      // Predicated region
      $region29: #{double_conv.1} parent=11 // pred_check
        %p267 = pneg %p191
      $region30: #{double_conv.1} parent=11 // pred_check_branch
        %269 = sbr.rel (%p267) target = $region32
      $region31: #{double_conv.1} parent=11 // pred_region
        _
      $region32: #{double_conv.1} parent=11 // pred_fallthru
        _
      // Predicated region
      $region33: #{double_conv.1} parent=11 // pred_check
        %p270 = pneg %p212
      $region34: #{double_conv.1} parent=11 // pred_check_branch
        %272 = sbr.rel (%p270) target = $region36
      $region35: #{double_conv.1} parent=11 // pred_region
        _
      $region36: #{double_conv.1} parent=11 // pred_fallthru
        _
    $region12: #{double_conv.1} parent=5 // pred_fallthru
      _
    %p273 = scmp.lt.s32.totalorder %s14, 4
    // Predicated region
    $region37: #{double_conv.1} parent=5 // pred_check
      %p274 = pneg %p273
    $region38: #{double_conv.1} parent=5 // pred_check_branch
      %276 = sbr.rel (%p274) target = $region40
    $region39: #{double_conv.1} parent=5 // pred_region
      // Predicated region
      $region41: #{double_conv.1} parent=39 // pred_check
        %p277 = pneg %p48
      $region42: #{double_conv.1} parent=39 // pred_check_branch
        %279 = sbr.rel (%p277) target = $region44
      $region43: #{double_conv.1} parent=39 // pred_region
        %s280 = smul.u32 8, %s22
        %p281 = scmp.lt.s32.totalorder %s21, 1
        %s282 = scalar_select %p281, %s21, 1
        %p283 = scmp.lt.s32.totalorder %s280, 23
        %s284 = scalar_select %p283, %s280, 23
        %s285 = smul.addr %s284, 3
        %s286 = smul.addr %s282, 72
        %s287 = sadd.s32 %s285, %s286
        %s288 = smul.addr %s287, 4
        %s289 = scalar_lea.vmem %s0, %s288
        %s290 = smul.u32 8, %s22
      $region44: #{double_conv.1} parent=39 // pred_fallthru
        _
      // Predicated region
      $region45: #{double_conv.1} parent=39 // pred_check
        %p291 = pneg %p80
      $region46: #{double_conv.1} parent=39 // pred_check_branch
        %293 = sbr.rel (%p291) target = $region48
      $region47: #{double_conv.1} parent=39 // pred_region
        %s294 = sadd.s32 %s22, 1
        %s295 = smul.u32 %s294, 2
        %s296 = smul.u32 4, %s295
        %p297 = scmp.lt.s32.totalorder %s21, 1
        %s298 = scalar_select %p297, %s21, 1
        %p299 = scmp.lt.s32.totalorder %s296, 23
        %s300 = scalar_select %p299, %s296, 23
        %s301 = smul.addr %s300, 3
        %s302 = smul.addr %s298, 72
        %s303 = sadd.s32 %s301, %s302
        %s304 = smul.addr %s303, 4
        %s305 = scalar_lea.vmem %s1, %s304
        %s306 = sadd.s32 %s22, 1
        %s307 = smul.u32 %s306, 2
        %s308 = smul.u32 4, %s307
      $region48: #{double_conv.1} parent=39 // pred_fallthru
        _
    $region40: #{double_conv.1} parent=5 // pred_fallthru
      _
    %p309 = scmp.le.s32.totalorder 1, %s14
    %p310 = scmp.lt.s32.totalorder %s14, 5
    %p311 = pnand %p309, %p310
    %p312 = pneg %p311
    // Predicated region
    $region49: #{double_conv.1} parent=5 // pred_check
      _
    $region50: #{double_conv.1} parent=5 // pred_check_branch
      %314 = sbr.rel (%p311) target = $region52
    $region51: #{double_conv.1} parent=5 // pred_region
      %s315 = ssub.s32 %s14, 1
      %s316 = smul.u32 8, %s24
      %p317 = scmp.lt.s32.totalorder %s23, 1
      %s318 = scalar_select %p317, %s23, 1
      %p319 = scmp.lt.s32.totalorder %s316, 23
      %s320 = scalar_select %p319, %s316, 23
      %s321 = smul.addr %s320, 3
      %s322 = smul.addr %s318, 72
      %s323 = sadd.s32 %s321, %s322
      %s324 = smul.addr %s323, 4
      %s325 = scalar_lea.vmem %s0, %s324
      %p326 = pneg %p54
      %p327 = pneg %p51
      %s328 = sadd.s32 %s24, 1
      %s329 = smul.u32 %s328, 2
      %s330 = smul.u32 4, %s329
      %p331 = scmp.lt.s32.totalorder %s23, 1
      %s332 = scalar_select %p331, %s23, 1
      %p333 = scmp.lt.s32.totalorder %s330, 23
      %s334 = scalar_select %p333, %s330, 23
      %s335 = smul.addr %s334, 3
      %s336 = smul.addr %s332, 72
      %s337 = sadd.s32 %s335, %s336
      %s338 = smul.addr %s337, 4
      %s339 = scalar_lea.vmem %s1, %s338
      %p340 = pneg %p86
      %p341 = pneg %p83
      %p342 = pneg %p107
      %p343 = pneg %p104
      %p344 = pneg %p128
      %p345 = pneg %p125
      %p346 = pneg %p149
      %p347 = pneg %p146
      %p348 = pneg %p170
      %p349 = pneg %p167
      %p350 = pneg %p191
      %p351 = pneg %p188
      %p352 = pneg %p212
      %p353 = pneg %p209
      %p354 = pneg %p240
      %p355 = pneg %p237
      %s356 = smul.u32 8, %s24
      %p357 = scmp.lt.s32.totalorder %s23, 1
      %s358 = scalar_select %p357, %s23, 1
      %p359 = scmp.lt.s32.totalorder %s356, 15
      %s360 = scalar_select %p359, %s356, 15
      %s361 = smul.addr %s360, 2
      %s362 = smul.addr %s358, 32
      %s363 = sadd.s32 %s361, %s362
      %s364 = smul.addr %s363, 8
      %s365 = scalar_lea.vmem %s8, %s364
      %s366 = smul.u32 8, %s24
      %p367 = scmp.lt.s32.totalorder %s23, 1
      %s368 = scalar_select %p367, %s23, 1
      %p369 = scmp.lt.s32.totalorder %s366, 23
      %s370 = scalar_select %p369, %s366, 23
      %s371 = smul.addr %s370, 3
      %s372 = smul.addr %s368, 72
      %s373 = sadd.s32 %s371, %s372
      %s374 = smul.addr %s373, 4
      %s375 = scalar_lea.vmem %s0, %s374
      %s376 = smul.u32 8, %s24
      %s377 = sadd.s32 %s24, 1
      %s378 = smul.u32 %s377, 2
      %s379 = smul.u32 4, %s378
      %p380 = scmp.lt.s32.totalorder %s23, 1
      %s381 = scalar_select %p380, %s23, 1
      %p382 = scmp.lt.s32.totalorder %s379, 23
      %s383 = scalar_select %p382, %s379, 23
      %s384 = smul.addr %s383, 3
      %s385 = smul.addr %s381, 72
      %s386 = sadd.s32 %s384, %s385
      %s387 = smul.addr %s386, 4
      %s388 = scalar_lea.vmem %s1, %s387
      %s389 = sadd.s32 %s24, 1
      %s390 = smul.u32 %s389, 2
      %s391 = smul.u32 4, %s390
      %s392 = smul.u32 8, %s24
      %p393 = scmp.lt.s32.totalorder %s23, 1
      %s394 = scalar_select %p393, %s23, 1
      %p395 = scmp.lt.s32.totalorder %s392, 15
      %s396 = scalar_select %p395, %s392, 15
      %s397 = smul.addr %s396, 2
      %s398 = smul.addr %s394, 32
      %s399 = sadd.s32 %s397, %s398
      %s400 = smul.addr %s399, 8
      %s401 = scalar_lea.vmem %s8, %s400
      %s402 = smul.u32 8, %s24
      %v404 = vld [vmem:[%s375] sm:$0xf]
      %v405 = vld [vmem:[%s375 + $0x4] sm:$0xf]
      %v406 = vld [vmem:[%s375 + $0x8] sm:$0x1]
      %v407 = vld [vmem:[%s375 + $0xc] sm:$0xf]
      %v408 = vld [vmem:[%s375 + $0x10] sm:$0xf]
      %v409 = vld [vmem:[%s375 + $0x14] sm:$0x1]
      %v410 = vld [vmem:[%s375 + $0x18] sm:$0xf]
      %v411 = vld [vmem:[%s375 + $0x1c] sm:$0xf]
      %v412 = vld [vmem:[%s375 + $0x20] sm:$0x1]
      %v413 = vld [vmem:[%s375 + $0x24] sm:$0xf]
      %v414 = vld [vmem:[%s375 + $0x28] sm:$0xf]
      %v415 = vld [vmem:[%s375 + $0x2c] sm:$0x1]
      %v416 = vld [vmem:[%s375 + $0x30] sm:$0xf]
      %v417 = vld [vmem:[%s375 + $0x34] sm:$0xf]
      %v418 = vld [vmem:[%s375 + $0x38] sm:$0x1]
      %v419 = vld [vmem:[%s375 + $0x3c] sm:$0xf]
      %v420 = vld [vmem:[%s375 + $0x40] sm:$0xf]
      %v421 = vld [vmem:[%s375 + $0x44] sm:$0x1]
      %v422 = vld [vmem:[%s375 + $0x48] sm:$0xf]
      %v423 = vld [vmem:[%s375 + $0x4c] sm:$0xf]
      %v424 = vld [vmem:[%s375 + $0x50] sm:$0x1]
      %v425 = vld [vmem:[%s375 + $0x54] sm:$0xf]
      %v426 = vld [vmem:[%s375 + $0x58] sm:$0xf]
      %v427 = vld [vmem:[%s375 + $0x5c] sm:$0x1]
      %428 = vst [vmem:[#allocation2] sm:$0xf] %v404
      %429 = vst [vmem:[#allocation2 + $0x4] sm:$0xf] %v405
      %430 = vst [vmem:[#allocation2 + $0x8] sm:$0x1] %v406
      %431 = vst [vmem:[#allocation2 + $0xc] sm:$0xf] %v407
      %432 = vst [vmem:[#allocation2 + $0x10] sm:$0xf] %v408
      %433 = vst [vmem:[#allocation2 + $0x14] sm:$0x1] %v409
      %434 = vst [vmem:[#allocation2 + $0x18] sm:$0xf] %v410
      %435 = vst [vmem:[#allocation2 + $0x1c] sm:$0xf] %v411
      %436 = vst [vmem:[#allocation2 + $0x20] sm:$0x1] %v412
      %437 = vst [vmem:[#allocation2 + $0x24] sm:$0xf] %v413
      %438 = vst [vmem:[#allocation2 + $0x28] sm:$0xf] %v414
      %439 = vst [vmem:[#allocation2 + $0x2c] sm:$0x1] %v415
      %440 = vst [vmem:[#allocation2 + $0x30] sm:$0xf] %v416
      %441 = vst [vmem:[#allocation2 + $0x34] sm:$0xf] %v417
      %442 = vst [vmem:[#allocation2 + $0x38] sm:$0x1] %v418
      %443 = vst [vmem:[#allocation2 + $0x3c] sm:$0xf] %v419
      %444 = vst [vmem:[#allocation2 + $0x40] sm:$0xf] %v420
      %445 = vst [vmem:[#allocation2 + $0x44] sm:$0x1] %v421
      %446 = vst [vmem:[#allocation2 + $0x48] sm:$0xf] %v422
      %447 = vst [vmem:[#allocation2 + $0x4c] sm:$0xf] %v423
      %448 = vst [vmem:[#allocation2 + $0x50] sm:$0x1] %v424
      %449 = vst [vmem:[#allocation2 + $0x54] sm:$0xf] %v425
      %450 = vst [vmem:[#allocation2 + $0x58] sm:$0xf] %v426
      %451 = vst [vmem:[#allocation2 + $0x5c] sm:$0x1] %v427
      %v452 = vld [vmem:[%s388] sm:$0xf]
      %v453 = vld [vmem:[%s388 + $0x4] sm:$0xf]
      %v454 = vld [vmem:[%s388 + $0x8] sm:$0x1]
      %v455 = vld [vmem:[%s388 + $0xc] sm:$0xf]
      %v456 = vld [vmem:[%s388 + $0x10] sm:$0xf]
      %v457 = vld [vmem:[%s388 + $0x14] sm:$0x1]
      %v458 = vld [vmem:[%s388 + $0x18] sm:$0xf]
      %v459 = vld [vmem:[%s388 + $0x1c] sm:$0xf]
      %v460 = vld [vmem:[%s388 + $0x20] sm:$0x1]
      %v461 = vld [vmem:[%s388 + $0x24] sm:$0xf]
      %v462 = vld [vmem:[%s388 + $0x28] sm:$0xf]
      %v463 = vld [vmem:[%s388 + $0x2c] sm:$0x1]
      %s464 = scalar_lea.vmem [#allocation2], 96
      %465 = vst [vmem:[%s464] sm:$0xf] %v452
      %466 = vst [vmem:[%s464 + $0x4] sm:$0xf] %v453
      %467 = vst [vmem:[%s464 + $0x8] sm:$0x1] %v454
      %468 = vst [vmem:[%s464 + $0xc] sm:$0xf] %v455
      %469 = vst [vmem:[%s464 + $0x10] sm:$0xf] %v456
      %470 = vst [vmem:[%s464 + $0x14] sm:$0x1] %v457
      %471 = vst [vmem:[%s464 + $0x18] sm:$0xf] %v458
      %472 = vst [vmem:[%s464 + $0x1c] sm:$0xf] %v459
      %473 = vst [vmem:[%s464 + $0x20] sm:$0x1] %v460
      %474 = vst [vmem:[%s464 + $0x24] sm:$0xf] %v461
      %475 = vst [vmem:[%s464 + $0x28] sm:$0xf] %v462
      %476 = vst [vmem:[%s464 + $0x2c] sm:$0x1] %v463
      %v477 = vld [vmem:[#allocation2] sm:$0xf]
      %v478 = vld [vmem:[#allocation2 + $0x4] sm:$0xf]
      %v479 = vld [vmem:[#allocation2 + $0x8] sm:$0x1]
      %v480 = vld [vmem:[#allocation2 + $0xc] sm:$0xf]
      %v481 = vld [vmem:[#allocation2 + $0x10] sm:$0xf]
      %v482 = vld [vmem:[#allocation2 + $0x14] sm:$0x1]
      %v483 = vld [vmem:[#allocation2 + $0x18] sm:$0xf]
      %v484 = vld [vmem:[#allocation2 + $0x1c] sm:$0xf]
      %v485 = vld [vmem:[#allocation2 + $0x20] sm:$0x1]
      %v486 = vld [vmem:[#allocation2 + $0x24] sm:$0xf]
      %v487 = vld [vmem:[#allocation2 + $0x28] sm:$0xf]
      %v488 = vld [vmem:[#allocation2 + $0x2c] sm:$0x1]
      %v489 = vld [vmem:[#allocation2 + $0x30] sm:$0xf]
      %v490 = vld [vmem:[#allocation2 + $0x34] sm:$0xf]
      %v491 = vld [vmem:[#allocation2 + $0x38] sm:$0x1]
      %v492 = vld [vmem:[#allocation2 + $0x3c] sm:$0xf]
      %v493 = vld [vmem:[#allocation2 + $0x40] sm:$0xf]
      %v494 = vld [vmem:[#allocation2 + $0x44] sm:$0x1]
      %v495 = vld [vmem:[#allocation2 + $0x48] sm:$0xf]
      %v496 = vld [vmem:[#allocation2 + $0x4c] sm:$0xf]
      %v497 = vld [vmem:[#allocation2 + $0x50] sm:$0x1]
      %v498 = vld [vmem:[#allocation2 + $0x54] sm:$0xf]
      %v499 = vld [vmem:[#allocation2 + $0x58] sm:$0xf]
      %v500 = vld [vmem:[#allocation2 + $0x5c] sm:$0x1]
      %v501 = vld [vmem:[#allocation2 + $0x60] sm:$0xf]
      %v502 = vld [vmem:[#allocation2 + $0x64] sm:$0xf]
      %v503 = vld [vmem:[#allocation2 + $0x68] sm:$0x1]
      %v504 = vld [vmem:[#allocation2 + $0x6c] sm:$0xf]
      %v505 = vld [vmem:[#allocation2 + $0x70] sm:$0xf]
      %v506 = vld [vmem:[#allocation2 + $0x74] sm:$0x1]
      %v527 = vunpack.c.l.b16 %v477
      %v528 = vunpack.c.l.b16 %v478
      %v529 = vunpack.c.l.b16 %v480
      %v530 = vunpack.c.l.b16 %v481
      %v531 = vunpack.c.l.b16 %v483
      %v532 = vunpack.c.l.b16 %v484
      %v533 = vunpack.c.l.b16 %v486
      %v534 = vunpack.c.l.b16 %v487
      %v535 = vunpack.c.l.b16 %v489
      %v536 = vunpack.c.l.b16 %v490
      %v537 = vunpack.c.l.b16 %v492
      %v538 = vunpack.c.l.b16 %v493
      %v539 = vunpack.c.l.b16 %v495
      %v540 = vunpack.c.l.b16 %v496
      %v541 = vunpack.c.l.b16 %v498
      %v542 = vunpack.c.l.b16 %v499
      %v543 = vunpack.c.l.b16 %v501
      %v544 = vunpack.c.l.b16 %v502
      %v545 = vunpack.c.l.b16 %v504
      %v546 = vunpack.c.l.b16 %v505
      %v547 = vpack.c.b16 %v528, %v527
      %v548 = vpack.c.b16 %v530, %v529
      %v549 = vpack.c.b16 %v532, %v531
      %v550 = vpack.c.b16 %v534, %v533
      %v551 = vpack.c.b16 %v536, %v535
      %v552 = vpack.c.b16 %v538, %v537
      %v553 = vpack.c.b16 %v540, %v539
      %v554 = vpack.c.b16 %v542, %v541
      %v555 = vpack.c.b16 %v544, %v543
      %v556 = vpack.c.b16 %v546, %v545
      %v577 = vunpack.c.l.b16 %v479
      %v578 = vunpack.c.l.b16 %v482
      %v579 = vunpack.c.l.b16 %v485
      %v580 = vunpack.c.l.b16 %v488
      %v581 = vunpack.c.l.b16 %v491
      %v582 = vunpack.c.l.b16 %v494
      %v583 = vunpack.c.l.b16 %v497
      %v584 = vunpack.c.l.b16 %v500
      %v585 = vunpack.c.l.b16 %v503
      %v586 = vunpack.c.l.b16 %v506
      %v587 = vpack.c.b16 %v577, %v577
      %v588 = vpack.c.b16 %v578, %v578
      %v589 = vpack.c.b16 %v579, %v579
      %v590 = vpack.c.b16 %v580, %v580
      %v591 = vpack.c.b16 %v581, %v581
      %v592 = vpack.c.b16 %v582, %v582
      %v593 = vpack.c.b16 %v583, %v583
      %v594 = vpack.c.b16 %v584, %v584
      %v595 = vpack.c.b16 %v585, %v585
      %v596 = vpack.c.b16 %v586, %v586
      %vm597 = vsmask.f32 7424
      %v599 = vshrl.u32 %v547, 16
      %v601 = vshll.u32 %v547, 16
      %v603 = vrot.slane %v601, 1
      %v604 = vor.u32 %v599, %v603
      %v606 = vshll.u32 %v587, 16
      %v608 = vrot.slane %v606, 1
      %v609 = vsel %vm597, %v604, %v608
      %v611 = vshrl.u32 %v548, 16
      %v613 = vshll.u32 %v548, 16
      %v615 = vrot.slane %v613, 1
      %v616 = vor.u32 %v611, %v615
      %v618 = vshll.u32 %v588, 16
      %v620 = vrot.slane %v618, 1
      %v621 = vsel %vm597, %v616, %v620
      %v623 = vshrl.u32 %v549, 16
      %v625 = vshll.u32 %v549, 16
      %v627 = vrot.slane %v625, 1
      %v628 = vor.u32 %v623, %v627
      %v630 = vshll.u32 %v589, 16
      %v632 = vrot.slane %v630, 1
      %v633 = vsel %vm597, %v628, %v632
      %v635 = vshrl.u32 %v550, 16
      %v637 = vshll.u32 %v550, 16
      %v639 = vrot.slane %v637, 1
      %v640 = vor.u32 %v635, %v639
      %v642 = vshll.u32 %v590, 16
      %v644 = vrot.slane %v642, 1
      %v645 = vsel %vm597, %v640, %v644
      %v647 = vshrl.u32 %v551, 16
      %v649 = vshll.u32 %v551, 16
      %v651 = vrot.slane %v649, 1
      %v652 = vor.u32 %v647, %v651
      %v654 = vshll.u32 %v591, 16
      %v656 = vrot.slane %v654, 1
      %v657 = vsel %vm597, %v652, %v656
      %v659 = vshrl.u32 %v552, 16
      %v661 = vshll.u32 %v552, 16
      %v663 = vrot.slane %v661, 1
      %v664 = vor.u32 %v659, %v663
      %v666 = vshll.u32 %v592, 16
      %v668 = vrot.slane %v666, 1
      %v669 = vsel %vm597, %v664, %v668
      %v671 = vshrl.u32 %v553, 16
      %v673 = vshll.u32 %v553, 16
      %v675 = vrot.slane %v673, 1
      %v676 = vor.u32 %v671, %v675
      %v678 = vshll.u32 %v593, 16
      %v680 = vrot.slane %v678, 1
      %v681 = vsel %vm597, %v676, %v680
      %v683 = vshrl.u32 %v554, 16
      %v685 = vshll.u32 %v554, 16
      %v687 = vrot.slane %v685, 1
      %v688 = vor.u32 %v683, %v687
      %v690 = vshll.u32 %v594, 16
      %v692 = vrot.slane %v690, 1
      %v693 = vsel %vm597, %v688, %v692
      %v695 = vshrl.u32 %v555, 16
      %v697 = vshll.u32 %v555, 16
      %v699 = vrot.slane %v697, 1
      %v700 = vor.u32 %v695, %v699
      %v702 = vshll.u32 %v595, 16
      %v704 = vrot.slane %v702, 1
      %v705 = vsel %vm597, %v700, %v704
      %v707 = vshrl.u32 %v556, 16
      %v709 = vshll.u32 %v556, 16
      %v711 = vrot.slane %v709, 1
      %v712 = vor.u32 %v707, %v711
      %v714 = vshll.u32 %v596, 16
      %v716 = vrot.slane %v714, 1
      %v717 = vsel %vm597, %v712, %v716
      %vm728 = vcmask 1046528
      %v729 = vrot.slane %v547, 1
      %v730 = vrot.slane %v587, 1
      %v731 = vsel %vm728, %v729, %v730
      %v732 = vrot.slane %v548, 1
      %v733 = vrot.slane %v588, 1
      %v734 = vsel %vm728, %v732, %v733
      %v735 = vrot.slane %v549, 1
      %v736 = vrot.slane %v589, 1
      %v737 = vsel %vm728, %v735, %v736
      %v738 = vrot.slane %v550, 1
      %v739 = vrot.slane %v590, 1
      %v740 = vsel %vm728, %v738, %v739
      %v741 = vrot.slane %v551, 1
      %v742 = vrot.slane %v591, 1
      %v743 = vsel %vm728, %v741, %v742
      %v744 = vrot.slane %v552, 1
      %v745 = vrot.slane %v592, 1
      %v746 = vsel %vm728, %v744, %v745
      %v747 = vrot.slane %v553, 1
      %v748 = vrot.slane %v593, 1
      %v749 = vsel %vm728, %v747, %v748
      %v750 = vrot.slane %v554, 1
      %v751 = vrot.slane %v594, 1
      %v752 = vsel %vm728, %v750, %v751
      %v753 = vrot.slane %v555, 1
      %v754 = vrot.slane %v595, 1
      %v755 = vsel %vm728, %v753, %v754
      %v756 = vrot.slane %v556, 1
      %v757 = vrot.slane %v596, 1
      %v758 = vsel %vm728, %v756, %v757
      %v769 = vld [vmem:[%s2] sm:$0xf]
      %v770 = vld [vmem:[%s2 + $0x4] sm:$0xf]
      %v771 = vld [vmem:[%s2 + $0x8] sm:$0xf]
      %v772 = vld [vmem:[%s2 + $0xc] sm:$0xf]
      %v773 = vld [vmem:[%s2 + $0x10] sm:$0xf]
      %v774 = vld [vmem:[%s2 + $0x14] sm:$0xf]
      %v775 = vld [vmem:[%s2 + $0x18] sm:$0xf]
      %v776 = vld [vmem:[%s2 + $0x1c] sm:$0xf]
      %v777 = vld [vmem:[%s2 + $0x20] sm:$0xf]
      %v778 = vld [vmem:[%s2 + $0x24] sm:$0xf]
      %v779 = vld [vmem:[%s2 + $0x28] sm:$0xf]
      %v780 = vld [vmem:[%s2 + $0x2c] sm:$0xf]
      %v781 = vld [vmem:[%s2 + $0x30] sm:$0xf]
      %v782 = vld [vmem:[%s2 + $0x34] sm:$0xf]
      %v783 = vld [vmem:[%s2 + $0x38] sm:$0xf]
      %v784 = vld [vmem:[%s2 + $0x3c] sm:$0xf]
      %v785 = vld [vmem:[%s2 + $0x40] sm:$0xf]
      %v786 = vld [vmem:[%s2 + $0x44] sm:$0xf]
      %v787 = vld [vmem:[%s2 + $0x48] sm:$0xf]
      %v788 = vld [vmem:[%s2 + $0x4c] sm:$0xf]
      %v789 = vld [vmem:[%s2 + $0x50] sm:$0xf]
      %v790 = vld [vmem:[%s2 + $0x54] sm:$0xf]
      %v791 = vld [vmem:[%s2 + $0x58] sm:$0xf]
      %v792 = vld [vmem:[%s2 + $0x5c] sm:$0xf]
      %v793 = vld [vmem:[%s2 + $0x60] sm:$0xf]
      %v794 = vld [vmem:[%s2 + $0x64] sm:$0xf]
      %v795 = vld [vmem:[%s2 + $0x68] sm:$0xf]
      %v796 = vld [vmem:[%s2 + $0x6c] sm:$0xf]
      %v797 = vld [vmem:[%s2 + $0x70] sm:$0xf]
      %v798 = vld [vmem:[%s2 + $0x74] sm:$0xf]
      %v799 = vld [vmem:[%s2 + $0x78] sm:$0xf]
      %v800 = vld [vmem:[%s2 + $0x7c] sm:$0xf]
      %v801 = vld [vmem:[%s2 + $0x80] sm:$0xf]
      %v802 = vld [vmem:[%s2 + $0x84] sm:$0xf]
      %v803 = vld [vmem:[%s2 + $0x88] sm:$0xf]
      %v804 = vld [vmem:[%s2 + $0x8c] sm:$0xf]
      %v805 = vld [vmem:[%s2 + $0x90] sm:$0xf]
      %v806 = vld [vmem:[%s2 + $0x94] sm:$0xf]
      %v807 = vld [vmem:[%s2 + $0x98] sm:$0xf]
      %v808 = vld [vmem:[%s2 + $0x9c] sm:$0xf]
      %v809 = vld [vmem:[%s2 + $0xa0] sm:$0xf]
      %v810 = vld [vmem:[%s2 + $0xa4] sm:$0xf]
      %v811 = vld [vmem:[%s2 + $0xa8] sm:$0xf]
      %v812 = vld [vmem:[%s2 + $0xac] sm:$0xf]
      %v813 = vld [vmem:[%s2 + $0xb0] sm:$0xf]
      %v814 = vld [vmem:[%s2 + $0xb4] sm:$0xf]
      %v815 = vld [vmem:[%s2 + $0xb8] sm:$0xf]
      %v816 = vld [vmem:[%s2 + $0xbc] sm:$0xf]
      %s817 = scalar_lea.vmem [#allocation2], 12
      %v818 = vld [vmem:[%s817] sm:$0xf]
      %v819 = vld [vmem:[%s817 + $0x4] sm:$0xf]
      %v820 = vld [vmem:[%s817 + $0x8] sm:$0x1]
      %v821 = vld [vmem:[%s817 + $0xc] sm:$0xf]
      %v822 = vld [vmem:[%s817 + $0x10] sm:$0xf]
      %v823 = vld [vmem:[%s817 + $0x14] sm:$0x1]
      %v824 = vld [vmem:[%s817 + $0x18] sm:$0xf]
      %v825 = vld [vmem:[%s817 + $0x1c] sm:$0xf]
      %v826 = vld [vmem:[%s817 + $0x20] sm:$0x1]
      %v827 = vld [vmem:[%s817 + $0x24] sm:$0xf]
      %v828 = vld [vmem:[%s817 + $0x28] sm:$0xf]
      %v829 = vld [vmem:[%s817 + $0x2c] sm:$0x1]
      %v830 = vld [vmem:[%s817 + $0x30] sm:$0xf]
      %v831 = vld [vmem:[%s817 + $0x34] sm:$0xf]
      %v832 = vld [vmem:[%s817 + $0x38] sm:$0x1]
      %v833 = vld [vmem:[%s817 + $0x3c] sm:$0xf]
      %v834 = vld [vmem:[%s817 + $0x40] sm:$0xf]
      %v835 = vld [vmem:[%s817 + $0x44] sm:$0x1]
      %v836 = vld [vmem:[%s817 + $0x48] sm:$0xf]
      %v837 = vld [vmem:[%s817 + $0x4c] sm:$0xf]
      %v838 = vld [vmem:[%s817 + $0x50] sm:$0x1]
      %v839 = vld [vmem:[%s817 + $0x54] sm:$0xf]
      %v840 = vld [vmem:[%s817 + $0x58] sm:$0xf]
      %v841 = vld [vmem:[%s817 + $0x5c] sm:$0x1]
      %v842 = vld [vmem:[%s817 + $0x60] sm:$0xf]
      %v843 = vld [vmem:[%s817 + $0x64] sm:$0xf]
      %v844 = vld [vmem:[%s817 + $0x68] sm:$0x1]
      %v845 = vld [vmem:[%s817 + $0x6c] sm:$0xf]
      %v846 = vld [vmem:[%s817 + $0x70] sm:$0xf]
      %v847 = vld [vmem:[%s817 + $0x74] sm:$0x1]
      %v868 = vunpack.c.l.b16 %v818
      %v869 = vunpack.c.l.b16 %v819
      %v870 = vunpack.c.l.b16 %v821
      %v871 = vunpack.c.l.b16 %v822
      %v872 = vunpack.c.l.b16 %v824
      %v873 = vunpack.c.l.b16 %v825
      %v874 = vunpack.c.l.b16 %v827
      %v875 = vunpack.c.l.b16 %v828
      %v876 = vunpack.c.l.b16 %v830
      %v877 = vunpack.c.l.b16 %v831
      %v878 = vunpack.c.l.b16 %v833
      %v879 = vunpack.c.l.b16 %v834
      %v880 = vunpack.c.l.b16 %v836
      %v881 = vunpack.c.l.b16 %v837
      %v882 = vunpack.c.l.b16 %v839
      %v883 = vunpack.c.l.b16 %v840
      %v884 = vunpack.c.l.b16 %v842
      %v885 = vunpack.c.l.b16 %v843
      %v886 = vunpack.c.l.b16 %v845
      %v887 = vunpack.c.l.b16 %v846
      %v888 = vpack.c.b16 %v869, %v868
      %v889 = vpack.c.b16 %v871, %v870
      %v890 = vpack.c.b16 %v873, %v872
      %v891 = vpack.c.b16 %v875, %v874
      %v892 = vpack.c.b16 %v877, %v876
      %v893 = vpack.c.b16 %v879, %v878
      %v894 = vpack.c.b16 %v881, %v880
      %v895 = vpack.c.b16 %v883, %v882
      %v896 = vpack.c.b16 %v885, %v884
      %v897 = vpack.c.b16 %v887, %v886
      %v918 = vunpack.c.l.b16 %v820
      %v919 = vunpack.c.l.b16 %v823
      %v920 = vunpack.c.l.b16 %v826
      %v921 = vunpack.c.l.b16 %v829
      %v922 = vunpack.c.l.b16 %v832
      %v923 = vunpack.c.l.b16 %v835
      %v924 = vunpack.c.l.b16 %v838
      %v925 = vunpack.c.l.b16 %v841
      %v926 = vunpack.c.l.b16 %v844
      %v927 = vunpack.c.l.b16 %v847
      %v928 = vpack.c.b16 %v918, %v918
      %v929 = vpack.c.b16 %v919, %v919
      %v930 = vpack.c.b16 %v920, %v920
      %v931 = vpack.c.b16 %v921, %v921
      %v932 = vpack.c.b16 %v922, %v922
      %v933 = vpack.c.b16 %v923, %v923
      %v934 = vpack.c.b16 %v924, %v924
      %v935 = vpack.c.b16 %v925, %v925
      %v936 = vpack.c.b16 %v926, %v926
      %v937 = vpack.c.b16 %v927, %v927
      %v939 = vshrl.u32 %v888, 16
      %v941 = vshll.u32 %v888, 16
      %v943 = vrot.slane %v941, 1
      %v944 = vor.u32 %v939, %v943
      %v946 = vshll.u32 %v928, 16
      %v948 = vrot.slane %v946, 1
      %v949 = vsel %vm597, %v944, %v948
      %v951 = vshrl.u32 %v889, 16
      %v953 = vshll.u32 %v889, 16
      %v955 = vrot.slane %v953, 1
      %v956 = vor.u32 %v951, %v955
      %v958 = vshll.u32 %v929, 16
      %v960 = vrot.slane %v958, 1
      %v961 = vsel %vm597, %v956, %v960
      %v963 = vshrl.u32 %v890, 16
      %v965 = vshll.u32 %v890, 16
      %v967 = vrot.slane %v965, 1
      %v968 = vor.u32 %v963, %v967
      %v970 = vshll.u32 %v930, 16
      %v972 = vrot.slane %v970, 1
      %v973 = vsel %vm597, %v968, %v972
      %v975 = vshrl.u32 %v891, 16
      %v977 = vshll.u32 %v891, 16
      %v979 = vrot.slane %v977, 1
      %v980 = vor.u32 %v975, %v979
      %v982 = vshll.u32 %v931, 16
      %v984 = vrot.slane %v982, 1
      %v985 = vsel %vm597, %v980, %v984
      %v987 = vshrl.u32 %v892, 16
      %v989 = vshll.u32 %v892, 16
      %v991 = vrot.slane %v989, 1
      %v992 = vor.u32 %v987, %v991
      %v994 = vshll.u32 %v932, 16
      %v996 = vrot.slane %v994, 1
      %v997 = vsel %vm597, %v992, %v996
      %v999 = vshrl.u32 %v893, 16
      %v1001 = vshll.u32 %v893, 16
      %v1003 = vrot.slane %v1001, 1
      %v1004 = vor.u32 %v999, %v1003
      %v1006 = vshll.u32 %v933, 16
      %v1008 = vrot.slane %v1006, 1
      %v1009 = vsel %vm597, %v1004, %v1008
      %v1011 = vshrl.u32 %v894, 16
      %v1013 = vshll.u32 %v894, 16
      %v1015 = vrot.slane %v1013, 1
      %v1016 = vor.u32 %v1011, %v1015
      %v1018 = vshll.u32 %v934, 16
      %v1020 = vrot.slane %v1018, 1
      %v1021 = vsel %vm597, %v1016, %v1020
      %v1023 = vshrl.u32 %v895, 16
      %v1025 = vshll.u32 %v895, 16
      %v1027 = vrot.slane %v1025, 1
      %v1028 = vor.u32 %v1023, %v1027
      %v1030 = vshll.u32 %v935, 16
      %v1032 = vrot.slane %v1030, 1
      %v1033 = vsel %vm597, %v1028, %v1032
      %v1035 = vshrl.u32 %v896, 16
      %v1037 = vshll.u32 %v896, 16
      %v1039 = vrot.slane %v1037, 1
      %v1040 = vor.u32 %v1035, %v1039
      %v1042 = vshll.u32 %v936, 16
      %v1044 = vrot.slane %v1042, 1
      %v1045 = vsel %vm597, %v1040, %v1044
      %v1047 = vshrl.u32 %v897, 16
      %v1049 = vshll.u32 %v897, 16
      %v1051 = vrot.slane %v1049, 1
      %v1052 = vor.u32 %v1047, %v1051
      %v1054 = vshll.u32 %v937, 16
      %v1056 = vrot.slane %v1054, 1
      %v1057 = vsel %vm597, %v1052, %v1056
      %v1068 = vrot.slane %v888, 1
      %v1069 = vrot.slane %v928, 1
      %v1070 = vsel %vm728, %v1068, %v1069
      %v1071 = vrot.slane %v889, 1
      %v1072 = vrot.slane %v929, 1
      %v1073 = vsel %vm728, %v1071, %v1072
      %v1074 = vrot.slane %v890, 1
      %v1075 = vrot.slane %v930, 1
      %v1076 = vsel %vm728, %v1074, %v1075
      %v1077 = vrot.slane %v891, 1
      %v1078 = vrot.slane %v931, 1
      %v1079 = vsel %vm728, %v1077, %v1078
      %v1080 = vrot.slane %v892, 1
      %v1081 = vrot.slane %v932, 1
      %v1082 = vsel %vm728, %v1080, %v1081
      %v1083 = vrot.slane %v893, 1
      %v1084 = vrot.slane %v933, 1
      %v1085 = vsel %vm728, %v1083, %v1084
      %v1086 = vrot.slane %v894, 1
      %v1087 = vrot.slane %v934, 1
      %v1088 = vsel %vm728, %v1086, %v1087
      %v1089 = vrot.slane %v895, 1
      %v1090 = vrot.slane %v935, 1
      %v1091 = vsel %vm728, %v1089, %v1090
      %v1092 = vrot.slane %v896, 1
      %v1093 = vrot.slane %v936, 1
      %v1094 = vsel %vm728, %v1092, %v1093
      %v1095 = vrot.slane %v897, 1
      %v1096 = vrot.slane %v937, 1
      %v1097 = vsel %vm728, %v1095, %v1096
      %s1108 = scalar_lea.vmem %s2, 192
      %v1109 = vld [vmem:[%s1108] sm:$0xf]
      %v1110 = vld [vmem:[%s1108 + $0x4] sm:$0xf]
      %v1111 = vld [vmem:[%s1108 + $0x8] sm:$0xf]
      %v1112 = vld [vmem:[%s1108 + $0xc] sm:$0xf]
      %v1113 = vld [vmem:[%s1108 + $0x10] sm:$0xf]
      %v1114 = vld [vmem:[%s1108 + $0x14] sm:$0xf]
      %v1115 = vld [vmem:[%s1108 + $0x18] sm:$0xf]
      %v1116 = vld [vmem:[%s1108 + $0x1c] sm:$0xf]
      %v1117 = vld [vmem:[%s1108 + $0x20] sm:$0xf]
      %v1118 = vld [vmem:[%s1108 + $0x24] sm:$0xf]
      %v1119 = vld [vmem:[%s1108 + $0x28] sm:$0xf]
      %v1120 = vld [vmem:[%s1108 + $0x2c] sm:$0xf]
      %v1121 = vld [vmem:[%s1108 + $0x30] sm:$0xf]
      %v1122 = vld [vmem:[%s1108 + $0x34] sm:$0xf]
      %v1123 = vld [vmem:[%s1108 + $0x38] sm:$0xf]
      %v1124 = vld [vmem:[%s1108 + $0x3c] sm:$0xf]
      %v1125 = vld [vmem:[%s1108 + $0x40] sm:$0xf]
      %v1126 = vld [vmem:[%s1108 + $0x44] sm:$0xf]
      %v1127 = vld [vmem:[%s1108 + $0x48] sm:$0xf]
      %v1128 = vld [vmem:[%s1108 + $0x4c] sm:$0xf]
      %v1129 = vld [vmem:[%s1108 + $0x50] sm:$0xf]
      %v1130 = vld [vmem:[%s1108 + $0x54] sm:$0xf]
      %v1131 = vld [vmem:[%s1108 + $0x58] sm:$0xf]
      %v1132 = vld [vmem:[%s1108 + $0x5c] sm:$0xf]
      %v1133 = vld [vmem:[%s1108 + $0x60] sm:$0xf]
      %v1134 = vld [vmem:[%s1108 + $0x64] sm:$0xf]
      %v1135 = vld [vmem:[%s1108 + $0x68] sm:$0xf]
      %v1136 = vld [vmem:[%s1108 + $0x6c] sm:$0xf]
      %v1137 = vld [vmem:[%s1108 + $0x70] sm:$0xf]
      %v1138 = vld [vmem:[%s1108 + $0x74] sm:$0xf]
      %v1139 = vld [vmem:[%s1108 + $0x78] sm:$0xf]
      %v1140 = vld [vmem:[%s1108 + $0x7c] sm:$0xf]
      %v1141 = vld [vmem:[%s1108 + $0x80] sm:$0xf]
      %v1142 = vld [vmem:[%s1108 + $0x84] sm:$0xf]
      %v1143 = vld [vmem:[%s1108 + $0x88] sm:$0xf]
      %v1144 = vld [vmem:[%s1108 + $0x8c] sm:$0xf]
      %v1145 = vld [vmem:[%s1108 + $0x90] sm:$0xf]
      %v1146 = vld [vmem:[%s1108 + $0x94] sm:$0xf]
      %v1147 = vld [vmem:[%s1108 + $0x98] sm:$0xf]
      %v1148 = vld [vmem:[%s1108 + $0x9c] sm:$0xf]
      %v1149 = vld [vmem:[%s1108 + $0xa0] sm:$0xf]
      %v1150 = vld [vmem:[%s1108 + $0xa4] sm:$0xf]
      %v1151 = vld [vmem:[%s1108 + $0xa8] sm:$0xf]
      %v1152 = vld [vmem:[%s1108 + $0xac] sm:$0xf]
      %v1153 = vld [vmem:[%s1108 + $0xb0] sm:$0xf]
      %v1154 = vld [vmem:[%s1108 + $0xb4] sm:$0xf]
      %v1155 = vld [vmem:[%s1108 + $0xb8] sm:$0xf]
      %v1156 = vld [vmem:[%s1108 + $0xbc] sm:$0xf]
      %v1205 = vunpack.c.l.b16 %v1109
      %v1206 = vunpack.c.l.b16 %v1110
      %v1207 = vunpack.c.l.b16 %v1111
      %v1208 = vunpack.c.l.b16 %v1112
      %v1209 = vunpack.c.l.b16 %v1113
      %v1210 = vunpack.c.l.b16 %v1114
      %v1211 = vunpack.c.l.b16 %v1115
      %v1212 = vunpack.c.l.b16 %v1116
      %v1213 = vunpack.c.l.b16 %v1117
      %v1214 = vunpack.c.l.b16 %v1118
      %v1215 = vunpack.c.l.b16 %v1119
      %v1216 = vunpack.c.l.b16 %v1120
      %v1217 = vunpack.c.l.b16 %v1121
      %v1218 = vunpack.c.l.b16 %v1122
      %v1219 = vunpack.c.l.b16 %v1123
      %v1220 = vunpack.c.l.b16 %v1124
      %v1221 = vunpack.c.l.b16 %v1125
      %v1222 = vunpack.c.l.b16 %v1126
      %v1223 = vunpack.c.l.b16 %v1127
      %v1224 = vunpack.c.l.b16 %v1128
      %v1225 = vunpack.c.l.b16 %v1129
      %v1226 = vunpack.c.l.b16 %v1130
      %v1227 = vunpack.c.l.b16 %v1131
      %v1228 = vunpack.c.l.b16 %v1132
      %v1229 = vunpack.c.l.b16 %v1133
      %v1230 = vunpack.c.l.b16 %v1134
      %v1231 = vunpack.c.l.b16 %v1135
      %v1232 = vunpack.c.l.b16 %v1136
      %v1233 = vunpack.c.l.b16 %v1137
      %v1234 = vunpack.c.l.b16 %v1138
      %v1235 = vunpack.c.l.b16 %v1139
      %v1236 = vunpack.c.l.b16 %v1140
      %v1237 = vunpack.c.l.b16 %v1141
      %v1238 = vunpack.c.l.b16 %v1142
      %v1239 = vunpack.c.l.b16 %v1143
      %v1240 = vunpack.c.l.b16 %v1144
      %v1241 = vunpack.c.l.b16 %v1145
      %v1242 = vunpack.c.l.b16 %v1146
      %v1243 = vunpack.c.l.b16 %v1147
      %v1244 = vunpack.c.l.b16 %v1148
      %v1245 = vunpack.c.l.b16 %v1149
      %v1246 = vunpack.c.l.b16 %v1150
      %v1247 = vunpack.c.l.b16 %v1151
      %v1248 = vunpack.c.l.b16 %v1152
      %v1249 = vunpack.c.l.b16 %v1153
      %v1250 = vunpack.c.l.b16 %v1154
      %v1251 = vunpack.c.l.b16 %v1155
      %v1252 = vunpack.c.l.b16 %v1156
      %v1253 = vpack.c.b16 %v1206, %v1205
      %v1254 = vpack.c.b16 %v1208, %v1207
      %v1255 = vpack.c.b16 %v1210, %v1209
      %v1256 = vpack.c.b16 %v1212, %v1211
      %v1257 = vpack.c.b16 %v1214, %v1213
      %v1258 = vpack.c.b16 %v1216, %v1215
      %v1259 = vpack.c.b16 %v1218, %v1217
      %v1260 = vpack.c.b16 %v1220, %v1219
      %v1261 = vpack.c.b16 %v1222, %v1221
      %v1262 = vpack.c.b16 %v1224, %v1223
      %v1263 = vpack.c.b16 %v1226, %v1225
      %v1264 = vpack.c.b16 %v1228, %v1227
      %v1265 = vpack.c.b16 %v1230, %v1229
      %v1266 = vpack.c.b16 %v1232, %v1231
      %v1267 = vpack.c.b16 %v1234, %v1233
      %v1268 = vpack.c.b16 %v1236, %v1235
      %v1269 = vpack.c.b16 %v1238, %v1237
      %v1270 = vpack.c.b16 %v1240, %v1239
      %v1271 = vpack.c.b16 %v1242, %v1241
      %v1272 = vpack.c.b16 %v1244, %v1243
      %v1273 = vpack.c.b16 %v1246, %v1245
      %v1274 = vpack.c.b16 %v1248, %v1247
      %v1275 = vpack.c.b16 %v1250, %v1249
      %v1276 = vpack.c.b16 %v1252, %v1251
      %1301 = vmatprep.subr.bf16.mxu0 0
      %1302 = vmatpush1.bf16.msra.mxu0 %v1253
      %1303 = vmatprep.subr.bf16.mxu0 0
      %1304 = vmatpush1.bf16.msra.mxu0 %v1254
      %1305 = vmatprep.subr.bf16.mxu0 0
      %1306 = vmatpush1.bf16.msra.mxu0 %v1255
      %1307 = vmatprep.subr.bf16.mxu0 0
      %1308 = vmatpush1.bf16.msra.mxu0 %v1256
      %1309 = vmatprep.subr.bf16.mxu0 0
      %1310 = vmatpush1.bf16.msra.mxu0 %v1257
      %1311 = vmatprep.subr.bf16.mxu0 0
      %1312 = vmatpush1.bf16.msra.mxu0 %v1258
      %1313 = vmatprep.subr.bf16.mxu0 0
      %1314 = vmatpush1.bf16.msra.mxu0 %v1259
      %1315 = vmatprep.subr.bf16.mxu0 0
      %1316 = vmatpush1.bf16.msra.mxu0 %v1260
      %1317 = vmatprep.subr.bf16.mxu0 0
      %1318 = vmatpush1.bf16.msra.mxu0 %v1261
      %1319 = vmatprep.subr.bf16.mxu0 0
      %1320 = vmatpush1.bf16.msra.mxu0 %v1262
      %1321 = vmatprep.subr.bf16.mxu0 0
      %1322 = vmatpush1.bf16.msra.mxu0 %v1263
      %1323 = vmatprep.subr.bf16.mxu0 0
      %1324 = vmatpush1.bf16.msra.mxu0 %v1264
      %1325 = vmatprep.subr.bf16.mxu0 0
      %1326 = vmatpush1.bf16.msra.mxu0 %v1265
      %1327 = vmatprep.subr.bf16.mxu0 0
      %1328 = vmatpush1.bf16.msra.mxu0 %v1266
      %1329 = vmatprep.subr.bf16.mxu0 0
      %1330 = vmatpush1.bf16.msra.mxu0 %v1267
      %1331 = vmatprep.subr.bf16.mxu0 0
      %1332 = vmatpush1.bf16.msra.mxu0 %v1268
      %1333 = vmatprep.mubr.bf16.mxu0 %v949
      %1334 = vmatmul.mubr.bf16.gmra.mrb[0].mxu0 %v888
      %v1335 = vpop.f32.mrb[0].mxu0
      %v1336 = vadd.f32 0.0, %v1335
      %v1337 = vpop.f32.mrb[0].mxu0
      %v1338 = vpop.f32.mrb[0].mxu0
      %v1339 = vadd.f32 0.0, %v1338
      %v1340 = vpop.f32.mrb[0].mxu0
      %1341 = vmatprep.mubr.bf16.mxu0 %v961
      %1342 = vmatmul.mubr.bf16.gmra.mrb[0].mxu0 %v889
      %v1343 = vpop.f32.mrb[0].mxu0
      %v1344 = vadd.f32 0.0, %v1343
      %v1345 = vpop.f32.mrb[0].mxu0
      %v1346 = vpop.f32.mrb[0].mxu0
      %v1347 = vadd.f32 0.0, %v1346
      %v1348 = vpop.f32.mrb[0].mxu0
      %1349 = vmatprep.mubr.bf16.mxu0 %v973
      %1350 = vmatmul.mubr.bf16.gmra.mrb[0].mxu0 %v890
      %v1351 = vpop.f32.mrb[0].mxu0
      %v1352 = vadd.f32 0.0, %v1351
      %v1353 = vpop.f32.mrb[0].mxu0
      %v1354 = vpop.f32.mrb[0].mxu0
      %v1355 = vadd.f32 0.0, %v1354
      %v1356 = vpop.f32.mrb[0].mxu0
      %1357 = vmatprep.mubr.bf16.mxu0 %v985
      %1358 = vmatmul.mubr.bf16.gmra.mrb[0].mxu0 %v891
      %v1359 = vpop.f32.mrb[0].mxu0
      %v1360 = vadd.f32 0.0, %v1359
      %v1361 = vpop.f32.mrb[0].mxu0
      %v1362 = vpop.f32.mrb[0].mxu0
      %v1363 = vadd.f32 0.0, %v1362
      %v1364 = vpop.f32.mrb[0].mxu0
      %1365 = vmatprep.mubr.bf16.mxu0 %v997
      %1366 = vmatmul.mubr.bf16.gmra.mrb[0].mxu0 %v892
      %v1367 = vpop.f32.mrb[0].mxu0
      %v1368 = vadd.f32 0.0, %v1367
      %v1369 = vpop.f32.mrb[0].mxu0
      %v1370 = vpop.f32.mrb[0].mxu0
      %v1371 = vadd.f32 0.0, %v1370
      %v1372 = vpop.f32.mrb[0].mxu0
      %1373 = vmatprep.mubr.bf16.mxu0 %v1009
      %1374 = vmatmul.mubr.bf16.gmra.mrb[0].mxu0 %v893
      %v1375 = vpop.f32.mrb[0].mxu0
      %v1376 = vadd.f32 0.0, %v1375
      %v1377 = vpop.f32.mrb[0].mxu0
      %v1378 = vpop.f32.mrb[0].mxu0
      %v1379 = vadd.f32 0.0, %v1378
      %v1380 = vpop.f32.mrb[0].mxu0
      %1381 = vmatprep.mubr.bf16.mxu0 %v1021
      %1382 = vmatmul.mubr.bf16.gmra.mrb[0].mxu0 %v894
      %v1383 = vpop.f32.mrb[0].mxu0
      %v1384 = vadd.f32 0.0, %v1383
      %v1385 = vpop.f32.mrb[0].mxu0
      %v1386 = vpop.f32.mrb[0].mxu0
      %v1387 = vadd.f32 0.0, %v1386
      %v1388 = vpop.f32.mrb[0].mxu0
      %1389 = vmatprep.mubr.bf16.mxu0 %v1033
      %1390 = vmatmul.mubr.bf16.gmra.mrb[0].mxu0 %v895
      %v1391 = vpop.f32.mrb[0].mxu0
      %v1392 = vadd.f32 0.0, %v1391
      %v1393 = vpop.f32.mrb[0].mxu0
      %v1394 = vpop.f32.mrb[0].mxu0
      %v1395 = vadd.f32 0.0, %v1394
      %v1396 = vpop.f32.mrb[0].mxu0
      %1397 = vmatprep.mubr.bf16.mxu0 %v1045
      %1398 = vmatmul.mubr.bf16.gmra.mrb[0].mxu0 %v896
      %v1399 = vpop.f32.mrb[0].mxu0
      %v1400 = vadd.f32 0.0, %v1399
      %v1401 = vpop.f32.mrb[0].mxu0
      %v1402 = vpop.f32.mrb[0].mxu0
      %v1403 = vadd.f32 0.0, %v1402
      %v1404 = vpop.f32.mrb[0].mxu0
      %1405 = vmatprep.mubr.bf16.mxu0 %v1057
      %1406 = vmatmul.mubr.bf16.gmra.mrb[0].mxu0 %v897
      %v1407 = vpop.f32.mrb[0].mxu0
      %v1408 = vadd.f32 0.0, %v1407
      %v1409 = vpop.f32.mrb[0].mxu0
      %v1410 = vpop.f32.mrb[0].mxu0
      %v1411 = vadd.f32 0.0, %v1410
      %v1412 = vpop.f32.mrb[0].mxu0
      %1413 = vdwg.mxu0
      %1414 = vmatprep.subr.bf16.mxu0 0
      %1415 = vmatpush1.bf16.msra.mxu0 %v1269
      %1416 = vmatprep.subr.bf16.mxu0 0
      %1417 = vmatpush1.bf16.msra.mxu0 %v1270
      %1418 = vmatprep.subr.bf16.mxu0 0
      %1419 = vmatpush1.bf16.msra.mxu0 %v1271
      %1420 = vmatprep.subr.bf16.mxu0 0
      %1421 = vmatpush1.bf16.msra.mxu0 %v1272
      %1422 = vmatprep.subr.bf16.mxu0 0
      %1423 = vmatpush1.bf16.msra.mxu0 %v1273
      %1424 = vmatprep.subr.bf16.mxu0 0
      %1425 = vmatpush1.bf16.msra.mxu0 %v1274
      %1426 = vmatprep.subr.bf16.mxu0 0
      %1427 = vmatpush1.bf16.msra.mxu0 %v1275
      %1428 = vmatprep.subr.bf16.mxu0 0
      %1429 = vmatpush1.bf16.msra.mxu0 %v1276
      %1430 = vmatprep.subr.bf16.mxu0 0
      %1431 = vmatpush1.bf16.msra.mxu0 0
      %1432 = vmatprep.subr.bf16.mxu0 0
      %1433 = vmatpush1.bf16.msra.mxu0 0
      %1434 = vmatprep.subr.bf16.mxu0 0
      %1435 = vmatpush1.bf16.msra.mxu0 0
      %1436 = vmatprep.subr.bf16.mxu0 0
      %1437 = vmatpush1.bf16.msra.mxu0 0
      %1438 = vmatprep.subr.bf16.mxu0 0
      %1439 = vmatpush1.bf16.msra.mxu0 0
      %1440 = vmatprep.subr.bf16.mxu0 0
      %1441 = vmatpush1.bf16.msra.mxu0 0
      %1442 = vmatprep.subr.bf16.mxu0 0
      %1443 = vmatpush1.bf16.msra.mxu0 0
      %1444 = vmatprep.subr.bf16.mxu0 0
      %1445 = vmatpush1.bf16.msra.mxu0 0
      %1446 = vmatprep.mubr.bf16.mxu0 0
      %1447 = vmatmul.mubr.bf16.gmra.mrb[0].mxu0 %v1070
      %v1448 = vpop.f32.mrb[0].mxu0
      %v1449 = vadd.f32 %v1336, %v1448
      %v1450 = vpop.f32.mrb[0].mxu0
      %v1451 = vpop.f32.mrb[0].mxu0
      %v1452 = vadd.f32 %v1339, %v1451
      %v1453 = vpop.f32.mrb[0].mxu0
      %1454 = vmatprep.mubr.bf16.mxu0 0
      %1455 = vmatmul.mubr.bf16.gmra.mrb[0].mxu0 %v1073
      %v1456 = vpop.f32.mrb[0].mxu0
      %v1457 = vadd.f32 %v1344, %v1456
      %v1458 = vpop.f32.mrb[0].mxu0
      %v1459 = vpop.f32.mrb[0].mxu0
      %v1460 = vadd.f32 %v1347, %v1459
      %v1461 = vpop.f32.mrb[0].mxu0
      %1462 = vmatprep.mubr.bf16.mxu0 0
      %1463 = vmatmul.mubr.bf16.gmra.mrb[0].mxu0 %v1076
      %v1464 = vpop.f32.mrb[0].mxu0
      %v1465 = vadd.f32 %v1352, %v1464
      %v1466 = vpop.f32.mrb[0].mxu0
      %v1467 = vpop.f32.mrb[0].mxu0
      %v1468 = vadd.f32 %v1355, %v1467
      %v1469 = vpop.f32.mrb[0].mxu0
      %1470 = vmatprep.mubr.bf16.mxu0 0
      %1471 = vmatmul.mubr.bf16.gmra.mrb[0].mxu0 %v1079
      %v1472 = vpop.f32.mrb[0].mxu0
      %v1473 = vadd.f32 %v1360, %v1472
      %v1474 = vpop.f32.mrb[0].mxu0
      %v1475 = vpop.f32.mrb[0].mxu0
      %v1476 = vadd.f32 %v1363, %v1475
      %v1477 = vpop.f32.mrb[0].mxu0
      %1478 = vmatprep.mubr.bf16.mxu0 0
      %1479 = vmatmul.mubr.bf16.gmra.mrb[0].mxu0 %v1082
      %v1480 = vpop.f32.mrb[0].mxu0
      %v1481 = vadd.f32 %v1368, %v1480
      %v1482 = vpop.f32.mrb[0].mxu0
      %v1483 = vpop.f32.mrb[0].mxu0
      %v1484 = vadd.f32 %v1371, %v1483
      %v1485 = vpop.f32.mrb[0].mxu0
      %1486 = vmatprep.mubr.bf16.mxu0 0
      %1487 = vmatmul.mubr.bf16.gmra.mrb[0].mxu0 %v1085
      %v1488 = vpop.f32.mrb[0].mxu0
      %v1489 = vadd.f32 %v1376, %v1488
      %v1490 = vpop.f32.mrb[0].mxu0
      %v1491 = vpop.f32.mrb[0].mxu0
      %v1492 = vadd.f32 %v1379, %v1491
      %v1493 = vpop.f32.mrb[0].mxu0
      %1494 = vmatprep.mubr.bf16.mxu0 0
      %1495 = vmatmul.mubr.bf16.gmra.mrb[0].mxu0 %v1088
      %v1496 = vpop.f32.mrb[0].mxu0
      %v1497 = vadd.f32 %v1384, %v1496
      %v1498 = vpop.f32.mrb[0].mxu0
      %v1499 = vpop.f32.mrb[0].mxu0
      %v1500 = vadd.f32 %v1387, %v1499
      %v1501 = vpop.f32.mrb[0].mxu0
      %1502 = vmatprep.mubr.bf16.mxu0 0
      %1503 = vmatmul.mubr.bf16.gmra.mrb[0].mxu0 %v1091
      %v1504 = vpop.f32.mrb[0].mxu0
      %v1505 = vadd.f32 %v1392, %v1504
      %v1506 = vpop.f32.mrb[0].mxu0
      %v1507 = vpop.f32.mrb[0].mxu0
      %v1508 = vadd.f32 %v1395, %v1507
      %v1509 = vpop.f32.mrb[0].mxu0
      %1510 = vmatprep.mubr.bf16.mxu0 0
      %1511 = vmatmul.mubr.bf16.gmra.mrb[0].mxu0 %v1094
      %v1512 = vpop.f32.mrb[0].mxu0
      %v1513 = vadd.f32 %v1400, %v1512
      %v1514 = vpop.f32.mrb[0].mxu0
      %v1515 = vpop.f32.mrb[0].mxu0
      %v1516 = vadd.f32 %v1403, %v1515
      %v1517 = vpop.f32.mrb[0].mxu0
      %1518 = vmatprep.mubr.bf16.mxu0 0
      %1519 = vmatmul.mubr.bf16.gmra.mrb[0].mxu0 %v1097
      %v1520 = vpop.f32.mrb[0].mxu0
      %v1521 = vadd.f32 %v1408, %v1520
      %v1522 = vpop.f32.mrb[0].mxu0
      %v1523 = vpop.f32.mrb[0].mxu0
      %v1524 = vadd.f32 %v1411, %v1523
      %v1525 = vpop.f32.mrb[0].mxu0
      %1526 = vdwg.mxu0
      %v1575 = vunpack.c.l.b16 %v769
      %v1576 = vunpack.c.l.b16 %v770
      %v1577 = vunpack.c.l.b16 %v771
      %v1578 = vunpack.c.l.b16 %v772
      %v1579 = vunpack.c.l.b16 %v773
      %v1580 = vunpack.c.l.b16 %v774
      %v1581 = vunpack.c.l.b16 %v775
      %v1582 = vunpack.c.l.b16 %v776
      %v1583 = vunpack.c.l.b16 %v777
      %v1584 = vunpack.c.l.b16 %v778
      %v1585 = vunpack.c.l.b16 %v779
      %v1586 = vunpack.c.l.b16 %v780
      %v1587 = vunpack.c.l.b16 %v781
      %v1588 = vunpack.c.l.b16 %v782
      %v1589 = vunpack.c.l.b16 %v783
      %v1590 = vunpack.c.l.b16 %v784
      %v1591 = vunpack.c.l.b16 %v785
      %v1592 = vunpack.c.l.b16 %v786
      %v1593 = vunpack.c.l.b16 %v787
      %v1594 = vunpack.c.l.b16 %v788
      %v1595 = vunpack.c.l.b16 %v789
      %v1596 = vunpack.c.l.b16 %v790
      %v1597 = vunpack.c.l.b16 %v791
      %v1598 = vunpack.c.l.b16 %v792
      %v1599 = vunpack.c.l.b16 %v793
      %v1600 = vunpack.c.l.b16 %v794
      %v1601 = vunpack.c.l.b16 %v795
      %v1602 = vunpack.c.l.b16 %v796
      %v1603 = vunpack.c.l.b16 %v797
      %v1604 = vunpack.c.l.b16 %v798
      %v1605 = vunpack.c.l.b16 %v799
      %v1606 = vunpack.c.l.b16 %v800
      %v1607 = vunpack.c.l.b16 %v801
      %v1608 = vunpack.c.l.b16 %v802
      %v1609 = vunpack.c.l.b16 %v803
      %v1610 = vunpack.c.l.b16 %v804
      %v1611 = vunpack.c.l.b16 %v805
      %v1612 = vunpack.c.l.b16 %v806
      %v1613 = vunpack.c.l.b16 %v807
      %v1614 = vunpack.c.l.b16 %v808
      %v1615 = vunpack.c.l.b16 %v809
      %v1616 = vunpack.c.l.b16 %v810
      %v1617 = vunpack.c.l.b16 %v811
      %v1618 = vunpack.c.l.b16 %v812
      %v1619 = vunpack.c.l.b16 %v813
      %v1620 = vunpack.c.l.b16 %v814
      %v1621 = vunpack.c.l.b16 %v815
      %v1622 = vunpack.c.l.b16 %v816
      %v1623 = vpack.c.b16 %v1576, %v1575
      %v1624 = vpack.c.b16 %v1578, %v1577
      %v1625 = vpack.c.b16 %v1580, %v1579
      %v1626 = vpack.c.b16 %v1582, %v1581
      %v1627 = vpack.c.b16 %v1584, %v1583
      %v1628 = vpack.c.b16 %v1586, %v1585
      %v1629 = vpack.c.b16 %v1588, %v1587
      %v1630 = vpack.c.b16 %v1590, %v1589
      %v1631 = vpack.c.b16 %v1592, %v1591
      %v1632 = vpack.c.b16 %v1594, %v1593
      %v1633 = vpack.c.b16 %v1596, %v1595
      %v1634 = vpack.c.b16 %v1598, %v1597
      %v1635 = vpack.c.b16 %v1600, %v1599
      %v1636 = vpack.c.b16 %v1602, %v1601
      %v1637 = vpack.c.b16 %v1604, %v1603
      %v1638 = vpack.c.b16 %v1606, %v1605
      %v1639 = vpack.c.b16 %v1608, %v1607
      %v1640 = vpack.c.b16 %v1610, %v1609
      %v1641 = vpack.c.b16 %v1612, %v1611
      %v1642 = vpack.c.b16 %v1614, %v1613
      %v1643 = vpack.c.b16 %v1616, %v1615
      %v1644 = vpack.c.b16 %v1618, %v1617
      %v1645 = vpack.c.b16 %v1620, %v1619
      %v1646 = vpack.c.b16 %v1622, %v1621
      %1671 = vmatprep.subr.bf16.mxu0 0
      %1672 = vmatpush1.bf16.msra.mxu0 %v1623
      %1673 = vmatprep.subr.bf16.mxu0 0
      %1674 = vmatpush1.bf16.msra.mxu0 %v1624
      %1675 = vmatprep.subr.bf16.mxu0 0
      %1676 = vmatpush1.bf16.msra.mxu0 %v1625
      %1677 = vmatprep.subr.bf16.mxu0 0
      %1678 = vmatpush1.bf16.msra.mxu0 %v1626
      %1679 = vmatprep.subr.bf16.mxu0 0
      %1680 = vmatpush1.bf16.msra.mxu0 %v1627
      %1681 = vmatprep.subr.bf16.mxu0 0
      %1682 = vmatpush1.bf16.msra.mxu0 %v1628
      %1683 = vmatprep.subr.bf16.mxu0 0
      %1684 = vmatpush1.bf16.msra.mxu0 %v1629
      %1685 = vmatprep.subr.bf16.mxu0 0
      %1686 = vmatpush1.bf16.msra.mxu0 %v1630
      %1687 = vmatprep.subr.bf16.mxu0 0
      %1688 = vmatpush1.bf16.msra.mxu0 %v1631
      %1689 = vmatprep.subr.bf16.mxu0 0
      %1690 = vmatpush1.bf16.msra.mxu0 %v1632
      %1691 = vmatprep.subr.bf16.mxu0 0
      %1692 = vmatpush1.bf16.msra.mxu0 %v1633
      %1693 = vmatprep.subr.bf16.mxu0 0
      %1694 = vmatpush1.bf16.msra.mxu0 %v1634
      %1695 = vmatprep.subr.bf16.mxu0 0
      %1696 = vmatpush1.bf16.msra.mxu0 %v1635
      %1697 = vmatprep.subr.bf16.mxu0 0
      %1698 = vmatpush1.bf16.msra.mxu0 %v1636
      %1699 = vmatprep.subr.bf16.mxu0 0
      %1700 = vmatpush1.bf16.msra.mxu0 %v1637
      %1701 = vmatprep.subr.bf16.mxu0 0
      %1702 = vmatpush1.bf16.msra.mxu0 %v1638
      %1703 = vmatprep.mubr.bf16.mxu0 %v609
      %1704 = vmatmul.mubr.bf16.gmra.mrb[0].mxu0 %v547
      %v1705 = vpop.f32.mrb[0].mxu0
      %v1706 = vadd.f32 %v1449, %v1705
      %v1707 = vpop.f32.mrb[0].mxu0
      %v1708 = vpop.f32.mrb[0].mxu0
      %v1709 = vadd.f32 %v1452, %v1708
      %v1710 = vpop.f32.mrb[0].mxu0
      %1711 = vmatprep.mubr.bf16.mxu0 %v621
      %1712 = vmatmul.mubr.bf16.gmra.mrb[0].mxu0 %v548
      %v1713 = vpop.f32.mrb[0].mxu0
      %v1714 = vadd.f32 %v1457, %v1713
      %v1715 = vpop.f32.mrb[0].mxu0
      %v1716 = vpop.f32.mrb[0].mxu0
      %v1717 = vadd.f32 %v1460, %v1716
      %v1718 = vpop.f32.mrb[0].mxu0
      %1719 = vmatprep.mubr.bf16.mxu0 %v633
      %1720 = vmatmul.mubr.bf16.gmra.mrb[0].mxu0 %v549
      %v1721 = vpop.f32.mrb[0].mxu0
      %v1722 = vadd.f32 %v1465, %v1721
      %v1723 = vpop.f32.mrb[0].mxu0
      %v1724 = vpop.f32.mrb[0].mxu0
      %v1725 = vadd.f32 %v1468, %v1724
      %v1726 = vpop.f32.mrb[0].mxu0
      %1727 = vmatprep.mubr.bf16.mxu0 %v645
      %1728 = vmatmul.mubr.bf16.gmra.mrb[0].mxu0 %v550
      %v1729 = vpop.f32.mrb[0].mxu0
      %v1730 = vadd.f32 %v1473, %v1729
      %v1731 = vpop.f32.mrb[0].mxu0
      %v1732 = vpop.f32.mrb[0].mxu0
      %v1733 = vadd.f32 %v1476, %v1732
      %v1734 = vpop.f32.mrb[0].mxu0
      %1735 = vmatprep.mubr.bf16.mxu0 %v657
      %1736 = vmatmul.mubr.bf16.gmra.mrb[0].mxu0 %v551
      %v1737 = vpop.f32.mrb[0].mxu0
      %v1738 = vadd.f32 %v1481, %v1737
      %v1739 = vpop.f32.mrb[0].mxu0
      %v1740 = vpop.f32.mrb[0].mxu0
      %v1741 = vadd.f32 %v1484, %v1740
      %v1742 = vpop.f32.mrb[0].mxu0
      %1743 = vmatprep.mubr.bf16.mxu0 %v669
      %1744 = vmatmul.mubr.bf16.gmra.mrb[0].mxu0 %v552
      %v1745 = vpop.f32.mrb[0].mxu0
      %v1746 = vadd.f32 %v1489, %v1745
      %v1747 = vpop.f32.mrb[0].mxu0
      %v1748 = vpop.f32.mrb[0].mxu0
      %v1749 = vadd.f32 %v1492, %v1748
      %v1750 = vpop.f32.mrb[0].mxu0
      %1751 = vmatprep.mubr.bf16.mxu0 %v681
      %1752 = vmatmul.mubr.bf16.gmra.mrb[0].mxu0 %v553
      %v1753 = vpop.f32.mrb[0].mxu0
      %v1754 = vadd.f32 %v1497, %v1753
      %v1755 = vpop.f32.mrb[0].mxu0
      %v1756 = vpop.f32.mrb[0].mxu0
      %v1757 = vadd.f32 %v1500, %v1756
      %v1758 = vpop.f32.mrb[0].mxu0
      %1759 = vmatprep.mubr.bf16.mxu0 %v693
      %1760 = vmatmul.mubr.bf16.gmra.mrb[0].mxu0 %v554
      %v1761 = vpop.f32.mrb[0].mxu0
      %v1762 = vadd.f32 %v1505, %v1761
      %v1763 = vpop.f32.mrb[0].mxu0
      %v1764 = vpop.f32.mrb[0].mxu0
      %v1765 = vadd.f32 %v1508, %v1764
      %v1766 = vpop.f32.mrb[0].mxu0
      %1767 = vmatprep.mubr.bf16.mxu0 %v705
      %1768 = vmatmul.mubr.bf16.gmra.mrb[0].mxu0 %v555
      %v1769 = vpop.f32.mrb[0].mxu0
      %v1770 = vadd.f32 %v1513, %v1769
      %v1771 = vpop.f32.mrb[0].mxu0
      %v1772 = vpop.f32.mrb[0].mxu0
      %v1773 = vadd.f32 %v1516, %v1772
      %v1774 = vpop.f32.mrb[0].mxu0
      %1775 = vmatprep.mubr.bf16.mxu0 %v717
      %1776 = vmatmul.mubr.bf16.gmra.mrb[0].mxu0 %v556
      %v1777 = vpop.f32.mrb[0].mxu0
      %v1778 = vadd.f32 %v1521, %v1777
      %v1779 = vpop.f32.mrb[0].mxu0
      %v1780 = vpop.f32.mrb[0].mxu0
      %v1781 = vadd.f32 %v1524, %v1780
      %v1782 = vpop.f32.mrb[0].mxu0
      %1783 = vdwg.mxu0
      %1784 = vmatprep.subr.bf16.mxu0 0
      %1785 = vmatpush1.bf16.msra.mxu0 %v1639
      %1786 = vmatprep.subr.bf16.mxu0 0
      %1787 = vmatpush1.bf16.msra.mxu0 %v1640
      %1788 = vmatprep.subr.bf16.mxu0 0
      %1789 = vmatpush1.bf16.msra.mxu0 %v1641
      %1790 = vmatprep.subr.bf16.mxu0 0
      %1791 = vmatpush1.bf16.msra.mxu0 %v1642
      %1792 = vmatprep.subr.bf16.mxu0 0
      %1793 = vmatpush1.bf16.msra.mxu0 %v1643
      %1794 = vmatprep.subr.bf16.mxu0 0
      %1795 = vmatpush1.bf16.msra.mxu0 %v1644
      %1796 = vmatprep.subr.bf16.mxu0 0
      %1797 = vmatpush1.bf16.msra.mxu0 %v1645
      %1798 = vmatprep.subr.bf16.mxu0 0
      %1799 = vmatpush1.bf16.msra.mxu0 %v1646
      %1800 = vmatprep.subr.bf16.mxu0 0
      %1801 = vmatpush1.bf16.msra.mxu0 0
      %1802 = vmatprep.subr.bf16.mxu0 0
      %1803 = vmatpush1.bf16.msra.mxu0 0
      %1804 = vmatprep.subr.bf16.mxu0 0
      %1805 = vmatpush1.bf16.msra.mxu0 0
      %1806 = vmatprep.subr.bf16.mxu0 0
      %1807 = vmatpush1.bf16.msra.mxu0 0
      %1808 = vmatprep.subr.bf16.mxu0 0
      %1809 = vmatpush1.bf16.msra.mxu0 0
      %1810 = vmatprep.subr.bf16.mxu0 0
      %1811 = vmatpush1.bf16.msra.mxu0 0
      %1812 = vmatprep.subr.bf16.mxu0 0
      %1813 = vmatpush1.bf16.msra.mxu0 0
      %1814 = vmatprep.subr.bf16.mxu0 0
      %1815 = vmatpush1.bf16.msra.mxu0 0
      %1816 = vmatprep.mubr.bf16.mxu0 0
      %1817 = vmatmul.mubr.bf16.gmra.mrb[0].mxu0 %v731
      %v1818 = vpop.f32.mrb[0].mxu0
      %v1819 = vadd.f32 %v1706, %v1818
      %v1820 = vpop.f32.mrb[0].mxu0
      %v1821 = vpop.f32.mrb[0].mxu0
      %v1822 = vadd.f32 %v1709, %v1821
      %v1823 = vpop.f32.mrb[0].mxu0
      %1824 = vmatprep.mubr.bf16.mxu0 0
      %1825 = vmatmul.mubr.bf16.gmra.mrb[0].mxu0 %v734
      %v1826 = vpop.f32.mrb[0].mxu0
      %v1827 = vadd.f32 %v1714, %v1826
      %v1828 = vpop.f32.mrb[0].mxu0
      %v1829 = vpop.f32.mrb[0].mxu0
      %v1830 = vadd.f32 %v1717, %v1829
      %v1831 = vpop.f32.mrb[0].mxu0
      %1832 = vmatprep.mubr.bf16.mxu0 0
      %1833 = vmatmul.mubr.bf16.gmra.mrb[0].mxu0 %v737
      %v1834 = vpop.f32.mrb[0].mxu0
      %v1835 = vadd.f32 %v1722, %v1834
      %v1836 = vpop.f32.mrb[0].mxu0
      %v1837 = vpop.f32.mrb[0].mxu0
      %v1838 = vadd.f32 %v1725, %v1837
      %v1839 = vpop.f32.mrb[0].mxu0
      %1840 = vmatprep.mubr.bf16.mxu0 0
      %1841 = vmatmul.mubr.bf16.gmra.mrb[0].mxu0 %v740
      %v1842 = vpop.f32.mrb[0].mxu0
      %v1843 = vadd.f32 %v1730, %v1842
      %v1844 = vpop.f32.mrb[0].mxu0
      %v1845 = vpop.f32.mrb[0].mxu0
      %v1846 = vadd.f32 %v1733, %v1845
      %v1847 = vpop.f32.mrb[0].mxu0
      %1848 = vmatprep.mubr.bf16.mxu0 0
      %1849 = vmatmul.mubr.bf16.gmra.mrb[0].mxu0 %v743
      %v1850 = vpop.f32.mrb[0].mxu0
      %v1851 = vadd.f32 %v1738, %v1850
      %v1852 = vpop.f32.mrb[0].mxu0
      %v1853 = vpop.f32.mrb[0].mxu0
      %v1854 = vadd.f32 %v1741, %v1853
      %v1855 = vpop.f32.mrb[0].mxu0
      %1856 = vmatprep.mubr.bf16.mxu0 0
      %1857 = vmatmul.mubr.bf16.gmra.mrb[0].mxu0 %v746
      %v1858 = vpop.f32.mrb[0].mxu0
      %v1859 = vadd.f32 %v1746, %v1858
      %v1860 = vpop.f32.mrb[0].mxu0
      %v1861 = vpop.f32.mrb[0].mxu0
      %v1862 = vadd.f32 %v1749, %v1861
      %v1863 = vpop.f32.mrb[0].mxu0
      %1864 = vmatprep.mubr.bf16.mxu0 0
      %1865 = vmatmul.mubr.bf16.gmra.mrb[0].mxu0 %v749
      %v1866 = vpop.f32.mrb[0].mxu0
      %v1867 = vadd.f32 %v1754, %v1866
      %v1868 = vpop.f32.mrb[0].mxu0
      %v1869 = vpop.f32.mrb[0].mxu0
      %v1870 = vadd.f32 %v1757, %v1869
      %v1871 = vpop.f32.mrb[0].mxu0
      %1872 = vmatprep.mubr.bf16.mxu0 0
      %1873 = vmatmul.mubr.bf16.gmra.mrb[0].mxu0 %v752
      %v1874 = vpop.f32.mrb[0].mxu0
      %v1875 = vadd.f32 %v1762, %v1874
      %v1876 = vpop.f32.mrb[0].mxu0
      %v1877 = vpop.f32.mrb[0].mxu0
      %v1878 = vadd.f32 %v1765, %v1877
      %v1879 = vpop.f32.mrb[0].mxu0
      %1880 = vmatprep.mubr.bf16.mxu0 0
      %1881 = vmatmul.mubr.bf16.gmra.mrb[0].mxu0 %v755
      %v1882 = vpop.f32.mrb[0].mxu0
      %v1883 = vadd.f32 %v1770, %v1882
      %v1884 = vpop.f32.mrb[0].mxu0
      %v1885 = vpop.f32.mrb[0].mxu0
      %v1886 = vadd.f32 %v1773, %v1885
      %v1887 = vpop.f32.mrb[0].mxu0
      %1888 = vmatprep.mubr.bf16.mxu0 0
      %1889 = vmatmul.mubr.bf16.gmra.mrb[0].mxu0 %v758
      %v1890 = vpop.f32.mrb[0].mxu0
      %v1891 = vadd.f32 %v1778, %v1890
      %v1892 = vpop.f32.mrb[0].mxu0
      %v1893 = vpop.f32.mrb[0].mxu0
      %v1894 = vadd.f32 %v1781, %v1893
      %v1895 = vpop.f32.mrb[0].mxu0
      %1896 = vdwg.mxu0
      %s1897 = scalar_lea.vmem [#allocation2], 24
      %v1898 = vld [vmem:[%s1897] sm:$0xf]
      %v1899 = vld [vmem:[%s1897 + $0x4] sm:$0xf]
      %v1900 = vld [vmem:[%s1897 + $0x8] sm:$0x1]
      %v1901 = vld [vmem:[%s1897 + $0xc] sm:$0xf]
      %v1902 = vld [vmem:[%s1897 + $0x10] sm:$0xf]
      %v1903 = vld [vmem:[%s1897 + $0x14] sm:$0x1]
      %v1904 = vld [vmem:[%s1897 + $0x18] sm:$0xf]
      %v1905 = vld [vmem:[%s1897 + $0x1c] sm:$0xf]
      %v1906 = vld [vmem:[%s1897 + $0x20] sm:$0x1]
      %v1907 = vld [vmem:[%s1897 + $0x24] sm:$0xf]
      %v1908 = vld [vmem:[%s1897 + $0x28] sm:$0xf]
      %v1909 = vld [vmem:[%s1897 + $0x2c] sm:$0x1]
      %v1910 = vld [vmem:[%s1897 + $0x30] sm:$0xf]
      %v1911 = vld [vmem:[%s1897 + $0x34] sm:$0xf]
      %v1912 = vld [vmem:[%s1897 + $0x38] sm:$0x1]
      %v1913 = vld [vmem:[%s1897 + $0x3c] sm:$0xf]
      %v1914 = vld [vmem:[%s1897 + $0x40] sm:$0xf]
      %v1915 = vld [vmem:[%s1897 + $0x44] sm:$0x1]
      %v1916 = vld [vmem:[%s1897 + $0x48] sm:$0xf]
      %v1917 = vld [vmem:[%s1897 + $0x4c] sm:$0xf]
      %v1918 = vld [vmem:[%s1897 + $0x50] sm:$0x1]
      %v1919 = vld [vmem:[%s1897 + $0x54] sm:$0xf]
      %v1920 = vld [vmem:[%s1897 + $0x58] sm:$0xf]
      %v1921 = vld [vmem:[%s1897 + $0x5c] sm:$0x1]
      %v1922 = vld [vmem:[%s1897 + $0x60] sm:$0xf]
      %v1923 = vld [vmem:[%s1897 + $0x64] sm:$0xf]
      %v1924 = vld [vmem:[%s1897 + $0x68] sm:$0x1]
      %v1925 = vld [vmem:[%s1897 + $0x6c] sm:$0xf]
      %v1926 = vld [vmem:[%s1897 + $0x70] sm:$0xf]
      %v1927 = vld [vmem:[%s1897 + $0x74] sm:$0x1]
      %v1948 = vunpack.c.l.b16 %v1898
      %v1949 = vunpack.c.l.b16 %v1899
      %v1950 = vunpack.c.l.b16 %v1901
      %v1951 = vunpack.c.l.b16 %v1902
      %v1952 = vunpack.c.l.b16 %v1904
      %v1953 = vunpack.c.l.b16 %v1905
      %v1954 = vunpack.c.l.b16 %v1907
      %v1955 = vunpack.c.l.b16 %v1908
      %v1956 = vunpack.c.l.b16 %v1910
      %v1957 = vunpack.c.l.b16 %v1911
      %v1958 = vunpack.c.l.b16 %v1913
      %v1959 = vunpack.c.l.b16 %v1914
      %v1960 = vunpack.c.l.b16 %v1916
      %v1961 = vunpack.c.l.b16 %v1917
      %v1962 = vunpack.c.l.b16 %v1919
      %v1963 = vunpack.c.l.b16 %v1920
      %v1964 = vunpack.c.l.b16 %v1922
      %v1965 = vunpack.c.l.b16 %v1923
      %v1966 = vunpack.c.l.b16 %v1925
      %v1967 = vunpack.c.l.b16 %v1926
      %v1968 = vpack.c.b16 %v1949, %v1948
      %v1969 = vpack.c.b16 %v1951, %v1950
      %v1970 = vpack.c.b16 %v1953, %v1952
      %v1971 = vpack.c.b16 %v1955, %v1954
      %v1972 = vpack.c.b16 %v1957, %v1956
      %v1973 = vpack.c.b16 %v1959, %v1958
      %v1974 = vpack.c.b16 %v1961, %v1960
      %v1975 = vpack.c.b16 %v1963, %v1962
      %v1976 = vpack.c.b16 %v1965, %v1964
      %v1977 = vpack.c.b16 %v1967, %v1966
      %v1998 = vunpack.c.l.b16 %v1900
      %v1999 = vunpack.c.l.b16 %v1903
      %v2000 = vunpack.c.l.b16 %v1906
      %v2001 = vunpack.c.l.b16 %v1909
      %v2002 = vunpack.c.l.b16 %v1912
      %v2003 = vunpack.c.l.b16 %v1915
      %v2004 = vunpack.c.l.b16 %v1918
      %v2005 = vunpack.c.l.b16 %v1921
      %v2006 = vunpack.c.l.b16 %v1924
      %v2007 = vunpack.c.l.b16 %v1927
      %v2008 = vpack.c.b16 %v1998, %v1998
      %v2009 = vpack.c.b16 %v1999, %v1999
      %v2010 = vpack.c.b16 %v2000, %v2000
      %v2011 = vpack.c.b16 %v2001, %v2001
      %v2012 = vpack.c.b16 %v2002, %v2002
      %v2013 = vpack.c.b16 %v2003, %v2003
      %v2014 = vpack.c.b16 %v2004, %v2004
      %v2015 = vpack.c.b16 %v2005, %v2005
      %v2016 = vpack.c.b16 %v2006, %v2006
      %v2017 = vpack.c.b16 %v2007, %v2007
      %v2019 = vshrl.u32 %v1968, 16
      %v2021 = vshll.u32 %v1968, 16
      %v2023 = vrot.slane %v2021, 1
      %v2024 = vor.u32 %v2019, %v2023
      %v2026 = vshll.u32 %v2008, 16
      %v2028 = vrot.slane %v2026, 1
      %v2029 = vsel %vm597, %v2024, %v2028
      %v2031 = vshrl.u32 %v1969, 16
      %v2033 = vshll.u32 %v1969, 16
      %v2035 = vrot.slane %v2033, 1
      %v2036 = vor.u32 %v2031, %v2035
      %v2038 = vshll.u32 %v2009, 16
      %v2040 = vrot.slane %v2038, 1
      %v2041 = vsel %vm597, %v2036, %v2040
      %v2043 = vshrl.u32 %v1970, 16
      %v2045 = vshll.u32 %v1970, 16
      %v2047 = vrot.slane %v2045, 1
      %v2048 = vor.u32 %v2043, %v2047
      %v2050 = vshll.u32 %v2010, 16
      %v2052 = vrot.slane %v2050, 1
      %v2053 = vsel %vm597, %v2048, %v2052
      %v2055 = vshrl.u32 %v1971, 16
      %v2057 = vshll.u32 %v1971, 16
      %v2059 = vrot.slane %v2057, 1
      %v2060 = vor.u32 %v2055, %v2059
      %v2062 = vshll.u32 %v2011, 16
      %v2064 = vrot.slane %v2062, 1
      %v2065 = vsel %vm597, %v2060, %v2064
      %v2067 = vshrl.u32 %v1972, 16
      %v2069 = vshll.u32 %v1972, 16
      %v2071 = vrot.slane %v2069, 1
      %v2072 = vor.u32 %v2067, %v2071
      %v2074 = vshll.u32 %v2012, 16
      %v2076 = vrot.slane %v2074, 1
      %v2077 = vsel %vm597, %v2072, %v2076
      %v2079 = vshrl.u32 %v1973, 16
      %v2081 = vshll.u32 %v1973, 16
      %v2083 = vrot.slane %v2081, 1
      %v2084 = vor.u32 %v2079, %v2083
      %v2086 = vshll.u32 %v2013, 16
      %v2088 = vrot.slane %v2086, 1
      %v2089 = vsel %vm597, %v2084, %v2088
      %v2091 = vshrl.u32 %v1974, 16
      %v2093 = vshll.u32 %v1974, 16
      %v2095 = vrot.slane %v2093, 1
      %v2096 = vor.u32 %v2091, %v2095
      %v2098 = vshll.u32 %v2014, 16
      %v2100 = vrot.slane %v2098, 1
      %v2101 = vsel %vm597, %v2096, %v2100
      %v2103 = vshrl.u32 %v1975, 16
      %v2105 = vshll.u32 %v1975, 16
      %v2107 = vrot.slane %v2105, 1
      %v2108 = vor.u32 %v2103, %v2107
      %v2110 = vshll.u32 %v2015, 16
      %v2112 = vrot.slane %v2110, 1
      %v2113 = vsel %vm597, %v2108, %v2112
      %v2115 = vshrl.u32 %v1976, 16
      %v2117 = vshll.u32 %v1976, 16
      %v2119 = vrot.slane %v2117, 1
      %v2120 = vor.u32 %v2115, %v2119
      %v2122 = vshll.u32 %v2016, 16
      %v2124 = vrot.slane %v2122, 1
      %v2125 = vsel %vm597, %v2120, %v2124
      %v2127 = vshrl.u32 %v1977, 16
      %v2129 = vshll.u32 %v1977, 16
      %v2131 = vrot.slane %v2129, 1
      %v2132 = vor.u32 %v2127, %v2131
      %v2134 = vshll.u32 %v2017, 16
      %v2136 = vrot.slane %v2134, 1
      %v2137 = vsel %vm597, %v2132, %v2136
      %v2148 = vrot.slane %v1968, 1
      %v2149 = vrot.slane %v2008, 1
      %v2150 = vsel %vm728, %v2148, %v2149
      %v2151 = vrot.slane %v1969, 1
      %v2152 = vrot.slane %v2009, 1
      %v2153 = vsel %vm728, %v2151, %v2152
      %v2154 = vrot.slane %v1970, 1
      %v2155 = vrot.slane %v2010, 1
      %v2156 = vsel %vm728, %v2154, %v2155
      %v2157 = vrot.slane %v1971, 1
      %v2158 = vrot.slane %v2011, 1
      %v2159 = vsel %vm728, %v2157, %v2158
      %v2160 = vrot.slane %v1972, 1
      %v2161 = vrot.slane %v2012, 1
      %v2162 = vsel %vm728, %v2160, %v2161
      %v2163 = vrot.slane %v1973, 1
      %v2164 = vrot.slane %v2013, 1
      %v2165 = vsel %vm728, %v2163, %v2164
      %v2166 = vrot.slane %v1974, 1
      %v2167 = vrot.slane %v2014, 1
      %v2168 = vsel %vm728, %v2166, %v2167
      %v2169 = vrot.slane %v1975, 1
      %v2170 = vrot.slane %v2015, 1
      %v2171 = vsel %vm728, %v2169, %v2170
      %v2172 = vrot.slane %v1976, 1
      %v2173 = vrot.slane %v2016, 1
      %v2174 = vsel %vm728, %v2172, %v2173
      %v2175 = vrot.slane %v1977, 1
      %v2176 = vrot.slane %v2017, 1
      %v2177 = vsel %vm728, %v2175, %v2176
      %s2188 = scalar_lea.vmem %s2, 384
      %v2189 = vld [vmem:[%s2188] sm:$0xf]
      %v2190 = vld [vmem:[%s2188 + $0x4] sm:$0xf]
      %v2191 = vld [vmem:[%s2188 + $0x8] sm:$0xf]
      %v2192 = vld [vmem:[%s2188 + $0xc] sm:$0xf]
      %v2193 = vld [vmem:[%s2188 + $0x10] sm:$0xf]
      %v2194 = vld [vmem:[%s2188 + $0x14] sm:$0xf]
      %v2195 = vld [vmem:[%s2188 + $0x18] sm:$0xf]
      %v2196 = vld [vmem:[%s2188 + $0x1c] sm:$0xf]
      %v2197 = vld [vmem:[%s2188 + $0x20] sm:$0xf]
      %v2198 = vld [vmem:[%s2188 + $0x24] sm:$0xf]
      %v2199 = vld [vmem:[%s2188 + $0x28] sm:$0xf]
      %v2200 = vld [vmem:[%s2188 + $0x2c] sm:$0xf]
      %v2201 = vld [vmem:[%s2188 + $0x30] sm:$0xf]
      %v2202 = vld [vmem:[%s2188 + $0x34] sm:$0xf]
      %v2203 = vld [vmem:[%s2188 + $0x38] sm:$0xf]
      %v2204 = vld [vmem:[%s2188 + $0x3c] sm:$0xf]
      %v2205 = vld [vmem:[%s2188 + $0x40] sm:$0xf]
      %v2206 = vld [vmem:[%s2188 + $0x44] sm:$0xf]
      %v2207 = vld [vmem:[%s2188 + $0x48] sm:$0xf]
      %v2208 = vld [vmem:[%s2188 + $0x4c] sm:$0xf]
      %v2209 = vld [vmem:[%s2188 + $0x50] sm:$0xf]
      %v2210 = vld [vmem:[%s2188 + $0x54] sm:$0xf]
      %v2211 = vld [vmem:[%s2188 + $0x58] sm:$0xf]
      %v2212 = vld [vmem:[%s2188 + $0x5c] sm:$0xf]
      %v2213 = vld [vmem:[%s2188 + $0x60] sm:$0xf]
      %v2214 = vld [vmem:[%s2188 + $0x64] sm:$0xf]
      %v2215 = vld [vmem:[%s2188 + $0x68] sm:$0xf]
      %v2216 = vld [vmem:[%s2188 + $0x6c] sm:$0xf]
      %v2217 = vld [vmem:[%s2188 + $0x70] sm:$0xf]
      %v2218 = vld [vmem:[%s2188 + $0x74] sm:$0xf]
      %v2219 = vld [vmem:[%s2188 + $0x78] sm:$0xf]
      %v2220 = vld [vmem:[%s2188 + $0x7c] sm:$0xf]
      %v2221 = vld [vmem:[%s2188 + $0x80] sm:$0xf]
      %v2222 = vld [vmem:[%s2188 + $0x84] sm:$0xf]
      %v2223 = vld [vmem:[%s2188 + $0x88] sm:$0xf]
      %v2224 = vld [vmem:[%s2188 + $0x8c] sm:$0xf]
      %v2225 = vld [vmem:[%s2188 + $0x90] sm:$0xf]
      %v2226 = vld [vmem:[%s2188 + $0x94] sm:$0xf]
      %v2227 = vld [vmem:[%s2188 + $0x98] sm:$0xf]
      %v2228 = vld [vmem:[%s2188 + $0x9c] sm:$0xf]
      %v2229 = vld [vmem:[%s2188 + $0xa0] sm:$0xf]
      %v2230 = vld [vmem:[%s2188 + $0xa4] sm:$0xf]
      %v2231 = vld [vmem:[%s2188 + $0xa8] sm:$0xf]
      %v2232 = vld [vmem:[%s2188 + $0xac] sm:$0xf]
      %v2233 = vld [vmem:[%s2188 + $0xb0] sm:$0xf]
      %v2234 = vld [vmem:[%s2188 + $0xb4] sm:$0xf]
      %v2235 = vld [vmem:[%s2188 + $0xb8] sm:$0xf]
      %v2236 = vld [vmem:[%s2188 + $0xbc] sm:$0xf]
      %v2285 = vunpack.c.l.b16 %v2189
      %v2286 = vunpack.c.l.b16 %v2190
      %v2287 = vunpack.c.l.b16 %v2191
      %v2288 = vunpack.c.l.b16 %v2192
      %v2289 = vunpack.c.l.b16 %v2193
      %v2290 = vunpack.c.l.b16 %v2194
      %v2291 = vunpack.c.l.b16 %v2195
      %v2292 = vunpack.c.l.b16 %v2196
      %v2293 = vunpack.c.l.b16 %v2197
      %v2294 = vunpack.c.l.b16 %v2198
      %v2295 = vunpack.c.l.b16 %v2199
      %v2296 = vunpack.c.l.b16 %v2200
      %v2297 = vunpack.c.l.b16 %v2201
      %v2298 = vunpack.c.l.b16 %v2202
      %v2299 = vunpack.c.l.b16 %v2203
      %v2300 = vunpack.c.l.b16 %v2204
      %v2301 = vunpack.c.l.b16 %v2205
      %v2302 = vunpack.c.l.b16 %v2206
      %v2303 = vunpack.c.l.b16 %v2207
      %v2304 = vunpack.c.l.b16 %v2208
      %v2305 = vunpack.c.l.b16 %v2209
      %v2306 = vunpack.c.l.b16 %v2210
      %v2307 = vunpack.c.l.b16 %v2211
      %v2308 = vunpack.c.l.b16 %v2212
      %v2309 = vunpack.c.l.b16 %v2213
      %v2310 = vunpack.c.l.b16 %v2214
      %v2311 = vunpack.c.l.b16 %v2215
      %v2312 = vunpack.c.l.b16 %v2216
      %v2313 = vunpack.c.l.b16 %v2217
      %v2314 = vunpack.c.l.b16 %v2218
      %v2315 = vunpack.c.l.b16 %v2219
      %v2316 = vunpack.c.l.b16 %v2220
      %v2317 = vunpack.c.l.b16 %v2221
      %v2318 = vunpack.c.l.b16 %v2222
      %v2319 = vunpack.c.l.b16 %v2223
      %v2320 = vunpack.c.l.b16 %v2224
      %v2321 = vunpack.c.l.b16 %v2225
      %v2322 = vunpack.c.l.b16 %v2226
      %v2323 = vunpack.c.l.b16 %v2227
      %v2324 = vunpack.c.l.b16 %v2228
      %v2325 = vunpack.c.l.b16 %v2229
      %v2326 = vunpack.c.l.b16 %v2230
      %v2327 = vunpack.c.l.b16 %v2231
      %v2328 = vunpack.c.l.b16 %v2232
      %v2329 = vunpack.c.l.b16 %v2233
      %v2330 = vunpack.c.l.b16 %v2234
      %v2331 = vunpack.c.l.b16 %v2235
      %v2332 = vunpack.c.l.b16 %v2236
      %v2333 = vpack.c.b16 %v2286, %v2285
      %v2334 = vpack.c.b16 %v2288, %v2287
      %v2335 = vpack.c.b16 %v2290, %v2289
      %v2336 = vpack.c.b16 %v2292, %v2291
      %v2337 = vpack.c.b16 %v2294, %v2293
      %v2338 = vpack.c.b16 %v2296, %v2295
      %v2339 = vpack.c.b16 %v2298, %v2297
      %v2340 = vpack.c.b16 %v2300, %v2299
      %v2341 = vpack.c.b16 %v2302, %v2301
      %v2342 = vpack.c.b16 %v2304, %v2303
      %v2343 = vpack.c.b16 %v2306, %v2305
      %v2344 = vpack.c.b16 %v2308, %v2307
      %v2345 = vpack.c.b16 %v2310, %v2309
      %v2346 = vpack.c.b16 %v2312, %v2311
      %v2347 = vpack.c.b16 %v2314, %v2313
      %v2348 = vpack.c.b16 %v2316, %v2315
      %v2349 = vpack.c.b16 %v2318, %v2317
      %v2350 = vpack.c.b16 %v2320, %v2319
      %v2351 = vpack.c.b16 %v2322, %v2321
      %v2352 = vpack.c.b16 %v2324, %v2323
      %v2353 = vpack.c.b16 %v2326, %v2325
      %v2354 = vpack.c.b16 %v2328, %v2327
      %v2355 = vpack.c.b16 %v2330, %v2329
      %v2356 = vpack.c.b16 %v2332, %v2331
      %2381 = vmatprep.subr.bf16.mxu0 0
      %2382 = vmatpush1.bf16.msra.mxu0 %v2333
      %2383 = vmatprep.subr.bf16.mxu0 0
      %2384 = vmatpush1.bf16.msra.mxu0 %v2334
      %2385 = vmatprep.subr.bf16.mxu0 0
      %2386 = vmatpush1.bf16.msra.mxu0 %v2335
      %2387 = vmatprep.subr.bf16.mxu0 0
      %2388 = vmatpush1.bf16.msra.mxu0 %v2336
      %2389 = vmatprep.subr.bf16.mxu0 0
      %2390 = vmatpush1.bf16.msra.mxu0 %v2337
      %2391 = vmatprep.subr.bf16.mxu0 0
      %2392 = vmatpush1.bf16.msra.mxu0 %v2338
      %2393 = vmatprep.subr.bf16.mxu0 0
      %2394 = vmatpush1.bf16.msra.mxu0 %v2339
      %2395 = vmatprep.subr.bf16.mxu0 0
      %2396 = vmatpush1.bf16.msra.mxu0 %v2340
      %2397 = vmatprep.subr.bf16.mxu0 0
      %2398 = vmatpush1.bf16.msra.mxu0 %v2341
      %2399 = vmatprep.subr.bf16.mxu0 0
      %2400 = vmatpush1.bf16.msra.mxu0 %v2342
      %2401 = vmatprep.subr.bf16.mxu0 0
      %2402 = vmatpush1.bf16.msra.mxu0 %v2343
      %2403 = vmatprep.subr.bf16.mxu0 0
      %2404 = vmatpush1.bf16.msra.mxu0 %v2344
      %2405 = vmatprep.subr.bf16.mxu0 0
      %2406 = vmatpush1.bf16.msra.mxu0 %v2345
      %2407 = vmatprep.subr.bf16.mxu0 0
      %2408 = vmatpush1.bf16.msra.mxu0 %v2346
      %2409 = vmatprep.subr.bf16.mxu0 0
      %2410 = vmatpush1.bf16.msra.mxu0 %v2347
      %2411 = vmatprep.subr.bf16.mxu0 0
      %2412 = vmatpush1.bf16.msra.mxu0 %v2348
      %2413 = vmatprep.mubr.bf16.mxu0 %v2029
      %2414 = vmatmul.mubr.bf16.gmra.mrb[0].mxu0 %v1968
      %v2415 = vpop.f32.mrb[0].mxu0
      %v2416 = vadd.f32 0.0, %v2415
      %v2417 = vpop.f32.mrb[0].mxu0
      %v2418 = vpop.f32.mrb[0].mxu0
      %v2419 = vadd.f32 0.0, %v2418
      %v2420 = vpop.f32.mrb[0].mxu0
      %2421 = vmatprep.mubr.bf16.mxu0 %v2041
      %2422 = vmatmul.mubr.bf16.gmra.mrb[0].mxu0 %v1969
      %v2423 = vpop.f32.mrb[0].mxu0
      %v2424 = vadd.f32 0.0, %v2423
      %v2425 = vpop.f32.mrb[0].mxu0
      %v2426 = vpop.f32.mrb[0].mxu0
      %v2427 = vadd.f32 0.0, %v2426
      %v2428 = vpop.f32.mrb[0].mxu0
      %2429 = vmatprep.mubr.bf16.mxu0 %v2053
      %2430 = vmatmul.mubr.bf16.gmra.mrb[0].mxu0 %v1970
      %v2431 = vpop.f32.mrb[0].mxu0
      %v2432 = vadd.f32 0.0, %v2431
      %v2433 = vpop.f32.mrb[0].mxu0
      %v2434 = vpop.f32.mrb[0].mxu0
      %v2435 = vadd.f32 0.0, %v2434
      %v2436 = vpop.f32.mrb[0].mxu0
      %2437 = vmatprep.mubr.bf16.mxu0 %v2065
      %2438 = vmatmul.mubr.bf16.gmra.mrb[0].mxu0 %v1971
      %v2439 = vpop.f32.mrb[0].mxu0
      %v2440 = vadd.f32 0.0, %v2439
      %v2441 = vpop.f32.mrb[0].mxu0
      %v2442 = vpop.f32.mrb[0].mxu0
      %v2443 = vadd.f32 0.0, %v2442
      %v2444 = vpop.f32.mrb[0].mxu0
      %2445 = vmatprep.mubr.bf16.mxu0 %v2077
      %2446 = vmatmul.mubr.bf16.gmra.mrb[0].mxu0 %v1972
      %v2447 = vpop.f32.mrb[0].mxu0
      %v2448 = vadd.f32 0.0, %v2447
      %v2449 = vpop.f32.mrb[0].mxu0
      %v2450 = vpop.f32.mrb[0].mxu0
      %v2451 = vadd.f32 0.0, %v2450
      %v2452 = vpop.f32.mrb[0].mxu0
      %2453 = vmatprep.mubr.bf16.mxu0 %v2089
      %2454 = vmatmul.mubr.bf16.gmra.mrb[0].mxu0 %v1973
      %v2455 = vpop.f32.mrb[0].mxu0
      %v2456 = vadd.f32 0.0, %v2455
      %v2457 = vpop.f32.mrb[0].mxu0
      %v2458 = vpop.f32.mrb[0].mxu0
      %v2459 = vadd.f32 0.0, %v2458
      %v2460 = vpop.f32.mrb[0].mxu0
      %2461 = vmatprep.mubr.bf16.mxu0 %v2101
      %2462 = vmatmul.mubr.bf16.gmra.mrb[0].mxu0 %v1974
      %v2463 = vpop.f32.mrb[0].mxu0
      %v2464 = vadd.f32 0.0, %v2463
      %v2465 = vpop.f32.mrb[0].mxu0
      %v2466 = vpop.f32.mrb[0].mxu0
      %v2467 = vadd.f32 0.0, %v2466
      %v2468 = vpop.f32.mrb[0].mxu0
      %2469 = vmatprep.mubr.bf16.mxu0 %v2113
      %2470 = vmatmul.mubr.bf16.gmra.mrb[0].mxu0 %v1975
      %v2471 = vpop.f32.mrb[0].mxu0
      %v2472 = vadd.f32 0.0, %v2471
      %v2473 = vpop.f32.mrb[0].mxu0
      %v2474 = vpop.f32.mrb[0].mxu0
      %v2475 = vadd.f32 0.0, %v2474
      %v2476 = vpop.f32.mrb[0].mxu0
      %2477 = vmatprep.mubr.bf16.mxu0 %v2125
      %2478 = vmatmul.mubr.bf16.gmra.mrb[0].mxu0 %v1976
      %v2479 = vpop.f32.mrb[0].mxu0
      %v2480 = vadd.f32 0.0, %v2479
      %v2481 = vpop.f32.mrb[0].mxu0
      %v2482 = vpop.f32.mrb[0].mxu0
      %v2483 = vadd.f32 0.0, %v2482
      %v2484 = vpop.f32.mrb[0].mxu0
      %2485 = vmatprep.mubr.bf16.mxu0 %v2137
      %2486 = vmatmul.mubr.bf16.gmra.mrb[0].mxu0 %v1977
      %v2487 = vpop.f32.mrb[0].mxu0
      %v2488 = vadd.f32 0.0, %v2487
      %v2489 = vpop.f32.mrb[0].mxu0
      %v2490 = vpop.f32.mrb[0].mxu0
      %v2491 = vadd.f32 0.0, %v2490
      %v2492 = vpop.f32.mrb[0].mxu0
      %2493 = vdwg.mxu0
      %2494 = vmatprep.subr.bf16.mxu0 0
      %2495 = vmatpush1.bf16.msra.mxu0 %v2349
      %2496 = vmatprep.subr.bf16.mxu0 0
      %2497 = vmatpush1.bf16.msra.mxu0 %v2350
      %2498 = vmatprep.subr.bf16.mxu0 0
      %2499 = vmatpush1.bf16.msra.mxu0 %v2351
      %2500 = vmatprep.subr.bf16.mxu0 0
      %2501 = vmatpush1.bf16.msra.mxu0 %v2352
      %2502 = vmatprep.subr.bf16.mxu0 0
      %2503 = vmatpush1.bf16.msra.mxu0 %v2353
      %2504 = vmatprep.subr.bf16.mxu0 0
      %2505 = vmatpush1.bf16.msra.mxu0 %v2354
      %2506 = vmatprep.subr.bf16.mxu0 0
      %2507 = vmatpush1.bf16.msra.mxu0 %v2355
      %2508 = vmatprep.subr.bf16.mxu0 0
      %2509 = vmatpush1.bf16.msra.mxu0 %v2356
      %2510 = vmatprep.subr.bf16.mxu0 0
      %2511 = vmatpush1.bf16.msra.mxu0 0
      %2512 = vmatprep.subr.bf16.mxu0 0
      %2513 = vmatpush1.bf16.msra.mxu0 0
      %2514 = vmatprep.subr.bf16.mxu0 0
      %2515 = vmatpush1.bf16.msra.mxu0 0
      %2516 = vmatprep.subr.bf16.mxu0 0
      %2517 = vmatpush1.bf16.msra.mxu0 0
      %2518 = vmatprep.subr.bf16.mxu0 0
      %2519 = vmatpush1.bf16.msra.mxu0 0
      %2520 = vmatprep.subr.bf16.mxu0 0
      %2521 = vmatpush1.bf16.msra.mxu0 0
      %2522 = vmatprep.subr.bf16.mxu0 0
      %2523 = vmatpush1.bf16.msra.mxu0 0
      %2524 = vmatprep.subr.bf16.mxu0 0
      %2525 = vmatpush1.bf16.msra.mxu0 0
      %2526 = vmatprep.mubr.bf16.mxu0 0
      %2527 = vmatmul.mubr.bf16.gmra.mrb[0].mxu0 %v2150
      %v2528 = vpop.f32.mrb[0].mxu0
      %v2529 = vadd.f32 %v2416, %v2528
      %v2530 = vpop.f32.mrb[0].mxu0
      %v2531 = vpop.f32.mrb[0].mxu0
      %v2532 = vadd.f32 %v2419, %v2531
      %v2533 = vpop.f32.mrb[0].mxu0
      %2534 = vmatprep.mubr.bf16.mxu0 0
      %2535 = vmatmul.mubr.bf16.gmra.mrb[0].mxu0 %v2153
      %v2536 = vpop.f32.mrb[0].mxu0
      %v2537 = vadd.f32 %v2424, %v2536
      %v2538 = vpop.f32.mrb[0].mxu0
      %v2539 = vpop.f32.mrb[0].mxu0
      %v2540 = vadd.f32 %v2427, %v2539
      %v2541 = vpop.f32.mrb[0].mxu0
      %2542 = vmatprep.mubr.bf16.mxu0 0
      %2543 = vmatmul.mubr.bf16.gmra.mrb[0].mxu0 %v2156
      %v2544 = vpop.f32.mrb[0].mxu0
      %v2545 = vadd.f32 %v2432, %v2544
      %v2546 = vpop.f32.mrb[0].mxu0
      %v2547 = vpop.f32.mrb[0].mxu0
      %v2548 = vadd.f32 %v2435, %v2547
      %v2549 = vpop.f32.mrb[0].mxu0
      %2550 = vmatprep.mubr.bf16.mxu0 0
      %2551 = vmatmul.mubr.bf16.gmra.mrb[0].mxu0 %v2159
      %v2552 = vpop.f32.mrb[0].mxu0
      %v2553 = vadd.f32 %v2440, %v2552
      %v2554 = vpop.f32.mrb[0].mxu0
      %v2555 = vpop.f32.mrb[0].mxu0
      %v2556 = vadd.f32 %v2443, %v2555
      %v2557 = vpop.f32.mrb[0].mxu0
      %2558 = vmatprep.mubr.bf16.mxu0 0
      %2559 = vmatmul.mubr.bf16.gmra.mrb[0].mxu0 %v2162
      %v2560 = vpop.f32.mrb[0].mxu0
      %v2561 = vadd.f32 %v2448, %v2560
      %v2562 = vpop.f32.mrb[0].mxu0
      %v2563 = vpop.f32.mrb[0].mxu0
      %v2564 = vadd.f32 %v2451, %v2563
      %v2565 = vpop.f32.mrb[0].mxu0
      %2566 = vmatprep.mubr.bf16.mxu0 0
      %2567 = vmatmul.mubr.bf16.gmra.mrb[0].mxu0 %v2165
      %v2568 = vpop.f32.mrb[0].mxu0
      %v2569 = vadd.f32 %v2456, %v2568
      %v2570 = vpop.f32.mrb[0].mxu0
      %v2571 = vpop.f32.mrb[0].mxu0
      %v2572 = vadd.f32 %v2459, %v2571
      %v2573 = vpop.f32.mrb[0].mxu0
      %2574 = vmatprep.mubr.bf16.mxu0 0
      %2575 = vmatmul.mubr.bf16.gmra.mrb[0].mxu0 %v2168
      %v2576 = vpop.f32.mrb[0].mxu0
      %v2577 = vadd.f32 %v2464, %v2576
      %v2578 = vpop.f32.mrb[0].mxu0
      %v2579 = vpop.f32.mrb[0].mxu0
      %v2580 = vadd.f32 %v2467, %v2579
      %v2581 = vpop.f32.mrb[0].mxu0
      %2582 = vmatprep.mubr.bf16.mxu0 0
      %2583 = vmatmul.mubr.bf16.gmra.mrb[0].mxu0 %v2171
      %v2584 = vpop.f32.mrb[0].mxu0
      %v2585 = vadd.f32 %v2472, %v2584
      %v2586 = vpop.f32.mrb[0].mxu0
      %v2587 = vpop.f32.mrb[0].mxu0
      %v2588 = vadd.f32 %v2475, %v2587
      %v2589 = vpop.f32.mrb[0].mxu0
      %2590 = vmatprep.mubr.bf16.mxu0 0
      %2591 = vmatmul.mubr.bf16.gmra.mrb[0].mxu0 %v2174
      %v2592 = vpop.f32.mrb[0].mxu0
      %v2593 = vadd.f32 %v2480, %v2592
      %v2594 = vpop.f32.mrb[0].mxu0
      %v2595 = vpop.f32.mrb[0].mxu0
      %v2596 = vadd.f32 %v2483, %v2595
      %v2597 = vpop.f32.mrb[0].mxu0
      %2598 = vmatprep.mubr.bf16.mxu0 0
      %2599 = vmatmul.mubr.bf16.gmra.mrb[0].mxu0 %v2177
      %v2600 = vpop.f32.mrb[0].mxu0
      %v2601 = vadd.f32 %v2488, %v2600
      %v2602 = vpop.f32.mrb[0].mxu0
      %v2603 = vpop.f32.mrb[0].mxu0
      %v2604 = vadd.f32 %v2491, %v2603
      %v2605 = vpop.f32.mrb[0].mxu0
      %2606 = vdwg.mxu0
      %v2607 = vadd.f32 %v1819, %v2529
      %v2608 = vadd.f32 %v1822, %v2532
      %v2609 = vadd.f32 %v1827, %v2537
      %v2610 = vadd.f32 %v1830, %v2540
      %v2611 = vadd.f32 %v1835, %v2545
      %v2612 = vadd.f32 %v1838, %v2548
      %v2613 = vadd.f32 %v1843, %v2553
      %v2614 = vadd.f32 %v1846, %v2556
      %v2615 = vadd.f32 %v1851, %v2561
      %v2616 = vadd.f32 %v1854, %v2564
      %v2617 = vadd.f32 %v1859, %v2569
      %v2618 = vadd.f32 %v1862, %v2572
      %v2619 = vadd.f32 %v1867, %v2577
      %v2620 = vadd.f32 %v1870, %v2580
      %v2621 = vadd.f32 %v1875, %v2585
      %v2622 = vadd.f32 %v1878, %v2588
      %v2623 = vadd.f32 %v1883, %v2593
      %v2624 = vadd.f32 %v1886, %v2596
      %v2625 = vadd.f32 %v1891, %v2601
      %v2626 = vadd.f32 %v1894, %v2604
      %v2627 = vld [vmem:[%s3] sm:$0x1]
      %v2629 = vlaneseq
      %v2630 = vshrl.u32 %v2629, 7
      %v2631 = vsub.s32 0, %v2630
      %v2632 = vrot.slane %v2627, %v2631
      %v2634 = vmul.f32 %v2607, %v2632
      %v2635 = vmul.f32 %v2608, %v2632
      %v2636 = vmul.f32 %v2609, %v2632
      %v2637 = vmul.f32 %v2610, %v2632
      %v2638 = vmul.f32 %v2611, %v2632
      %v2639 = vmul.f32 %v2612, %v2632
      %v2640 = vmul.f32 %v2613, %v2632
      %v2641 = vmul.f32 %v2614, %v2632
      %v2642 = vmul.f32 %v2615, %v2632
      %v2643 = vmul.f32 %v2616, %v2632
      %v2644 = vmul.f32 %v2617, %v2632
      %v2645 = vmul.f32 %v2618, %v2632
      %v2646 = vmul.f32 %v2619, %v2632
      %v2647 = vmul.f32 %v2620, %v2632
      %v2648 = vmul.f32 %v2621, %v2632
      %v2649 = vmul.f32 %v2622, %v2632
      %v2650 = vmul.f32 %v2623, %v2632
      %v2651 = vmul.f32 %v2624, %v2632
      %v2652 = vmul.f32 %v2625, %v2632
      %v2653 = vmul.f32 %v2626, %v2632
      %v2654 = vld [vmem:[%s4] sm:$0x1]
      %v2656 = vlaneseq
      %v2657 = vshrl.u32 %v2656, 7
      %v2658 = vsub.s32 0, %v2657
      %v2659 = vrot.slane %v2654, %v2658
      %v2661 = vadd.f32 %v2634, %v2659
      %v2662 = vadd.f32 %v2635, %v2659
      %v2663 = vadd.f32 %v2636, %v2659
      %v2664 = vadd.f32 %v2637, %v2659
      %v2665 = vadd.f32 %v2638, %v2659
      %v2666 = vadd.f32 %v2639, %v2659
      %v2667 = vadd.f32 %v2640, %v2659
      %v2668 = vadd.f32 %v2641, %v2659
      %v2669 = vadd.f32 %v2642, %v2659
      %v2670 = vadd.f32 %v2643, %v2659
      %v2671 = vadd.f32 %v2644, %v2659
      %v2672 = vadd.f32 %v2645, %v2659
      %v2673 = vadd.f32 %v2646, %v2659
      %v2674 = vadd.f32 %v2647, %v2659
      %v2675 = vadd.f32 %v2648, %v2659
      %v2676 = vadd.f32 %v2649, %v2659
      %v2677 = vadd.f32 %v2650, %v2659
      %v2678 = vadd.f32 %v2651, %v2659
      %v2679 = vadd.f32 %v2652, %v2659
      %v2680 = vadd.f32 %v2653, %v2659
      %v2681 = vmax.f32 %v2661, 0.0
      %v2682 = vmax.f32 %v2662, 0.0
      %v2683 = vmax.f32 %v2663, 0.0
      %v2684 = vmax.f32 %v2664, 0.0
      %v2685 = vmax.f32 %v2665, 0.0
      %v2686 = vmax.f32 %v2666, 0.0
      %v2687 = vmax.f32 %v2667, 0.0
      %v2688 = vmax.f32 %v2668, 0.0
      %v2689 = vmax.f32 %v2669, 0.0
      %v2690 = vmax.f32 %v2670, 0.0
      %v2691 = vmax.f32 %v2671, 0.0
      %v2692 = vmax.f32 %v2672, 0.0
      %v2693 = vmax.f32 %v2673, 0.0
      %v2694 = vmax.f32 %v2674, 0.0
      %v2695 = vmax.f32 %v2675, 0.0
      %v2696 = vmax.f32 %v2676, 0.0
      %v2697 = vmax.f32 %v2677, 0.0
      %v2698 = vmax.f32 %v2678, 0.0
      %v2699 = vmax.f32 %v2679, 0.0
      %v2700 = vmax.f32 %v2680, 0.0
      %v2701 = vpack.c.bf16 %v2682, %v2681
      %v2702 = vpack.c.bf16 %v2684, %v2683
      %v2703 = vpack.c.bf16 %v2686, %v2685
      %v2704 = vpack.c.bf16 %v2688, %v2687
      %v2705 = vpack.c.bf16 %v2690, %v2689
      %v2706 = vpack.c.bf16 %v2692, %v2691
      %v2707 = vpack.c.bf16 %v2694, %v2693
      %v2708 = vpack.c.bf16 %v2696, %v2695
      %v2709 = vpack.c.bf16 %v2698, %v2697
      %v2710 = vpack.c.bf16 %v2700, %v2699
      %v2721 = vunpack.c.l.b16 %v2701
      %v2722 = vunpack.c.h.b16 %v2701
      %v2723 = vunpack.c.l.b16 %v2702
      %v2724 = vunpack.c.h.b16 %v2702
      %v2725 = vunpack.c.l.b16 %v2703
      %v2726 = vunpack.c.h.b16 %v2703
      %v2727 = vunpack.c.l.b16 %v2704
      %v2728 = vunpack.c.h.b16 %v2704
      %v2729 = vunpack.c.l.b16 %v2705
      %v2730 = vunpack.c.h.b16 %v2705
      %v2731 = vunpack.c.l.b16 %v2706
      %v2732 = vunpack.c.h.b16 %v2706
      %v2733 = vunpack.c.l.b16 %v2707
      %v2734 = vunpack.c.h.b16 %v2707
      %v2735 = vunpack.c.l.b16 %v2708
      %v2736 = vunpack.c.h.b16 %v2708
      %v2737 = vunpack.c.l.b16 %v2709
      %v2738 = vunpack.c.h.b16 %v2709
      %v2739 = vunpack.c.l.b16 %v2710
      %v2740 = vunpack.c.h.b16 %v2710
      %v2741 = vpack.c.b16 %v2721, %v2721
      %v2742 = vpack.c.b16 %v2722, %v2722
      %v2743 = vpack.c.b16 %v2723, %v2723
      %v2744 = vpack.c.b16 %v2724, %v2724
      %v2745 = vpack.c.b16 %v2725, %v2725
      %v2746 = vpack.c.b16 %v2726, %v2726
      %v2747 = vpack.c.b16 %v2727, %v2727
      %v2748 = vpack.c.b16 %v2728, %v2728
      %v2749 = vpack.c.b16 %v2729, %v2729
      %v2750 = vpack.c.b16 %v2730, %v2730
      %v2751 = vpack.c.b16 %v2731, %v2731
      %v2752 = vpack.c.b16 %v2732, %v2732
      %v2753 = vpack.c.b16 %v2733, %v2733
      %v2754 = vpack.c.b16 %v2734, %v2734
      %v2755 = vpack.c.b16 %v2735, %v2735
      %v2756 = vpack.c.b16 %v2736, %v2736
      %v2757 = vpack.c.b16 %v2737, %v2737
      %v2758 = vpack.c.b16 %v2738, %v2738
      %v2759 = vpack.c.b16 %v2739, %v2739
      %v2760 = vpack.c.b16 %v2740, %v2740
      %vm2761 = vsmask.f32 256
      %vm2762 = vsmask.f32 4368
      %vm2763 = vmor %vm2761, %vm2762
      %v2765 = vshrl.u32 %v2741, 16
      %v2767 = vrot.slane %v2765, 7
      %v2768 = vshll.u32 %v2741, 16
      %v2770 = vor.u32 %v2767, %v2768
      %v2771 = vrot.slane %v2767, 4
      %v2773 = vshrl.u32 %v2742, 16
      %v2775 = vrot.slane %v2773, 7
      %v2776 = vshll.u32 %v2742, 16
      %v2778 = vor.u32 %v2775, %v2776
      %v2779 = vsel %vm2763, %v2771, %v2778
      %v2780 = vrot.slane %v2775, 4
      %v2782 = vshrl.u32 %v2743, 16
      %v2784 = vrot.slane %v2782, 7
      %v2785 = vshll.u32 %v2743, 16
      %v2787 = vor.u32 %v2784, %v2785
      %v2788 = vrot.slane %v2784, 4
      %v2790 = vshrl.u32 %v2744, 16
      %v2792 = vrot.slane %v2790, 7
      %v2793 = vshll.u32 %v2744, 16
      %v2795 = vor.u32 %v2792, %v2793
      %v2796 = vsel %vm2763, %v2788, %v2795
      %v2797 = vrot.slane %v2792, 4
      %v2799 = vshrl.u32 %v2745, 16
      %v2801 = vrot.slane %v2799, 7
      %v2802 = vshll.u32 %v2745, 16
      %v2804 = vor.u32 %v2801, %v2802
      %v2805 = vrot.slane %v2801, 4
      %v2807 = vshrl.u32 %v2746, 16
      %v2809 = vrot.slane %v2807, 7
      %v2810 = vshll.u32 %v2746, 16
      %v2812 = vor.u32 %v2809, %v2810
      %v2813 = vsel %vm2763, %v2805, %v2812
      %v2814 = vrot.slane %v2809, 4
      %v2816 = vshrl.u32 %v2747, 16
      %v2818 = vrot.slane %v2816, 7
      %v2819 = vshll.u32 %v2747, 16
      %v2821 = vor.u32 %v2818, %v2819
      %v2822 = vrot.slane %v2818, 4
      %v2824 = vshrl.u32 %v2748, 16
      %v2826 = vrot.slane %v2824, 7
      %v2827 = vshll.u32 %v2748, 16
      %v2829 = vor.u32 %v2826, %v2827
      %v2830 = vsel %vm2763, %v2822, %v2829
      %v2831 = vrot.slane %v2826, 4
      %v2833 = vshrl.u32 %v2749, 16
      %v2835 = vrot.slane %v2833, 7
      %v2836 = vshll.u32 %v2749, 16
      %v2838 = vor.u32 %v2835, %v2836
      %v2839 = vrot.slane %v2835, 4
      %v2841 = vshrl.u32 %v2750, 16
      %v2843 = vrot.slane %v2841, 7
      %v2844 = vshll.u32 %v2750, 16
      %v2846 = vor.u32 %v2843, %v2844
      %v2847 = vsel %vm2763, %v2839, %v2846
      %v2848 = vrot.slane %v2843, 4
      %v2850 = vshrl.u32 %v2751, 16
      %v2852 = vrot.slane %v2850, 7
      %v2853 = vshll.u32 %v2751, 16
      %v2855 = vor.u32 %v2852, %v2853
      %v2856 = vrot.slane %v2852, 4
      %v2858 = vshrl.u32 %v2752, 16
      %v2860 = vrot.slane %v2858, 7
      %v2861 = vshll.u32 %v2752, 16
      %v2863 = vor.u32 %v2860, %v2861
      %v2864 = vsel %vm2763, %v2856, %v2863
      %v2865 = vrot.slane %v2860, 4
      %v2867 = vshrl.u32 %v2753, 16
      %v2869 = vrot.slane %v2867, 7
      %v2870 = vshll.u32 %v2753, 16
      %v2872 = vor.u32 %v2869, %v2870
      %v2873 = vrot.slane %v2869, 4
      %v2875 = vshrl.u32 %v2754, 16
      %v2877 = vrot.slane %v2875, 7
      %v2878 = vshll.u32 %v2754, 16
      %v2880 = vor.u32 %v2877, %v2878
      %v2881 = vsel %vm2763, %v2873, %v2880
      %v2882 = vrot.slane %v2877, 4
      %v2884 = vshrl.u32 %v2755, 16
      %v2886 = vrot.slane %v2884, 7
      %v2887 = vshll.u32 %v2755, 16
      %v2889 = vor.u32 %v2886, %v2887
      %v2890 = vrot.slane %v2886, 4
      %v2892 = vshrl.u32 %v2756, 16
      %v2894 = vrot.slane %v2892, 7
      %v2895 = vshll.u32 %v2756, 16
      %v2897 = vor.u32 %v2894, %v2895
      %v2898 = vsel %vm2763, %v2890, %v2897
      %v2899 = vrot.slane %v2894, 4
      %v2901 = vshrl.u32 %v2757, 16
      %v2903 = vrot.slane %v2901, 7
      %v2904 = vshll.u32 %v2757, 16
      %v2906 = vor.u32 %v2903, %v2904
      %v2907 = vrot.slane %v2903, 4
      %v2909 = vshrl.u32 %v2758, 16
      %v2911 = vrot.slane %v2909, 7
      %v2912 = vshll.u32 %v2758, 16
      %v2914 = vor.u32 %v2911, %v2912
      %v2915 = vsel %vm2763, %v2907, %v2914
      %v2916 = vrot.slane %v2911, 4
      %v2918 = vshrl.u32 %v2759, 16
      %v2920 = vrot.slane %v2918, 7
      %v2921 = vshll.u32 %v2759, 16
      %v2923 = vor.u32 %v2920, %v2921
      %v2924 = vrot.slane %v2920, 4
      %v2926 = vshrl.u32 %v2760, 16
      %v2928 = vrot.slane %v2926, 7
      %v2929 = vshll.u32 %v2760, 16
      %v2931 = vor.u32 %v2928, %v2929
      %v2932 = vsel %vm2763, %v2924, %v2931
      %v2933 = vrot.slane %v2928, 4
      %vm2964 = vcmask 1043456
      %vm2965 = vsmask.f32 7938
      %vm2966 = vmand %vm2964, %vm2965
      %v2967 = vld [vmem:[#allocation3] sm:$0xf]
      %v2968 = vsel %vm2966, %v2770, %v2967
      %2969 = vst [vmem:[#allocation3] sm:$0xf] %v2968
      %2970 = vst [vmem:[#allocation3 + $0x4] sm:$0xf] %v2779
      %vm2971 = vcmask 1040384
      %vm2972 = vmand %vm2971, %vm2761
      %v2973 = vld [vmem:[#allocation3 + $0x8] sm:$0x1]
      %v2974 = vsel %vm2972, %v2780, %v2973
      %2975 = vst [vmem:[#allocation3 + $0x8] sm:$0x1] %v2974
      %v2976 = vld [vmem:[#allocation3 + $0xc] sm:$0xf]
      %v2977 = vsel %vm2966, %v2787, %v2976
      %2978 = vst [vmem:[#allocation3 + $0xc] sm:$0xf] %v2977
      %2979 = vst [vmem:[#allocation3 + $0x10] sm:$0xf] %v2796
      %v2980 = vld [vmem:[#allocation3 + $0x14] sm:$0x1]
      %v2981 = vsel %vm2972, %v2797, %v2980
      %2982 = vst [vmem:[#allocation3 + $0x14] sm:$0x1] %v2981
      %v2983 = vld [vmem:[#allocation3 + $0x18] sm:$0xf]
      %v2984 = vsel %vm2966, %v2804, %v2983
      %2985 = vst [vmem:[#allocation3 + $0x18] sm:$0xf] %v2984
      %2986 = vst [vmem:[#allocation3 + $0x1c] sm:$0xf] %v2813
      %v2987 = vld [vmem:[#allocation3 + $0x20] sm:$0x1]
      %v2988 = vsel %vm2972, %v2814, %v2987
      %2989 = vst [vmem:[#allocation3 + $0x20] sm:$0x1] %v2988
      %v2990 = vld [vmem:[#allocation3 + $0x24] sm:$0xf]
      %v2991 = vsel %vm2966, %v2821, %v2990
      %2992 = vst [vmem:[#allocation3 + $0x24] sm:$0xf] %v2991
      %2993 = vst [vmem:[#allocation3 + $0x28] sm:$0xf] %v2830
      %v2994 = vld [vmem:[#allocation3 + $0x2c] sm:$0x1]
      %v2995 = vsel %vm2972, %v2831, %v2994
      %2996 = vst [vmem:[#allocation3 + $0x2c] sm:$0x1] %v2995
      %v2997 = vld [vmem:[#allocation3 + $0x30] sm:$0xf]
      %v2998 = vsel %vm2966, %v2838, %v2997
      %2999 = vst [vmem:[#allocation3 + $0x30] sm:$0xf] %v2998
      %3000 = vst [vmem:[#allocation3 + $0x34] sm:$0xf] %v2847
      %v3001 = vld [vmem:[#allocation3 + $0x38] sm:$0x1]
      %v3002 = vsel %vm2972, %v2848, %v3001
      %3003 = vst [vmem:[#allocation3 + $0x38] sm:$0x1] %v3002
      %v3004 = vld [vmem:[#allocation3 + $0x3c] sm:$0xf]
      %v3005 = vsel %vm2966, %v2855, %v3004
      %3006 = vst [vmem:[#allocation3 + $0x3c] sm:$0xf] %v3005
      %3007 = vst [vmem:[#allocation3 + $0x40] sm:$0xf] %v2864
      %v3008 = vld [vmem:[#allocation3 + $0x44] sm:$0x1]
      %v3009 = vsel %vm2972, %v2865, %v3008
      %3010 = vst [vmem:[#allocation3 + $0x44] sm:$0x1] %v3009
      %v3011 = vld [vmem:[#allocation3 + $0x48] sm:$0xf]
      %v3012 = vsel %vm2966, %v2872, %v3011
      %3013 = vst [vmem:[#allocation3 + $0x48] sm:$0xf] %v3012
      %3014 = vst [vmem:[#allocation3 + $0x4c] sm:$0xf] %v2881
      %v3015 = vld [vmem:[#allocation3 + $0x50] sm:$0x1]
      %v3016 = vsel %vm2972, %v2882, %v3015
      %3017 = vst [vmem:[#allocation3 + $0x50] sm:$0x1] %v3016
      %v3018 = vld [vmem:[#allocation3 + $0x54] sm:$0xf]
      %v3019 = vsel %vm2966, %v2889, %v3018
      %3020 = vst [vmem:[#allocation3 + $0x54] sm:$0xf] %v3019
      %3021 = vst [vmem:[#allocation3 + $0x58] sm:$0xf] %v2898
      %v3022 = vld [vmem:[#allocation3 + $0x5c] sm:$0x1]
      %v3023 = vsel %vm2972, %v2899, %v3022
      %3024 = vst [vmem:[#allocation3 + $0x5c] sm:$0x1] %v3023
      %v3025 = vld [vmem:[#allocation3 + $0x60] sm:$0xf]
      %v3026 = vsel %vm2966, %v2906, %v3025
      %3027 = vst [vmem:[#allocation3 + $0x60] sm:$0xf] %v3026
      %3028 = vst [vmem:[#allocation3 + $0x64] sm:$0xf] %v2915
      %v3029 = vld [vmem:[#allocation3 + $0x68] sm:$0x1]
      %v3030 = vsel %vm2972, %v2916, %v3029
      %3031 = vst [vmem:[#allocation3 + $0x68] sm:$0x1] %v3030
      %v3032 = vld [vmem:[#allocation3 + $0x6c] sm:$0xf]
      %v3033 = vsel %vm2966, %v2923, %v3032
      %3034 = vst [vmem:[#allocation3 + $0x6c] sm:$0xf] %v3033
      %3035 = vst [vmem:[#allocation3 + $0x70] sm:$0xf] %v2932
      %v3036 = vld [vmem:[#allocation3 + $0x74] sm:$0x1]
      %v3037 = vsel %vm2972, %v2933, %v3036
      %3038 = vst [vmem:[#allocation3 + $0x74] sm:$0x1] %v3037
      %v3039 = vld [vmem:[#allocation3] sm:$0x1]
      %v3040 = vsel %vm2972, 0, %v3039
      %3041 = vst [vmem:[#allocation3] sm:$0x1] %v3040
      %v3042 = vld [vmem:[#allocation3 + $0xc] sm:$0x1]
      %v3043 = vsel %vm2972, 0, %v3042
      %3044 = vst [vmem:[#allocation3 + $0xc] sm:$0x1] %v3043
      %v3045 = vld [vmem:[#allocation3 + $0x18] sm:$0x1]
      %v3046 = vsel %vm2972, 0, %v3045
      %3047 = vst [vmem:[#allocation3 + $0x18] sm:$0x1] %v3046
      %v3048 = vld [vmem:[#allocation3 + $0x24] sm:$0x1]
      %v3049 = vsel %vm2972, 0, %v3048
      %3050 = vst [vmem:[#allocation3 + $0x24] sm:$0x1] %v3049
      %v3051 = vld [vmem:[#allocation3 + $0x30] sm:$0x1]
      %v3052 = vsel %vm2972, 0, %v3051
      %3053 = vst [vmem:[#allocation3 + $0x30] sm:$0x1] %v3052
      %v3054 = vld [vmem:[#allocation3 + $0x3c] sm:$0x1]
      %v3055 = vsel %vm2972, 0, %v3054
      %3056 = vst [vmem:[#allocation3 + $0x3c] sm:$0x1] %v3055
      %v3057 = vld [vmem:[#allocation3 + $0x48] sm:$0x1]
      %v3058 = vsel %vm2972, 0, %v3057
      %3059 = vst [vmem:[#allocation3 + $0x48] sm:$0x1] %v3058
      %v3060 = vld [vmem:[#allocation3 + $0x54] sm:$0x1]
      %v3061 = vsel %vm2972, 0, %v3060
      %3062 = vst [vmem:[#allocation3 + $0x54] sm:$0x1] %v3061
      %v3063 = vld [vmem:[#allocation3 + $0x60] sm:$0x1]
      %v3064 = vsel %vm2972, 0, %v3063
      %3065 = vst [vmem:[#allocation3 + $0x60] sm:$0x1] %v3064
      %v3066 = vld [vmem:[#allocation3 + $0x6c] sm:$0x1]
      %v3067 = vsel %vm2972, 0, %v3066
      %3068 = vst [vmem:[#allocation3 + $0x6c] sm:$0x1] %v3067
      %vm3069 = vmand %vm2971, %vm2965
      %v3070 = vld [vmem:[#allocation3 + $0x8] sm:$0x1]
      %v3071 = vsel %vm3069, 0, %v3070
      %3072 = vst [vmem:[#allocation3 + $0x8] sm:$0x1] %v3071
      %v3073 = vld [vmem:[#allocation3 + $0x14] sm:$0x1]
      %v3074 = vsel %vm3069, 0, %v3073
      %3075 = vst [vmem:[#allocation3 + $0x14] sm:$0x1] %v3074
      %v3076 = vld [vmem:[#allocation3 + $0x20] sm:$0x1]
      %v3077 = vsel %vm3069, 0, %v3076
      %3078 = vst [vmem:[#allocation3 + $0x20] sm:$0x1] %v3077
      %v3079 = vld [vmem:[#allocation3 + $0x2c] sm:$0x1]
      %v3080 = vsel %vm3069, 0, %v3079
      %3081 = vst [vmem:[#allocation3 + $0x2c] sm:$0x1] %v3080
      %v3082 = vld [vmem:[#allocation3 + $0x38] sm:$0x1]
      %v3083 = vsel %vm3069, 0, %v3082
      %3084 = vst [vmem:[#allocation3 + $0x38] sm:$0x1] %v3083
      %v3085 = vld [vmem:[#allocation3 + $0x44] sm:$0x1]
      %v3086 = vsel %vm3069, 0, %v3085
      %3087 = vst [vmem:[#allocation3 + $0x44] sm:$0x1] %v3086
      %v3088 = vld [vmem:[#allocation3 + $0x50] sm:$0x1]
      %v3089 = vsel %vm3069, 0, %v3088
      %3090 = vst [vmem:[#allocation3 + $0x50] sm:$0x1] %v3089
      %v3091 = vld [vmem:[#allocation3 + $0x5c] sm:$0x1]
      %v3092 = vsel %vm3069, 0, %v3091
      %3093 = vst [vmem:[#allocation3 + $0x5c] sm:$0x1] %v3092
      %v3094 = vld [vmem:[#allocation3 + $0x68] sm:$0x1]
      %v3095 = vsel %vm3069, 0, %v3094
      %3096 = vst [vmem:[#allocation3 + $0x68] sm:$0x1] %v3095
      %v3097 = vld [vmem:[#allocation3 + $0x74] sm:$0x1]
      %v3098 = vsel %vm3069, 0, %v3097
      %3099 = vst [vmem:[#allocation3 + $0x74] sm:$0x1] %v3098
      %p3100 = scmp.eq.s32.totalorder %s24, 0
      // Predicated region
      $region53: #{double_conv.1} parent=51 // pred_check
        %p3101 = pneg %p3100
      $region54: #{double_conv.1} parent=51 // pred_check_branch
        %3103 = sbr.rel (%p3101) target = $region56
      $region55: #{double_conv.1} parent=51 // pred_region
        %3104 = vst [vmem:[#allocation3] sm:$0xf] 0
        %3105 = vst [vmem:[#allocation3 + $0x4] sm:$0xf] 0
        %3106 = vst [vmem:[#allocation3 + $0x8] sm:$0x1] 0
      $region56: #{double_conv.1} parent=51 // pred_fallthru
        _
      %p3107 = scmp.eq.s32.totalorder %s24, 1
      // Predicated region
      $region57: #{double_conv.1} parent=51 // pred_check
        %p3108 = pneg %p3107
      $region58: #{double_conv.1} parent=51 // pred_check_branch
        %3110 = sbr.rel (%p3108) target = $region60
      $region59: #{double_conv.1} parent=51 // pred_region
        %s3111 = scalar_lea.vmem [#allocation3], 108
        %3112 = vst [vmem:[%s3111] sm:$0xf] 0
        %3113 = vst [vmem:[%s3111 + $0x4] sm:$0xf] 0
        %3114 = vst [vmem:[%s3111 + $0x8] sm:$0x1] 0
      $region60: #{double_conv.1} parent=51 // pred_fallthru
        _
      %v3115 = vld [vmem:[#allocation3] sm:$0xf]
      %v3116 = vld [vmem:[#allocation3 + $0x4] sm:$0xf]
      %v3117 = vld [vmem:[#allocation3 + $0x8] sm:$0x1]
      %v3118 = vld [vmem:[#allocation3 + $0xc] sm:$0xf]
      %v3119 = vld [vmem:[#allocation3 + $0x10] sm:$0xf]
      %v3120 = vld [vmem:[#allocation3 + $0x14] sm:$0x1]
      %v3121 = vld [vmem:[#allocation3 + $0x18] sm:$0xf]
      %v3122 = vld [vmem:[#allocation3 + $0x1c] sm:$0xf]
      %v3123 = vld [vmem:[#allocation3 + $0x20] sm:$0x1]
      %v3124 = vld [vmem:[#allocation3 + $0x24] sm:$0xf]
      %v3125 = vld [vmem:[#allocation3 + $0x28] sm:$0xf]
      %v3126 = vld [vmem:[#allocation3 + $0x2c] sm:$0x1]
      %v3127 = vld [vmem:[#allocation3 + $0x30] sm:$0xf]
      %v3128 = vld [vmem:[#allocation3 + $0x34] sm:$0xf]
      %v3129 = vld [vmem:[#allocation3 + $0x38] sm:$0x1]
      %v3130 = vld [vmem:[#allocation3 + $0x3c] sm:$0xf]
      %v3131 = vld [vmem:[#allocation3 + $0x40] sm:$0xf]
      %v3132 = vld [vmem:[#allocation3 + $0x44] sm:$0x1]
      %v3133 = vld [vmem:[#allocation3 + $0x48] sm:$0xf]
      %v3134 = vld [vmem:[#allocation3 + $0x4c] sm:$0xf]
      %v3135 = vld [vmem:[#allocation3 + $0x50] sm:$0x1]
      %v3136 = vld [vmem:[#allocation3 + $0x54] sm:$0xf]
      %v3137 = vld [vmem:[#allocation3 + $0x58] sm:$0xf]
      %v3138 = vld [vmem:[#allocation3 + $0x5c] sm:$0x1]
      %v3155 = vunpack.c.l.b16 %v3115
      %v3156 = vunpack.c.l.b16 %v3116
      %v3157 = vunpack.c.l.b16 %v3118
      %v3158 = vunpack.c.l.b16 %v3119
      %v3159 = vunpack.c.l.b16 %v3121
      %v3160 = vunpack.c.l.b16 %v3122
      %v3161 = vunpack.c.l.b16 %v3124
      %v3162 = vunpack.c.l.b16 %v3125
      %v3163 = vunpack.c.l.b16 %v3127
      %v3164 = vunpack.c.l.b16 %v3128
      %v3165 = vunpack.c.l.b16 %v3130
      %v3166 = vunpack.c.l.b16 %v3131
      %v3167 = vunpack.c.l.b16 %v3133
      %v3168 = vunpack.c.l.b16 %v3134
      %v3169 = vunpack.c.l.b16 %v3136
      %v3170 = vunpack.c.l.b16 %v3137
      %v3171 = vpack.c.b16 %v3156, %v3155
      %v3172 = vpack.c.b16 %v3158, %v3157
      %v3173 = vpack.c.b16 %v3160, %v3159
      %v3174 = vpack.c.b16 %v3162, %v3161
      %v3175 = vpack.c.b16 %v3164, %v3163
      %v3176 = vpack.c.b16 %v3166, %v3165
      %v3177 = vpack.c.b16 %v3168, %v3167
      %v3178 = vpack.c.b16 %v3170, %v3169
      %v3195 = vunpack.c.l.b16 %v3117
      %v3196 = vunpack.c.l.b16 %v3120
      %v3197 = vunpack.c.l.b16 %v3123
      %v3198 = vunpack.c.l.b16 %v3126
      %v3199 = vunpack.c.l.b16 %v3129
      %v3200 = vunpack.c.l.b16 %v3132
      %v3201 = vunpack.c.l.b16 %v3135
      %v3202 = vunpack.c.l.b16 %v3138
      %v3203 = vpack.c.b16 %v3195, %v3195
      %v3204 = vpack.c.b16 %v3196, %v3196
      %v3205 = vpack.c.b16 %v3197, %v3197
      %v3206 = vpack.c.b16 %v3198, %v3198
      %v3207 = vpack.c.b16 %v3199, %v3199
      %v3208 = vpack.c.b16 %v3200, %v3200
      %v3209 = vpack.c.b16 %v3201, %v3201
      %v3210 = vpack.c.b16 %v3202, %v3202
      %v3212 = vshrl.u32 %v3171, 16
      %v3214 = vshll.u32 %v3171, 16
      %v3216 = vrot.slane %v3214, 1
      %v3217 = vor.u32 %v3212, %v3216
      %v3219 = vshll.u32 %v3203, 16
      %v3221 = vrot.slane %v3219, 1
      %v3222 = vsel %vm597, %v3217, %v3221
      %v3224 = vshrl.u32 %v3172, 16
      %v3226 = vshll.u32 %v3172, 16
      %v3228 = vrot.slane %v3226, 1
      %v3229 = vor.u32 %v3224, %v3228
      %v3231 = vshll.u32 %v3204, 16
      %v3233 = vrot.slane %v3231, 1
      %v3234 = vsel %vm597, %v3229, %v3233
      %v3236 = vshrl.u32 %v3173, 16
      %v3238 = vshll.u32 %v3173, 16
      %v3240 = vrot.slane %v3238, 1
      %v3241 = vor.u32 %v3236, %v3240
      %v3243 = vshll.u32 %v3205, 16
      %v3245 = vrot.slane %v3243, 1
      %v3246 = vsel %vm597, %v3241, %v3245
      %v3248 = vshrl.u32 %v3174, 16
      %v3250 = vshll.u32 %v3174, 16
      %v3252 = vrot.slane %v3250, 1
      %v3253 = vor.u32 %v3248, %v3252
      %v3255 = vshll.u32 %v3206, 16
      %v3257 = vrot.slane %v3255, 1
      %v3258 = vsel %vm597, %v3253, %v3257
      %v3260 = vshrl.u32 %v3175, 16
      %v3262 = vshll.u32 %v3175, 16
      %v3264 = vrot.slane %v3262, 1
      %v3265 = vor.u32 %v3260, %v3264
      %v3267 = vshll.u32 %v3207, 16
      %v3269 = vrot.slane %v3267, 1
      %v3270 = vsel %vm597, %v3265, %v3269
      %v3272 = vshrl.u32 %v3176, 16
      %v3274 = vshll.u32 %v3176, 16
      %v3276 = vrot.slane %v3274, 1
      %v3277 = vor.u32 %v3272, %v3276
      %v3279 = vshll.u32 %v3208, 16
      %v3281 = vrot.slane %v3279, 1
      %v3282 = vsel %vm597, %v3277, %v3281
      %v3284 = vshrl.u32 %v3177, 16
      %v3286 = vshll.u32 %v3177, 16
      %v3288 = vrot.slane %v3286, 1
      %v3289 = vor.u32 %v3284, %v3288
      %v3291 = vshll.u32 %v3209, 16
      %v3293 = vrot.slane %v3291, 1
      %v3294 = vsel %vm597, %v3289, %v3293
      %v3296 = vshrl.u32 %v3178, 16
      %v3298 = vshll.u32 %v3178, 16
      %v3300 = vrot.slane %v3298, 1
      %v3301 = vor.u32 %v3296, %v3300
      %v3303 = vshll.u32 %v3210, 16
      %v3305 = vrot.slane %v3303, 1
      %v3306 = vsel %vm597, %v3301, %v3305
      %v3315 = vrot.slane %v3171, 1
      %v3316 = vrot.slane %v3203, 1
      %v3317 = vsel %vm728, %v3315, %v3316
      %v3318 = vrot.slane %v3172, 1
      %v3319 = vrot.slane %v3204, 1
      %v3320 = vsel %vm728, %v3318, %v3319
      %v3321 = vrot.slane %v3173, 1
      %v3322 = vrot.slane %v3205, 1
      %v3323 = vsel %vm728, %v3321, %v3322
      %v3324 = vrot.slane %v3174, 1
      %v3325 = vrot.slane %v3206, 1
      %v3326 = vsel %vm728, %v3324, %v3325
      %v3327 = vrot.slane %v3175, 1
      %v3328 = vrot.slane %v3207, 1
      %v3329 = vsel %vm728, %v3327, %v3328
      %v3330 = vrot.slane %v3176, 1
      %v3331 = vrot.slane %v3208, 1
      %v3332 = vsel %vm728, %v3330, %v3331
      %v3333 = vrot.slane %v3177, 1
      %v3334 = vrot.slane %v3209, 1
      %v3335 = vsel %vm728, %v3333, %v3334
      %v3336 = vrot.slane %v3178, 1
      %v3337 = vrot.slane %v3210, 1
      %v3338 = vsel %vm728, %v3336, %v3337
      %v3347 = vld [vmem:[%s5] sm:$0xf]
      %v3348 = vld [vmem:[%s5 + $0x4] sm:$0xf]
      %v3349 = vld [vmem:[%s5 + $0x8] sm:$0xf]
      %v3350 = vld [vmem:[%s5 + $0xc] sm:$0xf]
      %v3351 = vld [vmem:[%s5 + $0x10] sm:$0xf]
      %v3352 = vld [vmem:[%s5 + $0x14] sm:$0xf]
      %v3353 = vld [vmem:[%s5 + $0x18] sm:$0xf]
      %v3354 = vld [vmem:[%s5 + $0x1c] sm:$0xf]
      %v3355 = vld [vmem:[%s5 + $0x20] sm:$0xf]
      %v3356 = vld [vmem:[%s5 + $0x24] sm:$0xf]
      %v3357 = vld [vmem:[%s5 + $0x28] sm:$0xf]
      %v3358 = vld [vmem:[%s5 + $0x2c] sm:$0xf]
      %v3359 = vld [vmem:[%s5 + $0x30] sm:$0xf]
      %v3360 = vld [vmem:[%s5 + $0x34] sm:$0xf]
      %v3361 = vld [vmem:[%s5 + $0x38] sm:$0xf]
      %v3362 = vld [vmem:[%s5 + $0x3c] sm:$0xf]
      %v3363 = vld [vmem:[%s5 + $0x40] sm:$0xf]
      %v3364 = vld [vmem:[%s5 + $0x44] sm:$0xf]
      %v3365 = vld [vmem:[%s5 + $0x48] sm:$0xf]
      %v3366 = vld [vmem:[%s5 + $0x4c] sm:$0xf]
      %v3367 = vld [vmem:[%s5 + $0x50] sm:$0xf]
      %v3368 = vld [vmem:[%s5 + $0x54] sm:$0xf]
      %v3369 = vld [vmem:[%s5 + $0x58] sm:$0xf]
      %v3370 = vld [vmem:[%s5 + $0x5c] sm:$0xf]
      %v3371 = vld [vmem:[%s5 + $0x60] sm:$0xf]
      %v3372 = vld [vmem:[%s5 + $0x64] sm:$0xf]
      %v3373 = vld [vmem:[%s5 + $0x68] sm:$0xf]
      %v3374 = vld [vmem:[%s5 + $0x6c] sm:$0xf]
      %v3375 = vld [vmem:[%s5 + $0x70] sm:$0xf]
      %v3376 = vld [vmem:[%s5 + $0x74] sm:$0xf]
      %v3377 = vld [vmem:[%s5 + $0x78] sm:$0xf]
      %v3378 = vld [vmem:[%s5 + $0x7c] sm:$0xf]
      %v3379 = vld [vmem:[%s5 + $0x80] sm:$0xf]
      %v3380 = vld [vmem:[%s5 + $0x84] sm:$0xf]
      %v3381 = vld [vmem:[%s5 + $0x88] sm:$0xf]
      %v3382 = vld [vmem:[%s5 + $0x8c] sm:$0xf]
      %v3383 = vld [vmem:[%s5 + $0x90] sm:$0xf]
      %v3384 = vld [vmem:[%s5 + $0x94] sm:$0xf]
      %v3385 = vld [vmem:[%s5 + $0x98] sm:$0xf]
      %v3386 = vld [vmem:[%s5 + $0x9c] sm:$0xf]
      %v3387 = vld [vmem:[%s5 + $0xa0] sm:$0xf]
      %v3388 = vld [vmem:[%s5 + $0xa4] sm:$0xf]
      %v3389 = vld [vmem:[%s5 + $0xa8] sm:$0xf]
      %v3390 = vld [vmem:[%s5 + $0xac] sm:$0xf]
      %v3391 = vld [vmem:[%s5 + $0xb0] sm:$0xf]
      %v3392 = vld [vmem:[%s5 + $0xb4] sm:$0xf]
      %v3393 = vld [vmem:[%s5 + $0xb8] sm:$0xf]
      %v3394 = vld [vmem:[%s5 + $0xbc] sm:$0xf]
      %s3395 = scalar_lea.vmem [#allocation3], 12
      %v3396 = vld [vmem:[%s3395] sm:$0xf]
      %v3397 = vld [vmem:[%s3395 + $0x4] sm:$0xf]
      %v3398 = vld [vmem:[%s3395 + $0x8] sm:$0x1]
      %v3399 = vld [vmem:[%s3395 + $0xc] sm:$0xf]
      %v3400 = vld [vmem:[%s3395 + $0x10] sm:$0xf]
      %v3401 = vld [vmem:[%s3395 + $0x14] sm:$0x1]
      %v3402 = vld [vmem:[%s3395 + $0x18] sm:$0xf]
      %v3403 = vld [vmem:[%s3395 + $0x1c] sm:$0xf]
      %v3404 = vld [vmem:[%s3395 + $0x20] sm:$0x1]
      %v3405 = vld [vmem:[%s3395 + $0x24] sm:$0xf]
      %v3406 = vld [vmem:[%s3395 + $0x28] sm:$0xf]
      %v3407 = vld [vmem:[%s3395 + $0x2c] sm:$0x1]
      %v3408 = vld [vmem:[%s3395 + $0x30] sm:$0xf]
      %v3409 = vld [vmem:[%s3395 + $0x34] sm:$0xf]
      %v3410 = vld [vmem:[%s3395 + $0x38] sm:$0x1]
      %v3411 = vld [vmem:[%s3395 + $0x3c] sm:$0xf]
      %v3412 = vld [vmem:[%s3395 + $0x40] sm:$0xf]
      %v3413 = vld [vmem:[%s3395 + $0x44] sm:$0x1]
      %v3414 = vld [vmem:[%s3395 + $0x48] sm:$0xf]
      %v3415 = vld [vmem:[%s3395 + $0x4c] sm:$0xf]
      %v3416 = vld [vmem:[%s3395 + $0x50] sm:$0x1]
      %v3417 = vld [vmem:[%s3395 + $0x54] sm:$0xf]
      %v3418 = vld [vmem:[%s3395 + $0x58] sm:$0xf]
      %v3419 = vld [vmem:[%s3395 + $0x5c] sm:$0x1]
      %v3436 = vunpack.c.l.b16 %v3396
      %v3437 = vunpack.c.l.b16 %v3397
      %v3438 = vunpack.c.l.b16 %v3399
      %v3439 = vunpack.c.l.b16 %v3400
      %v3440 = vunpack.c.l.b16 %v3402
      %v3441 = vunpack.c.l.b16 %v3403
      %v3442 = vunpack.c.l.b16 %v3405
      %v3443 = vunpack.c.l.b16 %v3406
      %v3444 = vunpack.c.l.b16 %v3408
      %v3445 = vunpack.c.l.b16 %v3409
      %v3446 = vunpack.c.l.b16 %v3411
      %v3447 = vunpack.c.l.b16 %v3412
      %v3448 = vunpack.c.l.b16 %v3414
      %v3449 = vunpack.c.l.b16 %v3415
      %v3450 = vunpack.c.l.b16 %v3417
      %v3451 = vunpack.c.l.b16 %v3418
      %v3452 = vpack.c.b16 %v3437, %v3436
      %v3453 = vpack.c.b16 %v3439, %v3438
      %v3454 = vpack.c.b16 %v3441, %v3440
      %v3455 = vpack.c.b16 %v3443, %v3442
      %v3456 = vpack.c.b16 %v3445, %v3444
      %v3457 = vpack.c.b16 %v3447, %v3446
      %v3458 = vpack.c.b16 %v3449, %v3448
      %v3459 = vpack.c.b16 %v3451, %v3450
      %v3476 = vunpack.c.l.b16 %v3398
      %v3477 = vunpack.c.l.b16 %v3401
      %v3478 = vunpack.c.l.b16 %v3404
      %v3479 = vunpack.c.l.b16 %v3407
      %v3480 = vunpack.c.l.b16 %v3410
      %v3481 = vunpack.c.l.b16 %v3413
      %v3482 = vunpack.c.l.b16 %v3416
      %v3483 = vunpack.c.l.b16 %v3419
      %v3484 = vpack.c.b16 %v3476, %v3476
      %v3485 = vpack.c.b16 %v3477, %v3477
      %v3486 = vpack.c.b16 %v3478, %v3478
      %v3487 = vpack.c.b16 %v3479, %v3479
      %v3488 = vpack.c.b16 %v3480, %v3480
      %v3489 = vpack.c.b16 %v3481, %v3481
      %v3490 = vpack.c.b16 %v3482, %v3482
      %v3491 = vpack.c.b16 %v3483, %v3483
      %v3493 = vshrl.u32 %v3452, 16
      %v3495 = vshll.u32 %v3452, 16
      %v3497 = vrot.slane %v3495, 1
      %v3498 = vor.u32 %v3493, %v3497
      %v3500 = vshll.u32 %v3484, 16
      %v3502 = vrot.slane %v3500, 1
      %v3503 = vsel %vm597, %v3498, %v3502
      %v3505 = vshrl.u32 %v3453, 16
      %v3507 = vshll.u32 %v3453, 16
      %v3509 = vrot.slane %v3507, 1
      %v3510 = vor.u32 %v3505, %v3509
      %v3512 = vshll.u32 %v3485, 16
      %v3514 = vrot.slane %v3512, 1
      %v3515 = vsel %vm597, %v3510, %v3514
      %v3517 = vshrl.u32 %v3454, 16
      %v3519 = vshll.u32 %v3454, 16
      %v3521 = vrot.slane %v3519, 1
      %v3522 = vor.u32 %v3517, %v3521
      %v3524 = vshll.u32 %v3486, 16
      %v3526 = vrot.slane %v3524, 1
      %v3527 = vsel %vm597, %v3522, %v3526
      %v3529 = vshrl.u32 %v3455, 16
      %v3531 = vshll.u32 %v3455, 16
      %v3533 = vrot.slane %v3531, 1
      %v3534 = vor.u32 %v3529, %v3533
      %v3536 = vshll.u32 %v3487, 16
      %v3538 = vrot.slane %v3536, 1
      %v3539 = vsel %vm597, %v3534, %v3538
      %v3541 = vshrl.u32 %v3456, 16
      %v3543 = vshll.u32 %v3456, 16
      %v3545 = vrot.slane %v3543, 1
      %v3546 = vor.u32 %v3541, %v3545
      %v3548 = vshll.u32 %v3488, 16
      %v3550 = vrot.slane %v3548, 1
      %v3551 = vsel %vm597, %v3546, %v3550
      %v3553 = vshrl.u32 %v3457, 16
      %v3555 = vshll.u32 %v3457, 16
      %v3557 = vrot.slane %v3555, 1
      %v3558 = vor.u32 %v3553, %v3557
      %v3560 = vshll.u32 %v3489, 16
      %v3562 = vrot.slane %v3560, 1
      %v3563 = vsel %vm597, %v3558, %v3562
      %v3565 = vshrl.u32 %v3458, 16
      %v3567 = vshll.u32 %v3458, 16
      %v3569 = vrot.slane %v3567, 1
      %v3570 = vor.u32 %v3565, %v3569
      %v3572 = vshll.u32 %v3490, 16
      %v3574 = vrot.slane %v3572, 1
      %v3575 = vsel %vm597, %v3570, %v3574
      %v3577 = vshrl.u32 %v3459, 16
      %v3579 = vshll.u32 %v3459, 16
      %v3581 = vrot.slane %v3579, 1
      %v3582 = vor.u32 %v3577, %v3581
      %v3584 = vshll.u32 %v3491, 16
      %v3586 = vrot.slane %v3584, 1
      %v3587 = vsel %vm597, %v3582, %v3586
      %v3596 = vrot.slane %v3452, 1
      %v3597 = vrot.slane %v3484, 1
      %v3598 = vsel %vm728, %v3596, %v3597
      %v3599 = vrot.slane %v3453, 1
      %v3600 = vrot.slane %v3485, 1
      %v3601 = vsel %vm728, %v3599, %v3600
      %v3602 = vrot.slane %v3454, 1
      %v3603 = vrot.slane %v3486, 1
      %v3604 = vsel %vm728, %v3602, %v3603
      %v3605 = vrot.slane %v3455, 1
      %v3606 = vrot.slane %v3487, 1
      %v3607 = vsel %vm728, %v3605, %v3606
      %v3608 = vrot.slane %v3456, 1
      %v3609 = vrot.slane %v3488, 1
      %v3610 = vsel %vm728, %v3608, %v3609
      %v3611 = vrot.slane %v3457, 1
      %v3612 = vrot.slane %v3489, 1
      %v3613 = vsel %vm728, %v3611, %v3612
      %v3614 = vrot.slane %v3458, 1
      %v3615 = vrot.slane %v3490, 1
      %v3616 = vsel %vm728, %v3614, %v3615
      %v3617 = vrot.slane %v3459, 1
      %v3618 = vrot.slane %v3491, 1
      %v3619 = vsel %vm728, %v3617, %v3618
      %s3628 = scalar_lea.vmem %s5, 192
      %v3629 = vld [vmem:[%s3628] sm:$0xf]
      %v3630 = vld [vmem:[%s3628 + $0x4] sm:$0xf]
      %v3631 = vld [vmem:[%s3628 + $0x8] sm:$0xf]
      %v3632 = vld [vmem:[%s3628 + $0xc] sm:$0xf]
      %v3633 = vld [vmem:[%s3628 + $0x10] sm:$0xf]
      %v3634 = vld [vmem:[%s3628 + $0x14] sm:$0xf]
      %v3635 = vld [vmem:[%s3628 + $0x18] sm:$0xf]
      %v3636 = vld [vmem:[%s3628 + $0x1c] sm:$0xf]
      %v3637 = vld [vmem:[%s3628 + $0x20] sm:$0xf]
      %v3638 = vld [vmem:[%s3628 + $0x24] sm:$0xf]
      %v3639 = vld [vmem:[%s3628 + $0x28] sm:$0xf]
      %v3640 = vld [vmem:[%s3628 + $0x2c] sm:$0xf]
      %v3641 = vld [vmem:[%s3628 + $0x30] sm:$0xf]
      %v3642 = vld [vmem:[%s3628 + $0x34] sm:$0xf]
      %v3643 = vld [vmem:[%s3628 + $0x38] sm:$0xf]
      %v3644 = vld [vmem:[%s3628 + $0x3c] sm:$0xf]
      %v3645 = vld [vmem:[%s3628 + $0x40] sm:$0xf]
      %v3646 = vld [vmem:[%s3628 + $0x44] sm:$0xf]
      %v3647 = vld [vmem:[%s3628 + $0x48] sm:$0xf]
      %v3648 = vld [vmem:[%s3628 + $0x4c] sm:$0xf]
      %v3649 = vld [vmem:[%s3628 + $0x50] sm:$0xf]
      %v3650 = vld [vmem:[%s3628 + $0x54] sm:$0xf]
      %v3651 = vld [vmem:[%s3628 + $0x58] sm:$0xf]
      %v3652 = vld [vmem:[%s3628 + $0x5c] sm:$0xf]
      %v3653 = vld [vmem:[%s3628 + $0x60] sm:$0xf]
      %v3654 = vld [vmem:[%s3628 + $0x64] sm:$0xf]
      %v3655 = vld [vmem:[%s3628 + $0x68] sm:$0xf]
      %v3656 = vld [vmem:[%s3628 + $0x6c] sm:$0xf]
      %v3657 = vld [vmem:[%s3628 + $0x70] sm:$0xf]
      %v3658 = vld [vmem:[%s3628 + $0x74] sm:$0xf]
      %v3659 = vld [vmem:[%s3628 + $0x78] sm:$0xf]
      %v3660 = vld [vmem:[%s3628 + $0x7c] sm:$0xf]
      %v3661 = vld [vmem:[%s3628 + $0x80] sm:$0xf]
      %v3662 = vld [vmem:[%s3628 + $0x84] sm:$0xf]
      %v3663 = vld [vmem:[%s3628 + $0x88] sm:$0xf]
      %v3664 = vld [vmem:[%s3628 + $0x8c] sm:$0xf]
      %v3665 = vld [vmem:[%s3628 + $0x90] sm:$0xf]
      %v3666 = vld [vmem:[%s3628 + $0x94] sm:$0xf]
      %v3667 = vld [vmem:[%s3628 + $0x98] sm:$0xf]
      %v3668 = vld [vmem:[%s3628 + $0x9c] sm:$0xf]
      %v3669 = vld [vmem:[%s3628 + $0xa0] sm:$0xf]
      %v3670 = vld [vmem:[%s3628 + $0xa4] sm:$0xf]
      %v3671 = vld [vmem:[%s3628 + $0xa8] sm:$0xf]
      %v3672 = vld [vmem:[%s3628 + $0xac] sm:$0xf]
      %v3673 = vld [vmem:[%s3628 + $0xb0] sm:$0xf]
      %v3674 = vld [vmem:[%s3628 + $0xb4] sm:$0xf]
      %v3675 = vld [vmem:[%s3628 + $0xb8] sm:$0xf]
      %v3676 = vld [vmem:[%s3628 + $0xbc] sm:$0xf]
      %v3725 = vunpack.c.l.b16 %v3629
      %v3726 = vunpack.c.l.b16 %v3630
      %v3727 = vunpack.c.l.b16 %v3631
      %v3728 = vunpack.c.l.b16 %v3632
      %v3729 = vunpack.c.l.b16 %v3633
      %v3730 = vunpack.c.l.b16 %v3634
      %v3731 = vunpack.c.l.b16 %v3635
      %v3732 = vunpack.c.l.b16 %v3636
      %v3733 = vunpack.c.l.b16 %v3637
      %v3734 = vunpack.c.l.b16 %v3638
      %v3735 = vunpack.c.l.b16 %v3639
      %v3736 = vunpack.c.l.b16 %v3640
      %v3737 = vunpack.c.l.b16 %v3641
      %v3738 = vunpack.c.l.b16 %v3642
      %v3739 = vunpack.c.l.b16 %v3643
      %v3740 = vunpack.c.l.b16 %v3644
      %v3741 = vunpack.c.l.b16 %v3645
      %v3742 = vunpack.c.l.b16 %v3646
      %v3743 = vunpack.c.l.b16 %v3647
      %v3744 = vunpack.c.l.b16 %v3648
      %v3745 = vunpack.c.l.b16 %v3649
      %v3746 = vunpack.c.l.b16 %v3650
      %v3747 = vunpack.c.l.b16 %v3651
      %v3748 = vunpack.c.l.b16 %v3652
      %v3749 = vunpack.c.l.b16 %v3653
      %v3750 = vunpack.c.l.b16 %v3654
      %v3751 = vunpack.c.l.b16 %v3655
      %v3752 = vunpack.c.l.b16 %v3656
      %v3753 = vunpack.c.l.b16 %v3657
      %v3754 = vunpack.c.l.b16 %v3658
      %v3755 = vunpack.c.l.b16 %v3659
      %v3756 = vunpack.c.l.b16 %v3660
      %v3757 = vunpack.c.l.b16 %v3661
      %v3758 = vunpack.c.l.b16 %v3662
      %v3759 = vunpack.c.l.b16 %v3663
      %v3760 = vunpack.c.l.b16 %v3664
      %v3761 = vunpack.c.l.b16 %v3665
      %v3762 = vunpack.c.l.b16 %v3666
      %v3763 = vunpack.c.l.b16 %v3667
      %v3764 = vunpack.c.l.b16 %v3668
      %v3765 = vunpack.c.l.b16 %v3669
      %v3766 = vunpack.c.l.b16 %v3670
      %v3767 = vunpack.c.l.b16 %v3671
      %v3768 = vunpack.c.l.b16 %v3672
      %v3769 = vunpack.c.l.b16 %v3673
      %v3770 = vunpack.c.l.b16 %v3674
      %v3771 = vunpack.c.l.b16 %v3675
      %v3772 = vunpack.c.l.b16 %v3676
      %v3773 = vpack.c.b16 %v3726, %v3725
      %v3774 = vpack.c.b16 %v3728, %v3727
      %v3775 = vpack.c.b16 %v3730, %v3729
      %v3776 = vpack.c.b16 %v3732, %v3731
      %v3777 = vpack.c.b16 %v3734, %v3733
      %v3778 = vpack.c.b16 %v3736, %v3735
      %v3779 = vpack.c.b16 %v3738, %v3737
      %v3780 = vpack.c.b16 %v3740, %v3739
      %v3781 = vpack.c.b16 %v3742, %v3741
      %v3782 = vpack.c.b16 %v3744, %v3743
      %v3783 = vpack.c.b16 %v3746, %v3745
      %v3784 = vpack.c.b16 %v3748, %v3747
      %v3785 = vpack.c.b16 %v3750, %v3749
      %v3786 = vpack.c.b16 %v3752, %v3751
      %v3787 = vpack.c.b16 %v3754, %v3753
      %v3788 = vpack.c.b16 %v3756, %v3755
      %v3789 = vpack.c.b16 %v3758, %v3757
      %v3790 = vpack.c.b16 %v3760, %v3759
      %v3791 = vpack.c.b16 %v3762, %v3761
      %v3792 = vpack.c.b16 %v3764, %v3763
      %v3793 = vpack.c.b16 %v3766, %v3765
      %v3794 = vpack.c.b16 %v3768, %v3767
      %v3795 = vpack.c.b16 %v3770, %v3769
      %v3796 = vpack.c.b16 %v3772, %v3771
      %3821 = vmatprep.subr.bf16.mxu0 0
      %3822 = vmatpush1.bf16.msra.mxu0 %v3773
      %3823 = vmatprep.subr.bf16.mxu0 0
      %3824 = vmatpush1.bf16.msra.mxu0 %v3774
      %3825 = vmatprep.subr.bf16.mxu0 0
      %3826 = vmatpush1.bf16.msra.mxu0 %v3775
      %3827 = vmatprep.subr.bf16.mxu0 0
      %3828 = vmatpush1.bf16.msra.mxu0 %v3776
      %3829 = vmatprep.subr.bf16.mxu0 0
      %3830 = vmatpush1.bf16.msra.mxu0 %v3777
      %3831 = vmatprep.subr.bf16.mxu0 0
      %3832 = vmatpush1.bf16.msra.mxu0 %v3778
      %3833 = vmatprep.subr.bf16.mxu0 0
      %3834 = vmatpush1.bf16.msra.mxu0 %v3779
      %3835 = vmatprep.subr.bf16.mxu0 0
      %3836 = vmatpush1.bf16.msra.mxu0 %v3780
      %3837 = vmatprep.subr.bf16.mxu0 0
      %3838 = vmatpush1.bf16.msra.mxu0 %v3781
      %3839 = vmatprep.subr.bf16.mxu0 0
      %3840 = vmatpush1.bf16.msra.mxu0 %v3782
      %3841 = vmatprep.subr.bf16.mxu0 0
      %3842 = vmatpush1.bf16.msra.mxu0 %v3783
      %3843 = vmatprep.subr.bf16.mxu0 0
      %3844 = vmatpush1.bf16.msra.mxu0 %v3784
      %3845 = vmatprep.subr.bf16.mxu0 0
      %3846 = vmatpush1.bf16.msra.mxu0 %v3785
      %3847 = vmatprep.subr.bf16.mxu0 0
      %3848 = vmatpush1.bf16.msra.mxu0 %v3786
      %3849 = vmatprep.subr.bf16.mxu0 0
      %3850 = vmatpush1.bf16.msra.mxu0 %v3787
      %3851 = vmatprep.subr.bf16.mxu0 0
      %3852 = vmatpush1.bf16.msra.mxu0 %v3788
      %3853 = vmatprep.mubr.bf16.mxu0 %v3503
      %3854 = vmatmul.mubr.bf16.gmra.mrb[0].mxu0 %v3452
      %v3855 = vpop.f32.mrb[0].mxu0
      %v3856 = vadd.f32 0.0, %v3855
      %v3857 = vpop.f32.mrb[0].mxu0
      %v3858 = vpop.f32.mrb[0].mxu0
      %v3859 = vadd.f32 0.0, %v3858
      %v3860 = vpop.f32.mrb[0].mxu0
      %3861 = vmatprep.mubr.bf16.mxu0 %v3515
      %3862 = vmatmul.mubr.bf16.gmra.mrb[0].mxu0 %v3453
      %v3863 = vpop.f32.mrb[0].mxu0
      %v3864 = vadd.f32 0.0, %v3863
      %v3865 = vpop.f32.mrb[0].mxu0
      %v3866 = vpop.f32.mrb[0].mxu0
      %v3867 = vadd.f32 0.0, %v3866
      %v3868 = vpop.f32.mrb[0].mxu0
      %3869 = vmatprep.mubr.bf16.mxu0 %v3527
      %3870 = vmatmul.mubr.bf16.gmra.mrb[0].mxu0 %v3454
      %v3871 = vpop.f32.mrb[0].mxu0
      %v3872 = vadd.f32 0.0, %v3871
      %v3873 = vpop.f32.mrb[0].mxu0
      %v3874 = vpop.f32.mrb[0].mxu0
      %v3875 = vadd.f32 0.0, %v3874
      %v3876 = vpop.f32.mrb[0].mxu0
      %3877 = vmatprep.mubr.bf16.mxu0 %v3539
      %3878 = vmatmul.mubr.bf16.gmra.mrb[0].mxu0 %v3455
      %v3879 = vpop.f32.mrb[0].mxu0
      %v3880 = vadd.f32 0.0, %v3879
      %v3881 = vpop.f32.mrb[0].mxu0
      %v3882 = vpop.f32.mrb[0].mxu0
      %v3883 = vadd.f32 0.0, %v3882
      %v3884 = vpop.f32.mrb[0].mxu0
      %3885 = vmatprep.mubr.bf16.mxu0 %v3551
      %3886 = vmatmul.mubr.bf16.gmra.mrb[0].mxu0 %v3456
      %v3887 = vpop.f32.mrb[0].mxu0
      %v3888 = vadd.f32 0.0, %v3887
      %v3889 = vpop.f32.mrb[0].mxu0
      %v3890 = vpop.f32.mrb[0].mxu0
      %v3891 = vadd.f32 0.0, %v3890
      %v3892 = vpop.f32.mrb[0].mxu0
      %3893 = vmatprep.mubr.bf16.mxu0 %v3563
      %3894 = vmatmul.mubr.bf16.gmra.mrb[0].mxu0 %v3457
      %v3895 = vpop.f32.mrb[0].mxu0
      %v3896 = vadd.f32 0.0, %v3895
      %v3897 = vpop.f32.mrb[0].mxu0
      %v3898 = vpop.f32.mrb[0].mxu0
      %v3899 = vadd.f32 0.0, %v3898
      %v3900 = vpop.f32.mrb[0].mxu0
      %3901 = vmatprep.mubr.bf16.mxu0 %v3575
      %3902 = vmatmul.mubr.bf16.gmra.mrb[0].mxu0 %v3458
      %v3903 = vpop.f32.mrb[0].mxu0
      %v3904 = vadd.f32 0.0, %v3903
      %v3905 = vpop.f32.mrb[0].mxu0
      %v3906 = vpop.f32.mrb[0].mxu0
      %v3907 = vadd.f32 0.0, %v3906
      %v3908 = vpop.f32.mrb[0].mxu0
      %3909 = vmatprep.mubr.bf16.mxu0 %v3587
      %3910 = vmatmul.mubr.bf16.gmra.mrb[0].mxu0 %v3459
      %v3911 = vpop.f32.mrb[0].mxu0
      %v3912 = vadd.f32 0.0, %v3911
      %v3913 = vpop.f32.mrb[0].mxu0
      %v3914 = vpop.f32.mrb[0].mxu0
      %v3915 = vadd.f32 0.0, %v3914
      %v3916 = vpop.f32.mrb[0].mxu0
      %3917 = vdwg.mxu0
      %3918 = vmatprep.subr.bf16.mxu0 0
      %3919 = vmatpush1.bf16.msra.mxu0 %v3789
      %3920 = vmatprep.subr.bf16.mxu0 0
      %3921 = vmatpush1.bf16.msra.mxu0 %v3790
      %3922 = vmatprep.subr.bf16.mxu0 0
      %3923 = vmatpush1.bf16.msra.mxu0 %v3791
      %3924 = vmatprep.subr.bf16.mxu0 0
      %3925 = vmatpush1.bf16.msra.mxu0 %v3792
      %3926 = vmatprep.subr.bf16.mxu0 0
      %3927 = vmatpush1.bf16.msra.mxu0 %v3793
      %3928 = vmatprep.subr.bf16.mxu0 0
      %3929 = vmatpush1.bf16.msra.mxu0 %v3794
      %3930 = vmatprep.subr.bf16.mxu0 0
      %3931 = vmatpush1.bf16.msra.mxu0 %v3795
      %3932 = vmatprep.subr.bf16.mxu0 0
      %3933 = vmatpush1.bf16.msra.mxu0 %v3796
      %3934 = vmatprep.subr.bf16.mxu0 0
      %3935 = vmatpush1.bf16.msra.mxu0 0
      %3936 = vmatprep.subr.bf16.mxu0 0
      %3937 = vmatpush1.bf16.msra.mxu0 0
      %3938 = vmatprep.subr.bf16.mxu0 0
      %3939 = vmatpush1.bf16.msra.mxu0 0
      %3940 = vmatprep.subr.bf16.mxu0 0
      %3941 = vmatpush1.bf16.msra.mxu0 0
      %3942 = vmatprep.subr.bf16.mxu0 0
      %3943 = vmatpush1.bf16.msra.mxu0 0
      %3944 = vmatprep.subr.bf16.mxu0 0
      %3945 = vmatpush1.bf16.msra.mxu0 0
      %3946 = vmatprep.subr.bf16.mxu0 0
      %3947 = vmatpush1.bf16.msra.mxu0 0
      %3948 = vmatprep.subr.bf16.mxu0 0
      %3949 = vmatpush1.bf16.msra.mxu0 0
      %3950 = vmatprep.mubr.bf16.mxu0 0
      %3951 = vmatmul.mubr.bf16.gmra.mrb[0].mxu0 %v3598
      %v3952 = vpop.f32.mrb[0].mxu0
      %v3953 = vadd.f32 %v3856, %v3952
      %v3954 = vpop.f32.mrb[0].mxu0
      %v3955 = vpop.f32.mrb[0].mxu0
      %v3956 = vadd.f32 %v3859, %v3955
      %v3957 = vpop.f32.mrb[0].mxu0
      %3958 = vmatprep.mubr.bf16.mxu0 0
      %3959 = vmatmul.mubr.bf16.gmra.mrb[0].mxu0 %v3601
      %v3960 = vpop.f32.mrb[0].mxu0
      %v3961 = vadd.f32 %v3864, %v3960
      %v3962 = vpop.f32.mrb[0].mxu0
      %v3963 = vpop.f32.mrb[0].mxu0
      %v3964 = vadd.f32 %v3867, %v3963
      %v3965 = vpop.f32.mrb[0].mxu0
      %3966 = vmatprep.mubr.bf16.mxu0 0
      %3967 = vmatmul.mubr.bf16.gmra.mrb[0].mxu0 %v3604
      %v3968 = vpop.f32.mrb[0].mxu0
      %v3969 = vadd.f32 %v3872, %v3968
      %v3970 = vpop.f32.mrb[0].mxu0
      %v3971 = vpop.f32.mrb[0].mxu0
      %v3972 = vadd.f32 %v3875, %v3971
      %v3973 = vpop.f32.mrb[0].mxu0
      %3974 = vmatprep.mubr.bf16.mxu0 0
      %3975 = vmatmul.mubr.bf16.gmra.mrb[0].mxu0 %v3607
      %v3976 = vpop.f32.mrb[0].mxu0
      %v3977 = vadd.f32 %v3880, %v3976
      %v3978 = vpop.f32.mrb[0].mxu0
      %v3979 = vpop.f32.mrb[0].mxu0
      %v3980 = vadd.f32 %v3883, %v3979
      %v3981 = vpop.f32.mrb[0].mxu0
      %3982 = vmatprep.mubr.bf16.mxu0 0
      %3983 = vmatmul.mubr.bf16.gmra.mrb[0].mxu0 %v3610
      %v3984 = vpop.f32.mrb[0].mxu0
      %v3985 = vadd.f32 %v3888, %v3984
      %v3986 = vpop.f32.mrb[0].mxu0
      %v3987 = vpop.f32.mrb[0].mxu0
      %v3988 = vadd.f32 %v3891, %v3987
      %v3989 = vpop.f32.mrb[0].mxu0
      %3990 = vmatprep.mubr.bf16.mxu0 0
      %3991 = vmatmul.mubr.bf16.gmra.mrb[0].mxu0 %v3613
      %v3992 = vpop.f32.mrb[0].mxu0
      %v3993 = vadd.f32 %v3896, %v3992
      %v3994 = vpop.f32.mrb[0].mxu0
      %v3995 = vpop.f32.mrb[0].mxu0
      %v3996 = vadd.f32 %v3899, %v3995
      %v3997 = vpop.f32.mrb[0].mxu0
      %3998 = vmatprep.mubr.bf16.mxu0 0
      %3999 = vmatmul.mubr.bf16.gmra.mrb[0].mxu0 %v3616
      %v4000 = vpop.f32.mrb[0].mxu0
      %v4001 = vadd.f32 %v3904, %v4000
      %v4002 = vpop.f32.mrb[0].mxu0
      %v4003 = vpop.f32.mrb[0].mxu0
      %v4004 = vadd.f32 %v3907, %v4003
      %v4005 = vpop.f32.mrb[0].mxu0
      %4006 = vmatprep.mubr.bf16.mxu0 0
      %4007 = vmatmul.mubr.bf16.gmra.mrb[0].mxu0 %v3619
      %v4008 = vpop.f32.mrb[0].mxu0
      %v4009 = vadd.f32 %v3912, %v4008
      %v4010 = vpop.f32.mrb[0].mxu0
      %v4011 = vpop.f32.mrb[0].mxu0
      %v4012 = vadd.f32 %v3915, %v4011
      %v4013 = vpop.f32.mrb[0].mxu0
      %4014 = vdwg.mxu0
      %v4063 = vunpack.c.l.b16 %v3347
      %v4064 = vunpack.c.l.b16 %v3348
      %v4065 = vunpack.c.l.b16 %v3349
      %v4066 = vunpack.c.l.b16 %v3350
      %v4067 = vunpack.c.l.b16 %v3351
      %v4068 = vunpack.c.l.b16 %v3352
      %v4069 = vunpack.c.l.b16 %v3353
      %v4070 = vunpack.c.l.b16 %v3354
      %v4071 = vunpack.c.l.b16 %v3355
      %v4072 = vunpack.c.l.b16 %v3356
      %v4073 = vunpack.c.l.b16 %v3357
      %v4074 = vunpack.c.l.b16 %v3358
      %v4075 = vunpack.c.l.b16 %v3359
      %v4076 = vunpack.c.l.b16 %v3360
      %v4077 = vunpack.c.l.b16 %v3361
      %v4078 = vunpack.c.l.b16 %v3362
      %v4079 = vunpack.c.l.b16 %v3363
      %v4080 = vunpack.c.l.b16 %v3364
      %v4081 = vunpack.c.l.b16 %v3365
      %v4082 = vunpack.c.l.b16 %v3366
      %v4083 = vunpack.c.l.b16 %v3367
      %v4084 = vunpack.c.l.b16 %v3368
      %v4085 = vunpack.c.l.b16 %v3369
      %v4086 = vunpack.c.l.b16 %v3370
      %v4087 = vunpack.c.l.b16 %v3371
      %v4088 = vunpack.c.l.b16 %v3372
      %v4089 = vunpack.c.l.b16 %v3373
      %v4090 = vunpack.c.l.b16 %v3374
      %v4091 = vunpack.c.l.b16 %v3375
      %v4092 = vunpack.c.l.b16 %v3376
      %v4093 = vunpack.c.l.b16 %v3377
      %v4094 = vunpack.c.l.b16 %v3378
      %v4095 = vunpack.c.l.b16 %v3379
      %v4096 = vunpack.c.l.b16 %v3380
      %v4097 = vunpack.c.l.b16 %v3381
      %v4098 = vunpack.c.l.b16 %v3382
      %v4099 = vunpack.c.l.b16 %v3383
      %v4100 = vunpack.c.l.b16 %v3384
      %v4101 = vunpack.c.l.b16 %v3385
      %v4102 = vunpack.c.l.b16 %v3386
      %v4103 = vunpack.c.l.b16 %v3387
      %v4104 = vunpack.c.l.b16 %v3388
      %v4105 = vunpack.c.l.b16 %v3389
      %v4106 = vunpack.c.l.b16 %v3390
      %v4107 = vunpack.c.l.b16 %v3391
      %v4108 = vunpack.c.l.b16 %v3392
      %v4109 = vunpack.c.l.b16 %v3393
      %v4110 = vunpack.c.l.b16 %v3394
      %v4111 = vpack.c.b16 %v4064, %v4063
      %v4112 = vpack.c.b16 %v4066, %v4065
      %v4113 = vpack.c.b16 %v4068, %v4067
      %v4114 = vpack.c.b16 %v4070, %v4069
      %v4115 = vpack.c.b16 %v4072, %v4071
      %v4116 = vpack.c.b16 %v4074, %v4073
      %v4117 = vpack.c.b16 %v4076, %v4075
      %v4118 = vpack.c.b16 %v4078, %v4077
      %v4119 = vpack.c.b16 %v4080, %v4079
      %v4120 = vpack.c.b16 %v4082, %v4081
      %v4121 = vpack.c.b16 %v4084, %v4083
      %v4122 = vpack.c.b16 %v4086, %v4085
      %v4123 = vpack.c.b16 %v4088, %v4087
      %v4124 = vpack.c.b16 %v4090, %v4089
      %v4125 = vpack.c.b16 %v4092, %v4091
      %v4126 = vpack.c.b16 %v4094, %v4093
      %v4127 = vpack.c.b16 %v4096, %v4095
      %v4128 = vpack.c.b16 %v4098, %v4097
      %v4129 = vpack.c.b16 %v4100, %v4099
      %v4130 = vpack.c.b16 %v4102, %v4101
      %v4131 = vpack.c.b16 %v4104, %v4103
      %v4132 = vpack.c.b16 %v4106, %v4105
      %v4133 = vpack.c.b16 %v4108, %v4107
      %v4134 = vpack.c.b16 %v4110, %v4109
      %4159 = vmatprep.subr.bf16.mxu0 0
      %4160 = vmatpush1.bf16.msra.mxu0 %v4111
      %4161 = vmatprep.subr.bf16.mxu0 0
      %4162 = vmatpush1.bf16.msra.mxu0 %v4112
      %4163 = vmatprep.subr.bf16.mxu0 0
      %4164 = vmatpush1.bf16.msra.mxu0 %v4113
      %4165 = vmatprep.subr.bf16.mxu0 0
      %4166 = vmatpush1.bf16.msra.mxu0 %v4114
      %4167 = vmatprep.subr.bf16.mxu0 0
      %4168 = vmatpush1.bf16.msra.mxu0 %v4115
      %4169 = vmatprep.subr.bf16.mxu0 0
      %4170 = vmatpush1.bf16.msra.mxu0 %v4116
      %4171 = vmatprep.subr.bf16.mxu0 0
      %4172 = vmatpush1.bf16.msra.mxu0 %v4117
      %4173 = vmatprep.subr.bf16.mxu0 0
      %4174 = vmatpush1.bf16.msra.mxu0 %v4118
      %4175 = vmatprep.subr.bf16.mxu0 0
      %4176 = vmatpush1.bf16.msra.mxu0 %v4119
      %4177 = vmatprep.subr.bf16.mxu0 0
      %4178 = vmatpush1.bf16.msra.mxu0 %v4120
      %4179 = vmatprep.subr.bf16.mxu0 0
      %4180 = vmatpush1.bf16.msra.mxu0 %v4121
      %4181 = vmatprep.subr.bf16.mxu0 0
      %4182 = vmatpush1.bf16.msra.mxu0 %v4122
      %4183 = vmatprep.subr.bf16.mxu0 0
      %4184 = vmatpush1.bf16.msra.mxu0 %v4123
      %4185 = vmatprep.subr.bf16.mxu0 0
      %4186 = vmatpush1.bf16.msra.mxu0 %v4124
      %4187 = vmatprep.subr.bf16.mxu0 0
      %4188 = vmatpush1.bf16.msra.mxu0 %v4125
      %4189 = vmatprep.subr.bf16.mxu0 0
      %4190 = vmatpush1.bf16.msra.mxu0 %v4126
      %4191 = vmatprep.mubr.bf16.mxu0 %v3222
      %4192 = vmatmul.mubr.bf16.gmra.mrb[0].mxu0 %v3171
      %v4193 = vpop.f32.mrb[0].mxu0
      %v4194 = vadd.f32 %v3953, %v4193
      %v4195 = vpop.f32.mrb[0].mxu0
      %v4196 = vpop.f32.mrb[0].mxu0
      %v4197 = vadd.f32 %v3956, %v4196
      %v4198 = vpop.f32.mrb[0].mxu0
      %4199 = vmatprep.mubr.bf16.mxu0 %v3234
      %4200 = vmatmul.mubr.bf16.gmra.mrb[0].mxu0 %v3172
      %v4201 = vpop.f32.mrb[0].mxu0
      %v4202 = vadd.f32 %v3961, %v4201
      %v4203 = vpop.f32.mrb[0].mxu0
      %v4204 = vpop.f32.mrb[0].mxu0
      %v4205 = vadd.f32 %v3964, %v4204
      %v4206 = vpop.f32.mrb[0].mxu0
      %4207 = vmatprep.mubr.bf16.mxu0 %v3246
      %4208 = vmatmul.mubr.bf16.gmra.mrb[0].mxu0 %v3173
      %v4209 = vpop.f32.mrb[0].mxu0
      %v4210 = vadd.f32 %v3969, %v4209
      %v4211 = vpop.f32.mrb[0].mxu0
      %v4212 = vpop.f32.mrb[0].mxu0
      %v4213 = vadd.f32 %v3972, %v4212
      %v4214 = vpop.f32.mrb[0].mxu0
      %4215 = vmatprep.mubr.bf16.mxu0 %v3258
      %4216 = vmatmul.mubr.bf16.gmra.mrb[0].mxu0 %v3174
      %v4217 = vpop.f32.mrb[0].mxu0
      %v4218 = vadd.f32 %v3977, %v4217
      %v4219 = vpop.f32.mrb[0].mxu0
      %v4220 = vpop.f32.mrb[0].mxu0
      %v4221 = vadd.f32 %v3980, %v4220
      %v4222 = vpop.f32.mrb[0].mxu0
      %4223 = vmatprep.mubr.bf16.mxu0 %v3270
      %4224 = vmatmul.mubr.bf16.gmra.mrb[0].mxu0 %v3175
      %v4225 = vpop.f32.mrb[0].mxu0
      %v4226 = vadd.f32 %v3985, %v4225
      %v4227 = vpop.f32.mrb[0].mxu0
      %v4228 = vpop.f32.mrb[0].mxu0
      %v4229 = vadd.f32 %v3988, %v4228
      %v4230 = vpop.f32.mrb[0].mxu0
      %4231 = vmatprep.mubr.bf16.mxu0 %v3282
      %4232 = vmatmul.mubr.bf16.gmra.mrb[0].mxu0 %v3176
      %v4233 = vpop.f32.mrb[0].mxu0
      %v4234 = vadd.f32 %v3993, %v4233
      %v4235 = vpop.f32.mrb[0].mxu0
      %v4236 = vpop.f32.mrb[0].mxu0
      %v4237 = vadd.f32 %v3996, %v4236
      %v4238 = vpop.f32.mrb[0].mxu0
      %4239 = vmatprep.mubr.bf16.mxu0 %v3294
      %4240 = vmatmul.mubr.bf16.gmra.mrb[0].mxu0 %v3177
      %v4241 = vpop.f32.mrb[0].mxu0
      %v4242 = vadd.f32 %v4001, %v4241
      %v4243 = vpop.f32.mrb[0].mxu0
      %v4244 = vpop.f32.mrb[0].mxu0
      %v4245 = vadd.f32 %v4004, %v4244
      %v4246 = vpop.f32.mrb[0].mxu0
      %4247 = vmatprep.mubr.bf16.mxu0 %v3306
      %4248 = vmatmul.mubr.bf16.gmra.mrb[0].mxu0 %v3178
      %v4249 = vpop.f32.mrb[0].mxu0
      %v4250 = vadd.f32 %v4009, %v4249
      %v4251 = vpop.f32.mrb[0].mxu0
      %v4252 = vpop.f32.mrb[0].mxu0
      %v4253 = vadd.f32 %v4012, %v4252
      %v4254 = vpop.f32.mrb[0].mxu0
      %4255 = vdwg.mxu0
      %4256 = vmatprep.subr.bf16.mxu0 0
      %4257 = vmatpush1.bf16.msra.mxu0 %v4127
      %4258 = vmatprep.subr.bf16.mxu0 0
      %4259 = vmatpush1.bf16.msra.mxu0 %v4128
      %4260 = vmatprep.subr.bf16.mxu0 0
      %4261 = vmatpush1.bf16.msra.mxu0 %v4129
      %4262 = vmatprep.subr.bf16.mxu0 0
      %4263 = vmatpush1.bf16.msra.mxu0 %v4130
      %4264 = vmatprep.subr.bf16.mxu0 0
      %4265 = vmatpush1.bf16.msra.mxu0 %v4131
      %4266 = vmatprep.subr.bf16.mxu0 0
      %4267 = vmatpush1.bf16.msra.mxu0 %v4132
      %4268 = vmatprep.subr.bf16.mxu0 0
      %4269 = vmatpush1.bf16.msra.mxu0 %v4133
      %4270 = vmatprep.subr.bf16.mxu0 0
      %4271 = vmatpush1.bf16.msra.mxu0 %v4134
      %4272 = vmatprep.subr.bf16.mxu0 0
      %4273 = vmatpush1.bf16.msra.mxu0 0
      %4274 = vmatprep.subr.bf16.mxu0 0
      %4275 = vmatpush1.bf16.msra.mxu0 0
      %4276 = vmatprep.subr.bf16.mxu0 0
      %4277 = vmatpush1.bf16.msra.mxu0 0
      %4278 = vmatprep.subr.bf16.mxu0 0
      %4279 = vmatpush1.bf16.msra.mxu0 0
      %4280 = vmatprep.subr.bf16.mxu0 0
      %4281 = vmatpush1.bf16.msra.mxu0 0
      %4282 = vmatprep.subr.bf16.mxu0 0
      %4283 = vmatpush1.bf16.msra.mxu0 0
      %4284 = vmatprep.subr.bf16.mxu0 0
      %4285 = vmatpush1.bf16.msra.mxu0 0
      %4286 = vmatprep.subr.bf16.mxu0 0
      %4287 = vmatpush1.bf16.msra.mxu0 0
      %4288 = vmatprep.mubr.bf16.mxu0 0
      %4289 = vmatmul.mubr.bf16.gmra.mrb[0].mxu0 %v3317
      %v4290 = vpop.f32.mrb[0].mxu0
      %v4291 = vadd.f32 %v4194, %v4290
      %v4292 = vpop.f32.mrb[0].mxu0
      %v4293 = vpop.f32.mrb[0].mxu0
      %v4294 = vadd.f32 %v4197, %v4293
      %v4295 = vpop.f32.mrb[0].mxu0
      %4296 = vmatprep.mubr.bf16.mxu0 0
      %4297 = vmatmul.mubr.bf16.gmra.mrb[0].mxu0 %v3320
      %v4298 = vpop.f32.mrb[0].mxu0
      %v4299 = vadd.f32 %v4202, %v4298
      %v4300 = vpop.f32.mrb[0].mxu0
      %v4301 = vpop.f32.mrb[0].mxu0
      %v4302 = vadd.f32 %v4205, %v4301
      %v4303 = vpop.f32.mrb[0].mxu0
      %4304 = vmatprep.mubr.bf16.mxu0 0
      %4305 = vmatmul.mubr.bf16.gmra.mrb[0].mxu0 %v3323
      %v4306 = vpop.f32.mrb[0].mxu0
      %v4307 = vadd.f32 %v4210, %v4306
      %v4308 = vpop.f32.mrb[0].mxu0
      %v4309 = vpop.f32.mrb[0].mxu0
      %v4310 = vadd.f32 %v4213, %v4309
      %v4311 = vpop.f32.mrb[0].mxu0
      %4312 = vmatprep.mubr.bf16.mxu0 0
      %4313 = vmatmul.mubr.bf16.gmra.mrb[0].mxu0 %v3326
      %v4314 = vpop.f32.mrb[0].mxu0
      %v4315 = vadd.f32 %v4218, %v4314
      %v4316 = vpop.f32.mrb[0].mxu0
      %v4317 = vpop.f32.mrb[0].mxu0
      %v4318 = vadd.f32 %v4221, %v4317
      %v4319 = vpop.f32.mrb[0].mxu0
      %4320 = vmatprep.mubr.bf16.mxu0 0
      %4321 = vmatmul.mubr.bf16.gmra.mrb[0].mxu0 %v3329
      %v4322 = vpop.f32.mrb[0].mxu0
      %v4323 = vadd.f32 %v4226, %v4322
      %v4324 = vpop.f32.mrb[0].mxu0
      %v4325 = vpop.f32.mrb[0].mxu0
      %v4326 = vadd.f32 %v4229, %v4325
      %v4327 = vpop.f32.mrb[0].mxu0
      %4328 = vmatprep.mubr.bf16.mxu0 0
      %4329 = vmatmul.mubr.bf16.gmra.mrb[0].mxu0 %v3332
      %v4330 = vpop.f32.mrb[0].mxu0
      %v4331 = vadd.f32 %v4234, %v4330
      %v4332 = vpop.f32.mrb[0].mxu0
      %v4333 = vpop.f32.mrb[0].mxu0
      %v4334 = vadd.f32 %v4237, %v4333
      %v4335 = vpop.f32.mrb[0].mxu0
      %4336 = vmatprep.mubr.bf16.mxu0 0
      %4337 = vmatmul.mubr.bf16.gmra.mrb[0].mxu0 %v3335
      %v4338 = vpop.f32.mrb[0].mxu0
      %v4339 = vadd.f32 %v4242, %v4338
      %v4340 = vpop.f32.mrb[0].mxu0
      %v4341 = vpop.f32.mrb[0].mxu0
      %v4342 = vadd.f32 %v4245, %v4341
      %v4343 = vpop.f32.mrb[0].mxu0
      %4344 = vmatprep.mubr.bf16.mxu0 0
      %4345 = vmatmul.mubr.bf16.gmra.mrb[0].mxu0 %v3338
      %v4346 = vpop.f32.mrb[0].mxu0
      %v4347 = vadd.f32 %v4250, %v4346
      %v4348 = vpop.f32.mrb[0].mxu0
      %v4349 = vpop.f32.mrb[0].mxu0
      %v4350 = vadd.f32 %v4253, %v4349
      %v4351 = vpop.f32.mrb[0].mxu0
      %4352 = vdwg.mxu0
      %s4353 = scalar_lea.vmem [#allocation3], 24
      %v4354 = vld [vmem:[%s4353] sm:$0xf]
      %v4355 = vld [vmem:[%s4353 + $0x4] sm:$0xf]
      %v4356 = vld [vmem:[%s4353 + $0x8] sm:$0x1]
      %v4357 = vld [vmem:[%s4353 + $0xc] sm:$0xf]
      %v4358 = vld [vmem:[%s4353 + $0x10] sm:$0xf]
      %v4359 = vld [vmem:[%s4353 + $0x14] sm:$0x1]
      %v4360 = vld [vmem:[%s4353 + $0x18] sm:$0xf]
      %v4361 = vld [vmem:[%s4353 + $0x1c] sm:$0xf]
      %v4362 = vld [vmem:[%s4353 + $0x20] sm:$0x1]
      %v4363 = vld [vmem:[%s4353 + $0x24] sm:$0xf]
      %v4364 = vld [vmem:[%s4353 + $0x28] sm:$0xf]
      %v4365 = vld [vmem:[%s4353 + $0x2c] sm:$0x1]
      %v4366 = vld [vmem:[%s4353 + $0x30] sm:$0xf]
      %v4367 = vld [vmem:[%s4353 + $0x34] sm:$0xf]
      %v4368 = vld [vmem:[%s4353 + $0x38] sm:$0x1]
      %v4369 = vld [vmem:[%s4353 + $0x3c] sm:$0xf]
      %v4370 = vld [vmem:[%s4353 + $0x40] sm:$0xf]
      %v4371 = vld [vmem:[%s4353 + $0x44] sm:$0x1]
      %v4372 = vld [vmem:[%s4353 + $0x48] sm:$0xf]
      %v4373 = vld [vmem:[%s4353 + $0x4c] sm:$0xf]
      %v4374 = vld [vmem:[%s4353 + $0x50] sm:$0x1]
      %v4375 = vld [vmem:[%s4353 + $0x54] sm:$0xf]
      %v4376 = vld [vmem:[%s4353 + $0x58] sm:$0xf]
      %v4377 = vld [vmem:[%s4353 + $0x5c] sm:$0x1]
      %v4394 = vunpack.c.l.b16 %v4354
      %v4395 = vunpack.c.l.b16 %v4355
      %v4396 = vunpack.c.l.b16 %v4357
      %v4397 = vunpack.c.l.b16 %v4358
      %v4398 = vunpack.c.l.b16 %v4360
      %v4399 = vunpack.c.l.b16 %v4361
      %v4400 = vunpack.c.l.b16 %v4363
      %v4401 = vunpack.c.l.b16 %v4364
      %v4402 = vunpack.c.l.b16 %v4366
      %v4403 = vunpack.c.l.b16 %v4367
      %v4404 = vunpack.c.l.b16 %v4369
      %v4405 = vunpack.c.l.b16 %v4370
      %v4406 = vunpack.c.l.b16 %v4372
      %v4407 = vunpack.c.l.b16 %v4373
      %v4408 = vunpack.c.l.b16 %v4375
      %v4409 = vunpack.c.l.b16 %v4376
      %v4410 = vpack.c.b16 %v4395, %v4394
      %v4411 = vpack.c.b16 %v4397, %v4396
      %v4412 = vpack.c.b16 %v4399, %v4398
      %v4413 = vpack.c.b16 %v4401, %v4400
      %v4414 = vpack.c.b16 %v4403, %v4402
      %v4415 = vpack.c.b16 %v4405, %v4404
      %v4416 = vpack.c.b16 %v4407, %v4406
      %v4417 = vpack.c.b16 %v4409, %v4408
      %v4434 = vunpack.c.l.b16 %v4356
      %v4435 = vunpack.c.l.b16 %v4359
      %v4436 = vunpack.c.l.b16 %v4362
      %v4437 = vunpack.c.l.b16 %v4365
      %v4438 = vunpack.c.l.b16 %v4368
      %v4439 = vunpack.c.l.b16 %v4371
      %v4440 = vunpack.c.l.b16 %v4374
      %v4441 = vunpack.c.l.b16 %v4377
      %v4442 = vpack.c.b16 %v4434, %v4434
      %v4443 = vpack.c.b16 %v4435, %v4435
      %v4444 = vpack.c.b16 %v4436, %v4436
      %v4445 = vpack.c.b16 %v4437, %v4437
      %v4446 = vpack.c.b16 %v4438, %v4438
      %v4447 = vpack.c.b16 %v4439, %v4439
      %v4448 = vpack.c.b16 %v4440, %v4440
      %v4449 = vpack.c.b16 %v4441, %v4441
      %v4451 = vshrl.u32 %v4410, 16
      %v4453 = vshll.u32 %v4410, 16
      %v4455 = vrot.slane %v4453, 1
      %v4456 = vor.u32 %v4451, %v4455
      %v4458 = vshll.u32 %v4442, 16
      %v4460 = vrot.slane %v4458, 1
      %v4461 = vsel %vm597, %v4456, %v4460
      %v4463 = vshrl.u32 %v4411, 16
      %v4465 = vshll.u32 %v4411, 16
      %v4467 = vrot.slane %v4465, 1
      %v4468 = vor.u32 %v4463, %v4467
      %v4470 = vshll.u32 %v4443, 16
      %v4472 = vrot.slane %v4470, 1
      %v4473 = vsel %vm597, %v4468, %v4472
      %v4475 = vshrl.u32 %v4412, 16
      %v4477 = vshll.u32 %v4412, 16
      %v4479 = vrot.slane %v4477, 1
      %v4480 = vor.u32 %v4475, %v4479
      %v4482 = vshll.u32 %v4444, 16
      %v4484 = vrot.slane %v4482, 1
      %v4485 = vsel %vm597, %v4480, %v4484
      %v4487 = vshrl.u32 %v4413, 16
      %v4489 = vshll.u32 %v4413, 16
      %v4491 = vrot.slane %v4489, 1
      %v4492 = vor.u32 %v4487, %v4491
      %v4494 = vshll.u32 %v4445, 16
      %v4496 = vrot.slane %v4494, 1
      %v4497 = vsel %vm597, %v4492, %v4496
      %v4499 = vshrl.u32 %v4414, 16
      %v4501 = vshll.u32 %v4414, 16
      %v4503 = vrot.slane %v4501, 1
      %v4504 = vor.u32 %v4499, %v4503
      %v4506 = vshll.u32 %v4446, 16
      %v4508 = vrot.slane %v4506, 1
      %v4509 = vsel %vm597, %v4504, %v4508
      %v4511 = vshrl.u32 %v4415, 16
      %v4513 = vshll.u32 %v4415, 16
      %v4515 = vrot.slane %v4513, 1
      %v4516 = vor.u32 %v4511, %v4515
      %v4518 = vshll.u32 %v4447, 16
      %v4520 = vrot.slane %v4518, 1
      %v4521 = vsel %vm597, %v4516, %v4520
      %v4523 = vshrl.u32 %v4416, 16
      %v4525 = vshll.u32 %v4416, 16
      %v4527 = vrot.slane %v4525, 1
      %v4528 = vor.u32 %v4523, %v4527
      %v4530 = vshll.u32 %v4448, 16
      %v4532 = vrot.slane %v4530, 1
      %v4533 = vsel %vm597, %v4528, %v4532
      %v4535 = vshrl.u32 %v4417, 16
      %v4537 = vshll.u32 %v4417, 16
      %v4539 = vrot.slane %v4537, 1
      %v4540 = vor.u32 %v4535, %v4539
      %v4542 = vshll.u32 %v4449, 16
      %v4544 = vrot.slane %v4542, 1
      %v4545 = vsel %vm597, %v4540, %v4544
      %v4554 = vrot.slane %v4410, 1
      %v4555 = vrot.slane %v4442, 1
      %v4556 = vsel %vm728, %v4554, %v4555
      %v4557 = vrot.slane %v4411, 1
      %v4558 = vrot.slane %v4443, 1
      %v4559 = vsel %vm728, %v4557, %v4558
      %v4560 = vrot.slane %v4412, 1
      %v4561 = vrot.slane %v4444, 1
      %v4562 = vsel %vm728, %v4560, %v4561
      %v4563 = vrot.slane %v4413, 1
      %v4564 = vrot.slane %v4445, 1
      %v4565 = vsel %vm728, %v4563, %v4564
      %v4566 = vrot.slane %v4414, 1
      %v4567 = vrot.slane %v4446, 1
      %v4568 = vsel %vm728, %v4566, %v4567
      %v4569 = vrot.slane %v4415, 1
      %v4570 = vrot.slane %v4447, 1
      %v4571 = vsel %vm728, %v4569, %v4570
      %v4572 = vrot.slane %v4416, 1
      %v4573 = vrot.slane %v4448, 1
      %v4574 = vsel %vm728, %v4572, %v4573
      %v4575 = vrot.slane %v4417, 1
      %v4576 = vrot.slane %v4449, 1
      %v4577 = vsel %vm728, %v4575, %v4576
      %s4586 = scalar_lea.vmem %s5, 384
      %v4587 = vld [vmem:[%s4586] sm:$0xf]
      %v4588 = vld [vmem:[%s4586 + $0x4] sm:$0xf]
      %v4589 = vld [vmem:[%s4586 + $0x8] sm:$0xf]
      %v4590 = vld [vmem:[%s4586 + $0xc] sm:$0xf]
      %v4591 = vld [vmem:[%s4586 + $0x10] sm:$0xf]
      %v4592 = vld [vmem:[%s4586 + $0x14] sm:$0xf]
      %v4593 = vld [vmem:[%s4586 + $0x18] sm:$0xf]
      %v4594 = vld [vmem:[%s4586 + $0x1c] sm:$0xf]
      %v4595 = vld [vmem:[%s4586 + $0x20] sm:$0xf]
      %v4596 = vld [vmem:[%s4586 + $0x24] sm:$0xf]
      %v4597 = vld [vmem:[%s4586 + $0x28] sm:$0xf]
      %v4598 = vld [vmem:[%s4586 + $0x2c] sm:$0xf]
      %v4599 = vld [vmem:[%s4586 + $0x30] sm:$0xf]
      %v4600 = vld [vmem:[%s4586 + $0x34] sm:$0xf]
      %v4601 = vld [vmem:[%s4586 + $0x38] sm:$0xf]
      %v4602 = vld [vmem:[%s4586 + $0x3c] sm:$0xf]
      %v4603 = vld [vmem:[%s4586 + $0x40] sm:$0xf]
      %v4604 = vld [vmem:[%s4586 + $0x44] sm:$0xf]
      %v4605 = vld [vmem:[%s4586 + $0x48] sm:$0xf]
      %v4606 = vld [vmem:[%s4586 + $0x4c] sm:$0xf]
      %v4607 = vld [vmem:[%s4586 + $0x50] sm:$0xf]
      %v4608 = vld [vmem:[%s4586 + $0x54] sm:$0xf]
      %v4609 = vld [vmem:[%s4586 + $0x58] sm:$0xf]
      %v4610 = vld [vmem:[%s4586 + $0x5c] sm:$0xf]
      %v4611 = vld [vmem:[%s4586 + $0x60] sm:$0xf]
      %v4612 = vld [vmem:[%s4586 + $0x64] sm:$0xf]
      %v4613 = vld [vmem:[%s4586 + $0x68] sm:$0xf]
      %v4614 = vld [vmem:[%s4586 + $0x6c] sm:$0xf]
      %v4615 = vld [vmem:[%s4586 + $0x70] sm:$0xf]
      %v4616 = vld [vmem:[%s4586 + $0x74] sm:$0xf]
      %v4617 = vld [vmem:[%s4586 + $0x78] sm:$0xf]
      %v4618 = vld [vmem:[%s4586 + $0x7c] sm:$0xf]
      %v4619 = vld [vmem:[%s4586 + $0x80] sm:$0xf]
      %v4620 = vld [vmem:[%s4586 + $0x84] sm:$0xf]
      %v4621 = vld [vmem:[%s4586 + $0x88] sm:$0xf]
      %v4622 = vld [vmem:[%s4586 + $0x8c] sm:$0xf]
      %v4623 = vld [vmem:[%s4586 + $0x90] sm:$0xf]
      %v4624 = vld [vmem:[%s4586 + $0x94] sm:$0xf]
      %v4625 = vld [vmem:[%s4586 + $0x98] sm:$0xf]
      %v4626 = vld [vmem:[%s4586 + $0x9c] sm:$0xf]
      %v4627 = vld [vmem:[%s4586 + $0xa0] sm:$0xf]
      %v4628 = vld [vmem:[%s4586 + $0xa4] sm:$0xf]
      %v4629 = vld [vmem:[%s4586 + $0xa8] sm:$0xf]
      %v4630 = vld [vmem:[%s4586 + $0xac] sm:$0xf]
      %v4631 = vld [vmem:[%s4586 + $0xb0] sm:$0xf]
      %v4632 = vld [vmem:[%s4586 + $0xb4] sm:$0xf]
      %v4633 = vld [vmem:[%s4586 + $0xb8] sm:$0xf]
      %v4634 = vld [vmem:[%s4586 + $0xbc] sm:$0xf]
      %v4683 = vunpack.c.l.b16 %v4587
      %v4684 = vunpack.c.l.b16 %v4588
      %v4685 = vunpack.c.l.b16 %v4589
      %v4686 = vunpack.c.l.b16 %v4590
      %v4687 = vunpack.c.l.b16 %v4591
      %v4688 = vunpack.c.l.b16 %v4592
      %v4689 = vunpack.c.l.b16 %v4593
      %v4690 = vunpack.c.l.b16 %v4594
      %v4691 = vunpack.c.l.b16 %v4595
      %v4692 = vunpack.c.l.b16 %v4596
      %v4693 = vunpack.c.l.b16 %v4597
      %v4694 = vunpack.c.l.b16 %v4598
      %v4695 = vunpack.c.l.b16 %v4599
      %v4696 = vunpack.c.l.b16 %v4600
      %v4697 = vunpack.c.l.b16 %v4601
      %v4698 = vunpack.c.l.b16 %v4602
      %v4699 = vunpack.c.l.b16 %v4603
      %v4700 = vunpack.c.l.b16 %v4604
      %v4701 = vunpack.c.l.b16 %v4605
      %v4702 = vunpack.c.l.b16 %v4606
      %v4703 = vunpack.c.l.b16 %v4607
      %v4704 = vunpack.c.l.b16 %v4608
      %v4705 = vunpack.c.l.b16 %v4609
      %v4706 = vunpack.c.l.b16 %v4610
      %v4707 = vunpack.c.l.b16 %v4611
      %v4708 = vunpack.c.l.b16 %v4612
      %v4709 = vunpack.c.l.b16 %v4613
      %v4710 = vunpack.c.l.b16 %v4614
      %v4711 = vunpack.c.l.b16 %v4615
      %v4712 = vunpack.c.l.b16 %v4616
      %v4713 = vunpack.c.l.b16 %v4617
      %v4714 = vunpack.c.l.b16 %v4618
      %v4715 = vunpack.c.l.b16 %v4619
      %v4716 = vunpack.c.l.b16 %v4620
      %v4717 = vunpack.c.l.b16 %v4621
      %v4718 = vunpack.c.l.b16 %v4622
      %v4719 = vunpack.c.l.b16 %v4623
      %v4720 = vunpack.c.l.b16 %v4624
      %v4721 = vunpack.c.l.b16 %v4625
      %v4722 = vunpack.c.l.b16 %v4626
      %v4723 = vunpack.c.l.b16 %v4627
      %v4724 = vunpack.c.l.b16 %v4628
      %v4725 = vunpack.c.l.b16 %v4629
      %v4726 = vunpack.c.l.b16 %v4630
      %v4727 = vunpack.c.l.b16 %v4631
      %v4728 = vunpack.c.l.b16 %v4632
      %v4729 = vunpack.c.l.b16 %v4633
      %v4730 = vunpack.c.l.b16 %v4634
      %v4731 = vpack.c.b16 %v4684, %v4683
      %v4732 = vpack.c.b16 %v4686, %v4685
      %v4733 = vpack.c.b16 %v4688, %v4687
      %v4734 = vpack.c.b16 %v4690, %v4689
      %v4735 = vpack.c.b16 %v4692, %v4691
      %v4736 = vpack.c.b16 %v4694, %v4693
      %v4737 = vpack.c.b16 %v4696, %v4695
      %v4738 = vpack.c.b16 %v4698, %v4697
      %v4739 = vpack.c.b16 %v4700, %v4699
      %v4740 = vpack.c.b16 %v4702, %v4701
      %v4741 = vpack.c.b16 %v4704, %v4703
      %v4742 = vpack.c.b16 %v4706, %v4705
      %v4743 = vpack.c.b16 %v4708, %v4707
      %v4744 = vpack.c.b16 %v4710, %v4709
      %v4745 = vpack.c.b16 %v4712, %v4711
      %v4746 = vpack.c.b16 %v4714, %v4713
      %v4747 = vpack.c.b16 %v4716, %v4715
      %v4748 = vpack.c.b16 %v4718, %v4717
      %v4749 = vpack.c.b16 %v4720, %v4719
      %v4750 = vpack.c.b16 %v4722, %v4721
      %v4751 = vpack.c.b16 %v4724, %v4723
      %v4752 = vpack.c.b16 %v4726, %v4725
      %v4753 = vpack.c.b16 %v4728, %v4727
      %v4754 = vpack.c.b16 %v4730, %v4729
      %4779 = vmatprep.subr.bf16.mxu0 0
      %4780 = vmatpush1.bf16.msra.mxu0 %v4731
      %4781 = vmatprep.subr.bf16.mxu0 0
      %4782 = vmatpush1.bf16.msra.mxu0 %v4732
      %4783 = vmatprep.subr.bf16.mxu0 0
      %4784 = vmatpush1.bf16.msra.mxu0 %v4733
      %4785 = vmatprep.subr.bf16.mxu0 0
      %4786 = vmatpush1.bf16.msra.mxu0 %v4734
      %4787 = vmatprep.subr.bf16.mxu0 0
      %4788 = vmatpush1.bf16.msra.mxu0 %v4735
      %4789 = vmatprep.subr.bf16.mxu0 0
      %4790 = vmatpush1.bf16.msra.mxu0 %v4736
      %4791 = vmatprep.subr.bf16.mxu0 0
      %4792 = vmatpush1.bf16.msra.mxu0 %v4737
      %4793 = vmatprep.subr.bf16.mxu0 0
      %4794 = vmatpush1.bf16.msra.mxu0 %v4738
      %4795 = vmatprep.subr.bf16.mxu0 0
      %4796 = vmatpush1.bf16.msra.mxu0 %v4739
      %4797 = vmatprep.subr.bf16.mxu0 0
      %4798 = vmatpush1.bf16.msra.mxu0 %v4740
      %4799 = vmatprep.subr.bf16.mxu0 0
      %4800 = vmatpush1.bf16.msra.mxu0 %v4741
      %4801 = vmatprep.subr.bf16.mxu0 0
      %4802 = vmatpush1.bf16.msra.mxu0 %v4742
      %4803 = vmatprep.subr.bf16.mxu0 0
      %4804 = vmatpush1.bf16.msra.mxu0 %v4743
      %4805 = vmatprep.subr.bf16.mxu0 0
      %4806 = vmatpush1.bf16.msra.mxu0 %v4744
      %4807 = vmatprep.subr.bf16.mxu0 0
      %4808 = vmatpush1.bf16.msra.mxu0 %v4745
      %4809 = vmatprep.subr.bf16.mxu0 0
      %4810 = vmatpush1.bf16.msra.mxu0 %v4746
      %4811 = vmatprep.mubr.bf16.mxu0 %v4461
      %4812 = vmatmul.mubr.bf16.gmra.mrb[0].mxu0 %v4410
      %v4813 = vpop.f32.mrb[0].mxu0
      %v4814 = vadd.f32 0.0, %v4813
      %v4815 = vpop.f32.mrb[0].mxu0
      %v4816 = vpop.f32.mrb[0].mxu0
      %v4817 = vadd.f32 0.0, %v4816
      %v4818 = vpop.f32.mrb[0].mxu0
      %4819 = vmatprep.mubr.bf16.mxu0 %v4473
      %4820 = vmatmul.mubr.bf16.gmra.mrb[0].mxu0 %v4411
      %v4821 = vpop.f32.mrb[0].mxu0
      %v4822 = vadd.f32 0.0, %v4821
      %v4823 = vpop.f32.mrb[0].mxu0
      %v4824 = vpop.f32.mrb[0].mxu0
      %v4825 = vadd.f32 0.0, %v4824
      %v4826 = vpop.f32.mrb[0].mxu0
      %4827 = vmatprep.mubr.bf16.mxu0 %v4485
      %4828 = vmatmul.mubr.bf16.gmra.mrb[0].mxu0 %v4412
      %v4829 = vpop.f32.mrb[0].mxu0
      %v4830 = vadd.f32 0.0, %v4829
      %v4831 = vpop.f32.mrb[0].mxu0
      %v4832 = vpop.f32.mrb[0].mxu0
      %v4833 = vadd.f32 0.0, %v4832
      %v4834 = vpop.f32.mrb[0].mxu0
      %4835 = vmatprep.mubr.bf16.mxu0 %v4497
      %4836 = vmatmul.mubr.bf16.gmra.mrb[0].mxu0 %v4413
      %v4837 = vpop.f32.mrb[0].mxu0
      %v4838 = vadd.f32 0.0, %v4837
      %v4839 = vpop.f32.mrb[0].mxu0
      %v4840 = vpop.f32.mrb[0].mxu0
      %v4841 = vadd.f32 0.0, %v4840
      %v4842 = vpop.f32.mrb[0].mxu0
      %4843 = vmatprep.mubr.bf16.mxu0 %v4509
      %4844 = vmatmul.mubr.bf16.gmra.mrb[0].mxu0 %v4414
      %v4845 = vpop.f32.mrb[0].mxu0
      %v4846 = vadd.f32 0.0, %v4845
      %v4847 = vpop.f32.mrb[0].mxu0
      %v4848 = vpop.f32.mrb[0].mxu0
      %v4849 = vadd.f32 0.0, %v4848
      %v4850 = vpop.f32.mrb[0].mxu0
      %4851 = vmatprep.mubr.bf16.mxu0 %v4521
      %4852 = vmatmul.mubr.bf16.gmra.mrb[0].mxu0 %v4415
      %v4853 = vpop.f32.mrb[0].mxu0
      %v4854 = vadd.f32 0.0, %v4853
      %v4855 = vpop.f32.mrb[0].mxu0
      %v4856 = vpop.f32.mrb[0].mxu0
      %v4857 = vadd.f32 0.0, %v4856
      %v4858 = vpop.f32.mrb[0].mxu0
      %4859 = vmatprep.mubr.bf16.mxu0 %v4533
      %4860 = vmatmul.mubr.bf16.gmra.mrb[0].mxu0 %v4416
      %v4861 = vpop.f32.mrb[0].mxu0
      %v4862 = vadd.f32 0.0, %v4861
      %v4863 = vpop.f32.mrb[0].mxu0
      %v4864 = vpop.f32.mrb[0].mxu0
      %v4865 = vadd.f32 0.0, %v4864
      %v4866 = vpop.f32.mrb[0].mxu0
      %4867 = vmatprep.mubr.bf16.mxu0 %v4545
      %4868 = vmatmul.mubr.bf16.gmra.mrb[0].mxu0 %v4417
      %v4869 = vpop.f32.mrb[0].mxu0
      %v4870 = vadd.f32 0.0, %v4869
      %v4871 = vpop.f32.mrb[0].mxu0
      %v4872 = vpop.f32.mrb[0].mxu0
      %v4873 = vadd.f32 0.0, %v4872
      %v4874 = vpop.f32.mrb[0].mxu0
      %4875 = vdwg.mxu0
      %4876 = vmatprep.subr.bf16.mxu0 0
      %4877 = vmatpush1.bf16.msra.mxu0 %v4747
      %4878 = vmatprep.subr.bf16.mxu0 0
      %4879 = vmatpush1.bf16.msra.mxu0 %v4748
      %4880 = vmatprep.subr.bf16.mxu0 0
      %4881 = vmatpush1.bf16.msra.mxu0 %v4749
      %4882 = vmatprep.subr.bf16.mxu0 0
      %4883 = vmatpush1.bf16.msra.mxu0 %v4750
      %4884 = vmatprep.subr.bf16.mxu0 0
      %4885 = vmatpush1.bf16.msra.mxu0 %v4751
      %4886 = vmatprep.subr.bf16.mxu0 0
      %4887 = vmatpush1.bf16.msra.mxu0 %v4752
      %4888 = vmatprep.subr.bf16.mxu0 0
      %4889 = vmatpush1.bf16.msra.mxu0 %v4753
      %4890 = vmatprep.subr.bf16.mxu0 0
      %4891 = vmatpush1.bf16.msra.mxu0 %v4754
      %4892 = vmatprep.subr.bf16.mxu0 0
      %4893 = vmatpush1.bf16.msra.mxu0 0
      %4894 = vmatprep.subr.bf16.mxu0 0
      %4895 = vmatpush1.bf16.msra.mxu0 0
      %4896 = vmatprep.subr.bf16.mxu0 0
      %4897 = vmatpush1.bf16.msra.mxu0 0
      %4898 = vmatprep.subr.bf16.mxu0 0
      %4899 = vmatpush1.bf16.msra.mxu0 0
      %4900 = vmatprep.subr.bf16.mxu0 0
      %4901 = vmatpush1.bf16.msra.mxu0 0
      %4902 = vmatprep.subr.bf16.mxu0 0
      %4903 = vmatpush1.bf16.msra.mxu0 0
      %4904 = vmatprep.subr.bf16.mxu0 0
      %4905 = vmatpush1.bf16.msra.mxu0 0
      %4906 = vmatprep.subr.bf16.mxu0 0
      %4907 = vmatpush1.bf16.msra.mxu0 0
      %4908 = vmatprep.mubr.bf16.mxu0 0
      %4909 = vmatmul.mubr.bf16.gmra.mrb[0].mxu0 %v4556
      %v4910 = vpop.f32.mrb[0].mxu0
      %v4911 = vadd.f32 %v4814, %v4910
      %v4912 = vpop.f32.mrb[0].mxu0
      %v4913 = vpop.f32.mrb[0].mxu0
      %v4914 = vadd.f32 %v4817, %v4913
      %v4915 = vpop.f32.mrb[0].mxu0
      %4916 = vmatprep.mubr.bf16.mxu0 0
      %4917 = vmatmul.mubr.bf16.gmra.mrb[0].mxu0 %v4559
      %v4918 = vpop.f32.mrb[0].mxu0
      %v4919 = vadd.f32 %v4822, %v4918
      %v4920 = vpop.f32.mrb[0].mxu0
      %v4921 = vpop.f32.mrb[0].mxu0
      %v4922 = vadd.f32 %v4825, %v4921
      %v4923 = vpop.f32.mrb[0].mxu0
      %4924 = vmatprep.mubr.bf16.mxu0 0
      %4925 = vmatmul.mubr.bf16.gmra.mrb[0].mxu0 %v4562
      %v4926 = vpop.f32.mrb[0].mxu0
      %v4927 = vadd.f32 %v4830, %v4926
      %v4928 = vpop.f32.mrb[0].mxu0
      %v4929 = vpop.f32.mrb[0].mxu0
      %v4930 = vadd.f32 %v4833, %v4929
      %v4931 = vpop.f32.mrb[0].mxu0
      %4932 = vmatprep.mubr.bf16.mxu0 0
      %4933 = vmatmul.mubr.bf16.gmra.mrb[0].mxu0 %v4565
      %v4934 = vpop.f32.mrb[0].mxu0
      %v4935 = vadd.f32 %v4838, %v4934
      %v4936 = vpop.f32.mrb[0].mxu0
      %v4937 = vpop.f32.mrb[0].mxu0
      %v4938 = vadd.f32 %v4841, %v4937
      %v4939 = vpop.f32.mrb[0].mxu0
      %4940 = vmatprep.mubr.bf16.mxu0 0
      %4941 = vmatmul.mubr.bf16.gmra.mrb[0].mxu0 %v4568
      %v4942 = vpop.f32.mrb[0].mxu0
      %v4943 = vadd.f32 %v4846, %v4942
      %v4944 = vpop.f32.mrb[0].mxu0
      %v4945 = vpop.f32.mrb[0].mxu0
      %v4946 = vadd.f32 %v4849, %v4945
      %v4947 = vpop.f32.mrb[0].mxu0
      %4948 = vmatprep.mubr.bf16.mxu0 0
      %4949 = vmatmul.mubr.bf16.gmra.mrb[0].mxu0 %v4571
      %v4950 = vpop.f32.mrb[0].mxu0
      %v4951 = vadd.f32 %v4854, %v4950
      %v4952 = vpop.f32.mrb[0].mxu0
      %v4953 = vpop.f32.mrb[0].mxu0
      %v4954 = vadd.f32 %v4857, %v4953
      %v4955 = vpop.f32.mrb[0].mxu0
      %4956 = vmatprep.mubr.bf16.mxu0 0
      %4957 = vmatmul.mubr.bf16.gmra.mrb[0].mxu0 %v4574
      %v4958 = vpop.f32.mrb[0].mxu0
      %v4959 = vadd.f32 %v4862, %v4958
      %v4960 = vpop.f32.mrb[0].mxu0
      %v4961 = vpop.f32.mrb[0].mxu0
      %v4962 = vadd.f32 %v4865, %v4961
      %v4963 = vpop.f32.mrb[0].mxu0
      %4964 = vmatprep.mubr.bf16.mxu0 0
      %4965 = vmatmul.mubr.bf16.gmra.mrb[0].mxu0 %v4577
      %v4966 = vpop.f32.mrb[0].mxu0
      %v4967 = vadd.f32 %v4870, %v4966
      %v4968 = vpop.f32.mrb[0].mxu0
      %v4969 = vpop.f32.mrb[0].mxu0
      %v4970 = vadd.f32 %v4873, %v4969
      %v4971 = vpop.f32.mrb[0].mxu0
      %4972 = vdwg.mxu0
      %v4973 = vadd.f32 %v4291, %v4911
      %v4974 = vadd.f32 %v4294, %v4914
      %v4975 = vadd.f32 %v4299, %v4919
      %v4976 = vadd.f32 %v4302, %v4922
      %v4977 = vadd.f32 %v4307, %v4927
      %v4978 = vadd.f32 %v4310, %v4930
      %v4979 = vadd.f32 %v4315, %v4935
      %v4980 = vadd.f32 %v4318, %v4938
      %v4981 = vadd.f32 %v4323, %v4943
      %v4982 = vadd.f32 %v4326, %v4946
      %v4983 = vadd.f32 %v4331, %v4951
      %v4984 = vadd.f32 %v4334, %v4954
      %v4985 = vadd.f32 %v4339, %v4959
      %v4986 = vadd.f32 %v4342, %v4962
      %v4987 = vadd.f32 %v4347, %v4967
      %v4988 = vadd.f32 %v4350, %v4970
      %v4989 = vld [vmem:[%s6] sm:$0x1]
      %v4991 = vlaneseq
      %v4992 = vshrl.u32 %v4991, 7
      %v4993 = vsub.s32 0, %v4992
      %v4994 = vrot.slane %v4989, %v4993
      %v4996 = vmul.f32 %v4973, %v4994
      %v4997 = vmul.f32 %v4974, %v4994
      %v4998 = vmul.f32 %v4975, %v4994
      %v4999 = vmul.f32 %v4976, %v4994
      %v5000 = vmul.f32 %v4977, %v4994
      %v5001 = vmul.f32 %v4978, %v4994
      %v5002 = vmul.f32 %v4979, %v4994
      %v5003 = vmul.f32 %v4980, %v4994
      %v5004 = vmul.f32 %v4981, %v4994
      %v5005 = vmul.f32 %v4982, %v4994
      %v5006 = vmul.f32 %v4983, %v4994
      %v5007 = vmul.f32 %v4984, %v4994
      %v5008 = vmul.f32 %v4985, %v4994
      %v5009 = vmul.f32 %v4986, %v4994
      %v5010 = vmul.f32 %v4987, %v4994
      %v5011 = vmul.f32 %v4988, %v4994
      %v5012 = vld [vmem:[%s7] sm:$0x1]
      %v5014 = vlaneseq
      %v5015 = vshrl.u32 %v5014, 7
      %v5016 = vsub.s32 0, %v5015
      %v5017 = vrot.slane %v5012, %v5016
      %v5019 = vadd.f32 %v4996, %v5017
      %v5020 = vadd.f32 %v4997, %v5017
      %v5021 = vadd.f32 %v4998, %v5017
      %v5022 = vadd.f32 %v4999, %v5017
      %v5023 = vadd.f32 %v5000, %v5017
      %v5024 = vadd.f32 %v5001, %v5017
      %v5025 = vadd.f32 %v5002, %v5017
      %v5026 = vadd.f32 %v5003, %v5017
      %v5027 = vadd.f32 %v5004, %v5017
      %v5028 = vadd.f32 %v5005, %v5017
      %v5029 = vadd.f32 %v5006, %v5017
      %v5030 = vadd.f32 %v5007, %v5017
      %v5031 = vadd.f32 %v5008, %v5017
      %v5032 = vadd.f32 %v5009, %v5017
      %v5033 = vadd.f32 %v5010, %v5017
      %v5034 = vadd.f32 %v5011, %v5017
      %v5035 = vmax.f32 %v5019, 0.0
      %v5036 = vmax.f32 %v5020, 0.0
      %v5037 = vmax.f32 %v5021, 0.0
      %v5038 = vmax.f32 %v5022, 0.0
      %v5039 = vmax.f32 %v5023, 0.0
      %v5040 = vmax.f32 %v5024, 0.0
      %v5041 = vmax.f32 %v5025, 0.0
      %v5042 = vmax.f32 %v5026, 0.0
      %v5043 = vmax.f32 %v5027, 0.0
      %v5044 = vmax.f32 %v5028, 0.0
      %v5045 = vmax.f32 %v5029, 0.0
      %v5046 = vmax.f32 %v5030, 0.0
      %v5047 = vmax.f32 %v5031, 0.0
      %v5048 = vmax.f32 %v5032, 0.0
      %v5049 = vmax.f32 %v5033, 0.0
      %v5050 = vmax.f32 %v5034, 0.0
      %5051 = vst [vmem:[%s401] sm:$0xff] %v5035
      %5052 = vst [vmem:[%s401 + $0x8] sm:$0xff] %v5036
      %5053 = vst [vmem:[%s401 + $0x10] sm:$0xff] %v5037
      %5054 = vst [vmem:[%s401 + $0x18] sm:$0xff] %v5038
      %5055 = vst [vmem:[%s401 + $0x20] sm:$0xff] %v5039
      %5056 = vst [vmem:[%s401 + $0x28] sm:$0xff] %v5040
      %5057 = vst [vmem:[%s401 + $0x30] sm:$0xff] %v5041
      %5058 = vst [vmem:[%s401 + $0x38] sm:$0xff] %v5042
      %5059 = vst [vmem:[%s401 + $0x40] sm:$0xff] %v5043
      %5060 = vst [vmem:[%s401 + $0x48] sm:$0xff] %v5044
      %5061 = vst [vmem:[%s401 + $0x50] sm:$0xff] %v5045
      %5062 = vst [vmem:[%s401 + $0x58] sm:$0xff] %v5046
      %5063 = vst [vmem:[%s401 + $0x60] sm:$0xff] %v5047
      %5064 = vst [vmem:[%s401 + $0x68] sm:$0xff] %v5048
      %5065 = vst [vmem:[%s401 + $0x70] sm:$0xff] %v5049
      %5066 = vst [vmem:[%s401 + $0x78] sm:$0xff] %v5050
      %s5067 = smul.u32 8, %s24
      %p5068 = scmp.lt.s32.totalorder %s23, 1
      %s5069 = scalar_select %p5068, %s23, 1
      %p5070 = scmp.lt.s32.totalorder %s5067, 15
      %s5071 = scalar_select %p5070, %s5067, 15
      %s5072 = smul.addr %s5071, 2
      %s5073 = smul.addr %s5069, 32
      %s5074 = sadd.s32 %s5072, %s5073
      %s5075 = smul.addr %s5074, 8
      %s5076 = scalar_lea.vmem %s8, %s5075
      // Predicated region
      $region61: #{double_conv.1} parent=51 // pred_check
        %p5077 = pneg %p237
      $region62: #{double_conv.1} parent=51 // pred_check_branch
        %5079 = sbr.rel (%p5077) target = $region64
      $region63: #{double_conv.1} parent=51 // pred_region
        %s5080 = smul.u32 8, %s24
      $region64: #{double_conv.1} parent=51 // pred_fallthru
        _
    $region52: #{double_conv.1} parent=5 // pred_fallthru
      _
    %p5081 = scmp.le.s32.totalorder 2, %s14
    // Predicated region
    $region65: #{double_conv.1} parent=5 // pred_check
      %p5082 = pneg %p5081
    $region66: #{double_conv.1} parent=5 // pred_check_branch
      %5084 = sbr.rel (%p5082) target = $region68
    $region67: #{double_conv.1} parent=5 // pred_region
      %s5085 = ssub.s32 %s14, 2
      // Predicated region
      $region69: #{double_conv.1} parent=67 // pred_check
        %p5086 = pneg %p243
      $region70: #{double_conv.1} parent=67 // pred_check_branch
        %5088 = sbr.rel (%p5086) target = $region72
      $region71: #{double_conv.1} parent=67 // pred_region
        %s5089 = smul.u32 8, %s26
        %p5090 = scmp.lt.s32.totalorder %s25, 1
        %s5091 = scalar_select %p5090, %s25, 1
        %p5092 = scmp.lt.s32.totalorder %s5089, 15
        %s5093 = scalar_select %p5092, %s5089, 15
        %s5094 = smul.addr %s5093, 2
        %s5095 = smul.addr %s5091, 32
        %s5096 = sadd.s32 %s5094, %s5095
        %s5097 = smul.addr %s5096, 8
        %s5098 = scalar_lea.vmem %s8, %s5097
      $region72: #{double_conv.1} parent=67 // pred_fallthru
        _
    $region68: #{double_conv.1} parent=5 // pred_fallthru
      _
  $region6: #{double_conv.1} parent=0 // loop_footer
    %s18 = sadd.s32 1, %s14
  $region7: #{double_conv.1} parent=0 // loop_footer_branch
    %13 = sbr.rel target = $region3
  $region8: #{double_conv.1} parent=0 // loop_exit
    _

</llo_original>
